<compile_context>
chip_gen: v7x
topology: tpu7x:2x2x1
jax: 0.10.0
libtpu: 0.0.40
codegen_flags: <defaults>
</compile_context>

<pallas_src>
import functools

import jax
import jax.numpy as jnp
from jax import lax
from jax.experimental import pallas as pl
from jax.experimental.pallas import tpu as pltpu


# ---------------------------------------------------------------------------
# fused kernel: one grid step per memory bank
# ---------------------------------------------------------------------------
def _memory_kernel(num_banks, bank_size,
                   qa_ref, sa_ref, qb_ref, sb_ref,
                   ma_ref, mb_ref,
                   key_ref, va_ref, vb_ref, r1_ref, r2_ref, kflat_ref,
                   nk_ref, nva_ref, nvb_ref,
                   o_aa, o_ab, o_ba, o_bb,
                   o_raa, o_rab, o_rba, o_rbb,
                   o_ga, o_gb, kl_ref, vl_ref):
    f32 = jnp.float32
    bf16 = jnp.bfloat16
    bank = pl.program_id(0)

    kdim = qa_ref.shape[0]
    vdim = sa_ref.shape[0]
    N = qa_ref.shape[1]
    M = bank_size

    # ---- init the grid-resident accumulators on the first bank --------------
    @pl.when(bank == 0)
    def _():
        for r in (o_aa, o_ab, o_ba, o_bb, o_raa, o_rab, o_rba, o_rbb,
                  o_ga, o_gb, kl_ref, vl_ref):
            r[...] = jnp.zeros_like(r)

    # ---- hoisted bf16 MXU operands (cast / mask once, reuse everywhere) -----
    ma = ma_ref[...]                       # (1, N) f32
    mb = mb_ref[...]
    ma_bf = ma.astype(bf16)
    mb_bf = mb.astype(bf16)
    qa_m = qa_ref[...] * ma_bf             # (kdim, N) bf16, masked queries
    sa_m = sa_ref[...] * ma_bf             # (vdim, N)
    qb_m = qb_ref[...] * mb_bf
    sb_m = sb_ref[...] * mb_bf
    q_ab = jnp.concatenate([qa_m, qb_m], axis=1)          # (kdim, 2N) bf16

    key_m = key_ref[...]                   # (M, kdim) f32  (OLD key)
    val_a = va_ref[...]                    # (M, vdim) f32
    val_b = vb_ref[...]
    key_bf = key_m.astype(bf16)
    val_a_bf = val_a.astype(bf16)
    val_b_bf = val_b.astype(bf16)

    slot_f = lax.broadcasted_iota(jnp.int32, (M, N), 0).astype(f32)

    def mm_nn(a, b):   # (M,K)@(K,N)   -> (M,N), f32 accumulation on the MXU
        return lax.dot_general(a, b, (((1,), (0,)), ((), ())),
                               preferred_element_type=f32)

    def mm_nt(a, b):   # (M,N)x(C,N)   -> (M,C)
        return lax.dot_general(a, b, (((1,), (1,)), ((), ())),
                               preferred_element_type=f32)

    def mm_tn(a, b):   # (M,C)x(M,N)   -> (C,N)
        return lax.dot_general(a, b, (((0,), (0,)), ((), ())),
                               preferred_element_type=f32)

    def col_softmax(score, mask):
        # softmax over queries (lanes), restricted to masked lanes (dim=0 in torch)
        ms = jnp.where(mask > 0, score, f32(-1e30))
        cmax = jnp.max(ms, axis=1, keepdims=True)
        e = jnp.where(mask > 0, jnp.exp(ms - cmax), 0.0)
        denom = jnp.maximum(jnp.sum(e, axis=1, keepdims=True), 1e-30)
        return e * pl.reciprocal(denom, approx=True)

    def slot_softmax(score):
        # softmax over memory slots (sublanes)  (dim=1 in torch)
        e = jnp.exp(score - jnp.max(score, axis=0, keepdims=True))
        return e * pl.reciprocal(jnp.sum(e, axis=0, keepdims=True), approx=True)

    def argmax_slots(score):
        # first-maximum slot index per query lane (torch.topk(...,1) semantics)
        mx = jnp.max(score, axis=0, keepdims=True)
        gi = jnp.min(jnp.where(score >= mx, slot_f, f32(M)),
                     axis=0, keepdims=True)                      # (1, N)
        return gi, (slot_f == gi).astype(f32)                    # one-hot (M, N)

    def l2n(x):                            # F.normalize(dim=1), eps=1e-12
        ss = jnp.sum(x * x, axis=1, keepdims=True)
        return x * lax.rsqrt(jnp.maximum(ss, 1e-24))

    def inorm(x):                          # InstanceNorm1d over last dim, eps=1e-5
        mean = jnp.mean(x, axis=1, keepdims=True)
        var = jnp.mean((x - mean) ** 2, axis=1, keepdims=True)
        return (x - mean) * lax.rsqrt(var + 1e-5)

    # ---- scores against the OLD key: one batched dot over [a|b] -------------
    s_ab = mm_nn(key_bf, q_ab)             # (M, 2N)
    s_a, s_b = s_ab[:, :N], s_ab[:, N:]
    sq_a = col_softmax(s_a, ma)            # score_query  (dim-0 softmax)
    sq_b = col_softmax(s_b, mb)
    _, oh_up_a = argmax_slots(s_a)         # argmax(score_memory) == argmax(score)
    _, oh_up_b = argmax_slots(s_b)

    # ---- memory update: key & value segment-sums batched along C ------------
    w_a = (oh_up_a * sq_a).astype(bf16)    # sq is already 0 at unmasked lanes
    w_b = (oh_up_b * sq_b).astype(bf16)
    qs_a = jnp.concatenate([qa_m, sa_m], axis=0)           # (kdim+vdim, N)
    qs_b = jnp.concatenate([qb_m, sb_m], axis=0)
    up_a = mm_nt(w_a, qs_a)                                 # (M, kdim+vdim)
    up_b = mm_nt(w_b, qs_b)
    key_up_a, val_up_a = up_a[:, :kdim], up_a[:, kdim:]
    key_up_b, val_up_b = up_b[:, :kdim], up_b[:, kdim:]

    new_key = l2n(0.25 * l2n(key_up_a) + 0.25 * l2n(key_up_b) + 0.5 * key_m)
    new_val_a = 0.5 * inorm(val_up_a) + 0.5 * val_a
    new_val_b = 0.5 * inorm(val_up_b) + 0.5 * val_b
    nk_ref[...] = new_key
    nva_ref[...] = new_val_a
    nvb_ref[...] = new_val_b

    # ---- reads against the UPDATED memory: one batched read dot --------------
    sm_ab = slot_softmax(mm_nn(new_key.astype(bf16), q_ab))      # (M, 2N)
    vals_cat = jnp.concatenate(
        [new_val_a.astype(bf16), new_val_b.astype(bf16),
         r1_ref[...], r2_ref[...]], axis=1)                      # (M, 4*vdim)
    reads = mm_tn(vals_cat, sm_ab.astype(bf16))                  # (4*vdim, 2N)
    sty_aa = reads[0 * vdim:1 * vdim, :N]
    sty_ba = reads[0 * vdim:1 * vdim, N:]
    sty_ab = reads[1 * vdim:2 * vdim, :N]
    sty_bb = reads[1 * vdim:2 * vdim, N:]
    rand_a = reads[2 * vdim:3 * vdim, :N]   # rand1 read (used for aa & ab)
    rand_b = reads[3 * vdim:4 * vdim, N:]   # rand2 read (used for ba & bb)

    sel_a = ma > 0
    sel_b = mb > 0
    o_aa[...] = jnp.where(sel_a, sty_aa, o_aa[...])
    o_ab[...] = jnp.where(sel_a, sty_ab, o_ab[...])
    o_ba[...] = jnp.where(sel_b, sty_ba, o_ba[...])
    o_bb[...] = jnp.where(sel_b, sty_bb, o_bb[...])
    o_raa[...] = jnp.where(sel_a, rand_a, o_raa[...])
    o_rab[...] = jnp.where(sel_a, rand_a, o_rab[...])
    o_rba[...] = jnp.where(sel_b, rand_b, o_rba[...])
    o_rbb[...] = jnp.where(sel_b, rand_b, o_rbb[...])

    # ---- gather_loss against the OLD memory ----------------------------------
    gia, oh_ga = argmax_slots(sq_a)        # topk(score_query, 2)[:, 0]
    gib, oh_gb = argmax_slots(sq_b)
    sqs_a = col_softmax(mm_nn(val_a_bf, sa_m), ma)
    sqs_b = col_softmax(mm_nn(val_b_bf, sb_m), mb)

    cnt_a = jnp.maximum(jnp.sum(ma, axis=1, keepdims=True), 1.0)   # (1, 1)
    cnt_b = jnp.maximum(jnp.sum(mb, axis=1, keepdims=True), 1.0)

    def masked_nll(sq, oh, mask, cnt):
        picked = jnp.sum(sq * oh, axis=0, keepdims=True)            # (1, N)
        return -jnp.sum(picked * mask, axis=1, keepdims=True) / cnt  # (1, 1)

    kl_ref[...] += (0.1 * jnp.exp(masked_nll(sq_a, oh_ga, ma, cnt_a))
                    + 0.1 * jnp.exp(masked_nll(sq_b, oh_gb, mb, cnt_b)))
    vl_ref[...] += (0.1 * jnp.exp(masked_nll(sqs_a, oh_ga, ma, cnt_a))
                    + 0.1 * jnp.exp(masked_nll(sqs_b, oh_gb, mb, cnt_b)))

    off = (bank * M).astype(f32)           # sum(memory_size[:bank]) (uniform banks)
    o_ga[...] = jnp.where(sel_a, gia + off, o_ga[...])
    o_gb[...] = jnp.where(sel_b, gib + off, o_gb[...])

    # ---- gather_total_loss fused into the last bank step ---------------------
    @pl.when(bank == num_banks - 1)
    def _():
        Mt = num_banks * M
        keys_all = kflat_ref[...]                                  # OLD keys, bf16
        slot_t = lax.broadcasted_iota(jnp.int32, (Mt, N), 0).astype(f32)
        q_raw = jnp.concatenate([qa_ref[...], qb_ref[...]], axis=1)  # unmasked
        s_tot = mm_nn(keys_all, q_raw)                             # (Mt, 2N)

        def nll_tot(s, g):
            e = jnp.exp(s - jnp.max(s, axis=1, keepdims=True))
            sq = e * pl.reciprocal(jnp.sum(e, axis=1, keepdims=True), approx=True)
            picked = jnp.sum(sq * (slot_t == g).astype(f32), axis=0, keepdims=True)
            return -jnp.sum(picked, axis=1, keepdims=True) / f32(N)

        kl_ref[...] += (0.1 * jnp.exp(nll_tot(s_tot[:, :N], o_ga[...]))
                        + 0.1 * jnp.exp(nll_tot(s_tot[:, N:], o_gb[...])))


def _memory_call(qa, sa, qb, sb, masks_a3, masks_b3,
                 keys, vals_a, vals_b, r1, r2, keys_flat):
    nb, M, kdim = keys.shape
    vdim = vals_a.shape[2]
    N = qa.shape[1]

    res2 = lambda shape: pl.BlockSpec(shape, lambda i: (0, 0))
    per_bank = lambda d2, d3: pl.BlockSpec((None, d2, d3), lambda i: (i, 0, 0))

    cn = jax.ShapeDtypeStruct((vdim, N), jnp.float32)
    out_shape = (
        jax.ShapeDtypeStruct((nb, M, kdim), jnp.float32),   # new keys
        jax.ShapeDtypeStruct((nb, M, vdim), jnp.float32),   # new vals a
        jax.ShapeDtypeStruct((nb, M, vdim), jnp.float32),   # new vals b
        cn, cn, cn, cn,                                     # sty_aa/ab/ba/bb
        cn, cn, cn, cn,                                     # rand_aa/ab/ba/bb
        jax.ShapeDtypeStruct((1, N), jnp.float32),          # gathers_a
        jax.ShapeDtypeStruct((1, N), jnp.float32),          # gathers_b
        jax.ShapeDtypeStruct((1, 1), jnp.float32),          # key loss
        jax.ShapeDtypeStruct((1, 1), jnp.float32),          # value loss
    )

    grid_spec = pltpu.PrefetchScalarGridSpec(
        num_scalar_prefetch=0,
        grid=(nb,),
        in_specs=[
            res2((kdim, N)), res2((vdim, N)), res2((kdim, N)), res2((vdim, N)),
            per_bank(1, N), per_bank(1, N),
            per_bank(M, kdim),
            per_bank(M, vdim), per_bank(M, vdim),
            per_bank(M, vdim), per_bank(M, vdim),
            res2((nb * M, kdim)),
        ],
        out_specs=(
            per_bank(M, kdim), per_bank(M, vdim), per_bank(M, vdim),
            res2((vdim, N)), res2((vdim, N)), res2((vdim, N)), res2((vdim, N)),
            res2((vdim, N)), res2((vdim, N)), res2((vdim, N)), res2((vdim, N)),
            res2((1, N)), res2((1, N)),
            res2((1, 1)), res2((1, 1)),
        ),
    )
    return pl.pallas_call(
        functools.partial(_memory_kernel, nb, M),
        grid_spec=grid_spec,
        out_shape=out_shape,
        compiler_params=pltpu.CompilerParams(
            dimension_semantics=("arbitrary",)),   # outputs accumulate over banks
    )(qa, sa, qb, sb, masks_a3, masks_b3, keys, vals_a, vals_b, r1, r2, keys_flat)


# ---------------------------------------------------------------------------
# Forward pass (all glue under one jit)
# ---------------------------------------------------------------------------
def _flatten_cn(x):   # (B, C, H, W) -> (C, B*H*W), (b, h, w) row-major columns
    B, C, H, W = x.shape
    return jnp.transpose(x, (1, 0, 2, 3)).reshape(C, B * H * W)


def _unflatten_cn(x, B, H, W):   # (C, N) -> (B, C, H, W)
    C = x.shape[0]
    return jnp.transpose(x.reshape(C, B, H, W), (1, 0, 2, 3))


@functools.partial(jax.jit, static_argnames=("memory_size", "vdim"))
def memory_forward(conts_a, stys_a, conts_b, stys_b, masks_a, masks_b,
                   memorys, rand1s, rand2s, *, memory_size, vdim):
    B, _, H, W = conts_a.shape
    N = B * H * W
    nb = len(memory_size)
    assert all(m == memory_size[0] for m in memory_size), "uniform bank sizes only"

    bf16 = jnp.bfloat16
    # queries/styles/rands are only MXU operands -> stream as bf16 (f32 accumulate)
    qa = _flatten_cn(conts_a).astype(bf16)
    sa = _flatten_cn(stys_a).astype(bf16)
    qb = _flatten_cn(conts_b).astype(bf16)
    sb = _flatten_cn(stys_b).astype(bf16)

    masks_a3 = jnp.transpose(masks_a, (1, 0, 2, 3)).reshape(nb, 1, N).astype(jnp.float32)
    masks_b3 = jnp.transpose(masks_b, (1, 0, 2, 3)).reshape(nb, 1, N).astype(jnp.float32)

    keys = jnp.stack([m[0] for m in memorys]).astype(jnp.float32)     # (nb, M, kdim)
    vals_a = jnp.stack([m[1] for m in memorys]).astype(jnp.float32)   # (nb, M, vdim)
    vals_b = jnp.stack([m[2] for m in memorys]).astype(jnp.float32)
    r1 = jnp.stack(rand1s).astype(bf16)
    r2 = jnp.stack(rand2s).astype(bf16)
    keys_flat = keys.reshape(nb * keys.shape[1], keys.shape[2]).astype(bf16)

    (new_keys, new_vals_a, new_vals_b,
     sty_aa, sty_ab, sty_ba, sty_bb,
     rand_aa, rand_ab, rand_ba, rand_bb,
     _gathers_a, _gathers_b, key_loss, value_loss) = _memory_call(
        qa, sa, qb, sb, masks_a3, masks_b3,
        keys, vals_a, vals_b, r1, r2, keys_flat)

    updated_memorys = [(new_keys[i], new_vals_a[i], new_vals_b[i])
                       for i in range(nb)]
    unflat = lambda x: _unflatten_cn(x, B, H, W)
    return (updated_memorys,
            unflat(sty_aa), unflat(sty_ab), unflat(sty_ba), unflat(sty_bb),
            unflat(rand_aa), unflat(rand_ab), unflat(rand_ba), unflat(rand_bb),
            key_loss[0, 0], value_loss[0, 0])


# ---------------------------------------------------------------------------
# Example run
# ---------------------------------------------------------------------------
if __name__ == "__main__":
    B, H, W = 2, 8, 8
    kdim = vdim = 32
    memory_size = (8, 8)

    key = jax.random.PRNGKey(0)
    ks = jax.random.split(key, 12)

    conts_a = jax.random.normal(ks[0], (B, kdim, H, W), jnp.float32)
    stys_a = jax.random.normal(ks[1], (B, vdim, H, W), jnp.float32)
    conts_b = jax.random.normal(ks[2], (B, kdim, H, W), jnp.float32)
    stys_b = jax.random.normal(ks[3], (B, vdim, H, W), jnp.float32)

    # masks: a full partition of the spatial grid per memory region so every
    # region is non-empty and every pixel is covered.
    yy, xx = jnp.meshgrid(jnp.arange(H), jnp.arange(W), indexing="ij")
    checker = ((yy + xx) % 2).astype(jnp.float32)
    masks_a = jnp.broadcast_to(jnp.stack([1.0 - checker, checker], axis=0)[None],
                               (B, len(memory_size), H, W))
    half = (xx < W // 2).astype(jnp.float32)
    masks_b = jnp.broadcast_to(jnp.stack([half, 1.0 - half], axis=0)[None],
                               (B, len(memory_size), H, W))

    # memory banks: (key, value_a, value_b) per region; keys L2-normalized.
    memorys, rand1s, rand2s = [], [], []
    for i, m in enumerate(memory_size):
        kk = jax.random.normal(ks[4 + i], (m, kdim), jnp.float32)
        kk = kk / jnp.linalg.norm(kk, axis=1, keepdims=True)
        va = jax.random.normal(ks[6 + i], (m, vdim), jnp.float32)
        vb = jax.random.normal(ks[8 + i], (m, vdim), jnp.float32)
        memorys.append((kk, va, vb))
        rand1s.append(jax.random.normal(ks[10], (m, vdim), jnp.float32))
        rand2s.append(jax.random.normal(ks[11], (m, vdim), jnp.float32))

    out = memory_forward(conts_a, stys_a, conts_b, stys_b, masks_a, masks_b,
                         memorys, rand1s, rand2s,
                         memory_size=memory_size, vdim=vdim)

    (updated_memorys, sty_aa, sty_ab, sty_ba, sty_bb,
     rand_aa, rand_ab, rand_ba, rand_bb, key_loss, value_loss) = out

    jax.block_until_ready(sty_aa)
    jax.block_until_ready(key_loss)
    jax.block_until_ready(updated_memorys[0][0])
    print("KERNEL_OK")
</pallas_src>

<mosaic_0001>
module attributes {stable_mosaic.version = 11 : i64} {
  func.func @_memory_kernel(%arg0: i32, %arg1: memref<32x128xbf16, #tpu.memory_space<vmem>>, %arg2: memref<32x128xbf16, #tpu.memory_space<vmem>>, %arg3: memref<32x128xbf16, #tpu.memory_space<vmem>>, %arg4: memref<32x128xbf16, #tpu.memory_space<vmem>>, %arg5: memref<1x1x128xf32, #tpu.memory_space<vmem>>, %arg6: memref<1x1x128xf32, #tpu.memory_space<vmem>>, %arg7: memref<1x8x32xf32, #tpu.memory_space<vmem>>, %arg8: memref<1x8x32xf32, #tpu.memory_space<vmem>>, %arg9: memref<1x8x32xf32, #tpu.memory_space<vmem>>, %arg10: memref<1x8x32xbf16, #tpu.memory_space<vmem>>, %arg11: memref<1x8x32xbf16, #tpu.memory_space<vmem>>, %arg12: memref<16x32xbf16, #tpu.memory_space<vmem>>, %arg13: memref<1x8x32xf32, #tpu.memory_space<vmem>>, %arg14: memref<1x8x32xf32, #tpu.memory_space<vmem>>, %arg15: memref<1x8x32xf32, #tpu.memory_space<vmem>>, %arg16: memref<32x128xf32, #tpu.memory_space<vmem>>, %arg17: memref<32x128xf32, #tpu.memory_space<vmem>>, %arg18: memref<32x128xf32, #tpu.memory_space<vmem>>, %arg19: memref<32x128xf32, #tpu.memory_space<vmem>>, %arg20: memref<32x128xf32, #tpu.memory_space<vmem>>, %arg21: memref<32x128xf32, #tpu.memory_space<vmem>>, %arg22: memref<32x128xf32, #tpu.memory_space<vmem>>, %arg23: memref<32x128xf32, #tpu.memory_space<vmem>>, %arg24: memref<1x128xf32, #tpu.memory_space<vmem>>, %arg25: memref<1x128xf32, #tpu.memory_space<vmem>>, %arg26: memref<1x1xf32, #tpu.memory_space<vmem>>, %arg27: memref<1x1xf32, #tpu.memory_space<vmem>>) attributes {dimension_semantics = [#tpu.dimension_semantics<arbitrary>], iteration_bounds = array<i64: 2>, scalar_prefetch = 0 : i64, scratch_operands = 0 : i64, tpu.core_type = #tpu.core_type<tc>, window_params = [{pipeline_mode = #tpu.pipeline_mode<synchronous>, transform_indices = @transform_0, window_bounds = array<i64: 32, 128>}, {pipeline_mode = #tpu.pipeline_mode<synchronous>, transform_indices = @transform_1, window_bounds = array<i64: 32, 128>}, {pipeline_mode = #tpu.pipeline_mode<synchronous>, transform_indices = @transform_2, window_bounds = array<i64: 32, 128>}, {pipeline_mode = #tpu.pipeline_mode<synchronous>, transform_indices = @transform_3, window_bounds = array<i64: 32, 128>}, {transform_indices = @transform_4, window_bounds = array<i64: 1, 1, 128>}, {transform_indices = @transform_5, window_bounds = array<i64: 1, 1, 128>}, {transform_indices = @transform_6, window_bounds = array<i64: 1, 8, 32>}, {transform_indices = @transform_7, window_bounds = array<i64: 1, 8, 32>}, {transform_indices = @transform_8, window_bounds = array<i64: 1, 8, 32>}, {transform_indices = @transform_9, window_bounds = array<i64: 1, 8, 32>}, {transform_indices = @transform_10, window_bounds = array<i64: 1, 8, 32>}, {pipeline_mode = #tpu.pipeline_mode<synchronous>, transform_indices = @transform_11, window_bounds = array<i64: 16, 32>}, {transform_indices = @transform_12, window_bounds = array<i64: 1, 8, 32>}, {transform_indices = @transform_13, window_bounds = array<i64: 1, 8, 32>}, {transform_indices = @transform_14, window_bounds = array<i64: 1, 8, 32>}, {pipeline_mode = #tpu.pipeline_mode<synchronous>, transform_indices = @transform_15, window_bounds = array<i64: 32, 128>}, {pipeline_mode = #tpu.pipeline_mode<synchronous>, transform_indices = @transform_16, window_bounds = array<i64: 32, 128>}, {pipeline_mode = #tpu.pipeline_mode<synchronous>, transform_indices = @transform_17, window_bounds = array<i64: 32, 128>}, {pipeline_mode = #tpu.pipeline_mode<synchronous>, transform_indices = @transform_18, window_bounds = array<i64: 32, 128>}, {pipeline_mode = #tpu.pipeline_mode<synchronous>, transform_indices = @transform_19, window_bounds = array<i64: 32, 128>}, {pipeline_mode = #tpu.pipeline_mode<synchronous>, transform_indices = @transform_20, window_bounds = array<i64: 32, 128>}, {pipeline_mode = #tpu.pipeline_mode<synchronous>, transform_indices = @transform_21, window_bounds = array<i64: 32, 128>}, {pipeline_mode = #tpu.pipeline_mode<synchronous>, transform_indices = @transform_22, window_bounds = array<i64: 32, 128>}, {pipeline_mode = #tpu.pipeline_mode<synchronous>, transform_indices = @transform_23, window_bounds = array<i64: 1, 128>}, {pipeline_mode = #tpu.pipeline_mode<synchronous>, transform_indices = @transform_24, window_bounds = array<i64: 1, 128>}, {pipeline_mode = #tpu.pipeline_mode<synchronous>, transform_indices = @transform_25, window_bounds = array<i64: 1, 1>}, {pipeline_mode = #tpu.pipeline_mode<synchronous>, transform_indices = @transform_26, window_bounds = array<i64: 1, 1>}]} {
    %c0_i32 = arith.constant 0 : i32
    %0 = arith.cmpi eq, %arg0, %c0_i32 : i32
    %1 = arith.extui %0 : i1 to i32
    %c0_i32_0 = arith.constant 0 : i32
    %2 = arith.cmpi ne, %1, %c0_i32_0 : i32
    scf.if %2 {
      %cst_180 = arith.constant 0.000000e+00 : f32
      %431 = vector.broadcast %cst_180 : f32 to vector<32x128xf32>
      %c0_181 = arith.constant 0 : index
      %c0_182 = arith.constant 0 : index
      %432 = vector.load %arg16[%c0_181, %c0_182] : memref<32x128xf32, #tpu.memory_space<vmem>>, vector<32x128xf32>
      tpu.vector_store %arg16[%c0_181, %c0_182], %431 {strides = array<i32>} : memref<32x128xf32, #tpu.memory_space<vmem>>, vector<32x128xf32>,
      %cst_183 = arith.constant 0.000000e+00 : f32
      %433 = vector.broadcast %cst_183 : f32 to vector<32x128xf32>
      %c0_184 = arith.constant 0 : index
      %c0_185 = arith.constant 0 : index
      %434 = vector.load %arg17[%c0_184, %c0_185] : memref<32x128xf32, #tpu.memory_space<vmem>>, vector<32x128xf32>
      tpu.vector_store %arg17[%c0_184, %c0_185], %433 {strides = array<i32>} : memref<32x128xf32, #tpu.memory_space<vmem>>, vector<32x128xf32>,
      %cst_186 = arith.constant 0.000000e+00 : f32
      %435 = vector.broadcast %cst_186 : f32 to vector<32x128xf32>
      %c0_187 = arith.constant 0 : index
      %c0_188 = arith.constant 0 : index
      %436 = vector.load %arg18[%c0_187, %c0_188] : memref<32x128xf32, #tpu.memory_space<vmem>>, vector<32x128xf32>
      tpu.vector_store %arg18[%c0_187, %c0_188], %435 {strides = array<i32>} : memref<32x128xf32, #tpu.memory_space<vmem>>, vector<32x128xf32>,
      %cst_189 = arith.constant 0.000000e+00 : f32
      %437 = vector.broadcast %cst_189 : f32 to vector<32x128xf32>
      %c0_190 = arith.constant 0 : index
      %c0_191 = arith.constant 0 : index
      %438 = vector.load %arg19[%c0_190, %c0_191] : memref<32x128xf32, #tpu.memory_space<vmem>>, vector<32x128xf32>
      tpu.vector_store %arg19[%c0_190, %c0_191], %437 {strides = array<i32>} : memref<32x128xf32, #tpu.memory_space<vmem>>, vector<32x128xf32>,
      %cst_192 = arith.constant 0.000000e+00 : f32
      %439 = vector.broadcast %cst_192 : f32 to vector<32x128xf32>
      %c0_193 = arith.constant 0 : index
      %c0_194 = arith.constant 0 : index
      %440 = vector.load %arg20[%c0_193, %c0_194] : memref<32x128xf32, #tpu.memory_space<vmem>>, vector<32x128xf32>
      tpu.vector_store %arg20[%c0_193, %c0_194], %439 {strides = array<i32>} : memref<32x128xf32, #tpu.memory_space<vmem>>, vector<32x128xf32>,
      %cst_195 = arith.constant 0.000000e+00 : f32
      %441 = vector.broadcast %cst_195 : f32 to vector<32x128xf32>
      %c0_196 = arith.constant 0 : index
      %c0_197 = arith.constant 0 : index
      %442 = vector.load %arg21[%c0_196, %c0_197] : memref<32x128xf32, #tpu.memory_space<vmem>>, vector<32x128xf32>
      tpu.vector_store %arg21[%c0_196, %c0_197], %441 {strides = array<i32>} : memref<32x128xf32, #tpu.memory_space<vmem>>, vector<32x128xf32>,
      %cst_198 = arith.constant 0.000000e+00 : f32
      %443 = vector.broadcast %cst_198 : f32 to vector<32x128xf32>
      %c0_199 = arith.constant 0 : index
      %c0_200 = arith.constant 0 : index
      %444 = vector.load %arg22[%c0_199, %c0_200] : memref<32x128xf32, #tpu.memory_space<vmem>>, vector<32x128xf32>
      tpu.vector_store %arg22[%c0_199, %c0_200], %443 {strides = array<i32>} : memref<32x128xf32, #tpu.memory_space<vmem>>, vector<32x128xf32>,
      %cst_201 = arith.constant 0.000000e+00 : f32
      %445 = vector.broadcast %cst_201 : f32 to vector<32x128xf32>
      %c0_202 = arith.constant 0 : index
      %c0_203 = arith.constant 0 : index
      %446 = vector.load %arg23[%c0_202, %c0_203] : memref<32x128xf32, #tpu.memory_space<vmem>>, vector<32x128xf32>
      tpu.vector_store %arg23[%c0_202, %c0_203], %445 {strides = array<i32>} : memref<32x128xf32, #tpu.memory_space<vmem>>, vector<32x128xf32>,
      %cst_204 = arith.constant 0.000000e+00 : f32
      %447 = vector.broadcast %cst_204 : f32 to vector<1x128xf32>
      %c0_205 = arith.constant 0 : index
      %c0_206 = arith.constant 0 : index
      %448 = vector.load %arg24[%c0_205, %c0_206] : memref<1x128xf32, #tpu.memory_space<vmem>>, vector<1x128xf32>
      tpu.vector_store %arg24[%c0_205, %c0_206], %447 {strides = array<i32>} : memref<1x128xf32, #tpu.memory_space<vmem>>, vector<1x128xf32>,
      %cst_207 = arith.constant 0.000000e+00 : f32
      %449 = vector.broadcast %cst_207 : f32 to vector<1x128xf32>
      %c0_208 = arith.constant 0 : index
      %c0_209 = arith.constant 0 : index
      %450 = vector.load %arg25[%c0_208, %c0_209] : memref<1x128xf32, #tpu.memory_space<vmem>>, vector<1x128xf32>
      tpu.vector_store %arg25[%c0_208, %c0_209], %449 {strides = array<i32>} : memref<1x128xf32, #tpu.memory_space<vmem>>, vector<1x128xf32>,
      %cst_210 = arith.constant 0.000000e+00 : f32
      %451 = vector.broadcast %cst_210 : f32 to vector<1x1xf32>
      %c0_211 = arith.constant 0 : index
      %c0_212 = arith.constant 0 : index
      %452 = vector.load %arg26[%c0_211, %c0_212] : memref<1x1xf32, #tpu.memory_space<vmem>>, vector<1x1xf32>
      tpu.vector_store %arg26[%c0_211, %c0_212], %451 {strides = array<i32>} : memref<1x1xf32, #tpu.memory_space<vmem>>, vector<1x1xf32>,
      %cst_213 = arith.constant 0.000000e+00 : f32
      %453 = vector.broadcast %cst_213 : f32 to vector<1x1xf32>
      %c0_214 = arith.constant 0 : index
      %c0_215 = arith.constant 0 : index
      %454 = vector.load %arg27[%c0_214, %c0_215] : memref<1x1xf32, #tpu.memory_space<vmem>>, vector<1x1xf32>
      tpu.vector_store %arg27[%c0_214, %c0_215], %453 {strides = array<i32>} : memref<1x1xf32, #tpu.memory_space<vmem>>, vector<1x1xf32>,
    } else {
    }
    %c0 = arith.constant 0 : index
    %c0_1 = arith.constant 0 : index
    %c0_2 = arith.constant 0 : index
    %3 = vector.load %arg5[%c0, %c0_1, %c0_2] : memref<1x1x128xf32, #tpu.memory_space<vmem>>, vector<1x1x128xf32>
    %4 = vector.shape_cast %3 : vector<1x1x128xf32> to vector<1x128xf32>
    %c0_3 = arith.constant 0 : index
    %c0_4 = arith.constant 0 : index
    %c0_5 = arith.constant 0 : index
    %5 = vector.load %arg6[%c0_3, %c0_4, %c0_5] : memref<1x1x128xf32, #tpu.memory_space<vmem>>, vector<1x1x128xf32>
    %6 = vector.shape_cast %5 : vector<1x1x128xf32> to vector<1x128xf32>
    %7 = arith.truncf %4 : vector<1x128xf32> to vector<1x128xbf16>
    %8 = arith.truncf %6 : vector<1x128xf32> to vector<1x128xbf16>
    %c0_6 = arith.constant 0 : index
    %c0_7 = arith.constant 0 : index
    %9 = vector.load %arg1[%c0_6, %c0_7] : memref<32x128xbf16, #tpu.memory_space<vmem>>, vector<32x128xbf16>
    %10 = vector.broadcast %7 : vector<1x128xbf16> to vector<32x128xbf16>
    %11 = arith.mulf %9, %10 : vector<32x128xbf16>
    %c0_8 = arith.constant 0 : index
    %c0_9 = arith.constant 0 : index
    %12 = vector.load %arg2[%c0_8, %c0_9] : memref<32x128xbf16, #tpu.memory_space<vmem>>, vector<32x128xbf16>
    %13 = vector.broadcast %7 : vector<1x128xbf16> to vector<32x128xbf16>
    %14 = arith.mulf %12, %13 : vector<32x128xbf16>
    %c0_10 = arith.constant 0 : index
    %c0_11 = arith.constant 0 : index
    %15 = vector.load %arg3[%c0_10, %c0_11] : memref<32x128xbf16, #tpu.memory_space<vmem>>, vector<32x128xbf16>
    %16 = vector.broadcast %8 : vector<1x128xbf16> to vector<32x128xbf16>
    %17 = arith.mulf %15, %16 : vector<32x128xbf16>
    %c0_12 = arith.constant 0 : index
    %c0_13 = arith.constant 0 : index
    %18 = vector.load %arg4[%c0_12, %c0_13] : memref<32x128xbf16, #tpu.memory_space<vmem>>, vector<32x128xbf16>
    %19 = vector.broadcast %8 : vector<1x128xbf16> to vector<32x128xbf16>
    %20 = arith.mulf %18, %19 : vector<32x128xbf16>
    %21 = tpu.concatenate %11, %17 in 1 : vector<32x128xbf16>, vector<32x128xbf16> -> vector<32x256xbf16>
    %c0_14 = arith.constant 0 : index
    %c0_15 = arith.constant 0 : index
    %c0_16 = arith.constant 0 : index
    %22 = vector.load %arg7[%c0_14, %c0_15, %c0_16] : memref<1x8x32xf32, #tpu.memory_space<vmem>>, vector<1x8x32xf32>
    %23 = vector.shape_cast %22 : vector<1x8x32xf32> to vector<8x32xf32>
    %c0_17 = arith.constant 0 : index
    %c0_18 = arith.constant 0 : index
    %c0_19 = arith.constant 0 : index
    %24 = vector.load %arg8[%c0_17, %c0_18, %c0_19] : memref<1x8x32xf32, #tpu.memory_space<vmem>>, vector<1x8x32xf32>
    %25 = vector.shape_cast %24 : vector<1x8x32xf32> to vector<8x32xf32>
    %c0_20 = arith.constant 0 : index
    %c0_21 = arith.constant 0 : index
    %c0_22 = arith.constant 0 : index
    %26 = vector.load %arg9[%c0_20, %c0_21, %c0_22] : memref<1x8x32xf32, #tpu.memory_space<vmem>>, vector<1x8x32xf32>
    %27 = vector.shape_cast %26 : vector<1x8x32xf32> to vector<8x32xf32>
    %28 = arith.truncf %23 : vector<8x32xf32> to vector<8x32xbf16>
    %29 = arith.truncf %25 : vector<8x32xf32> to vector<8x32xbf16>
    %30 = arith.truncf %27 : vector<8x32xf32> to vector<8x32xbf16>
    %31 = tpu.iota {dimensions = array<i32: 0>} : vector<8x128xi32>
    %32 = arith.sitofp %31 : vector<8x128xi32> to vector<8x128xf32>
    %cst = arith.constant dense<0.000000e+00> : vector<8x256xf32>
    %33 = tpu.matmul %28, %21, %cst {dimension_numbers = #tpu.dot_dimension_numbers<[1], [0], [0], [1], [0, 0, 1, 1], [], []>} : vector<8x32xbf16>, vector<32x256xbf16>, vector<8x256xf32> -> vector<8x256xf32>
    %34 = vector.extract_strided_slice %33 {offsets = [0, 0], sizes = [8, 128], strides = [1, 1]} : vector<8x256xf32> to vector<8x128xf32>
    %35 = vector.extract_strided_slice %33 {offsets = [0, 128], sizes = [8, 128], strides = [1, 1]} : vector<8x256xf32> to vector<8x128xf32>
    %cst_23 = arith.constant 0.000000e+00 : f32
    %36 = vector.broadcast %cst_23 : f32 to vector<1x128xf32>
    %37 = arith.cmpf ogt, %4, %36 : vector<1x128xf32>
    %cst_24 = arith.constant -1.000000e+30 : f32
    %38 = vector.shape_cast %37 : vector<1x128xi1> to vector<1x128xi1>
    %39 = vector.broadcast %38 : vector<1x128xi1> to vector<8x128xi1>
    %40 = vector.broadcast %cst_24 : f32 to vector<8x128xf32>
    %41 = arith.select %39, %34, %40 : vector<8x128xi1>, vector<8x128xf32>
    %cst_25 = arith.constant dense<0xFF800000> : vector<8xf32>
    %42 = vector.multi_reduction <maximumf>, %41, %cst_25 [1] : vector<8x128xf32> to vector<8xf32>
    %43 = vector.shape_cast %42 : vector<8xf32> to vector<8x1xf32>
    %cst_26 = arith.constant 0.000000e+00 : f32
    %44 = vector.broadcast %cst_26 : f32 to vector<1x128xf32>
    %45 = arith.cmpf ogt, %4, %44 : vector<1x128xf32>
    %46 = vector.broadcast %43 : vector<8x1xf32> to vector<8x128xf32>
    %47 = arith.subf %41, %46 : vector<8x128xf32>
    %48 = math.exp %47 : vector<8x128xf32>
    %cst_27 = arith.constant 0.000000e+00 : f32
    %49 = vector.shape_cast %45 : vector<1x128xi1> to vector<1x128xi1>
    %50 = vector.broadcast %49 : vector<1x128xi1> to vector<8x128xi1>
    %51 = vector.broadcast %cst_27 : f32 to vector<8x128xf32>
    %52 = arith.select %50, %48, %51 : vector<8x128xi1>, vector<8x128xf32>
    %cst_28 = arith.constant dense<0.000000e+00> : vector<8xf32>
    %53 = vector.multi_reduction <add>, %52, %cst_28 [1] : vector<8x128xf32> to vector<8xf32>
    %54 = vector.shape_cast %53 : vector<8xf32> to vector<8x1xf32>
    %cst_29 = arith.constant 1.000000e-30 : f32
    %55 = vector.broadcast %cst_29 : f32 to vector<8x1xf32>
    %56 = arith.maximumf %54, %55 : vector<8x1xf32>
    %57 = tpu.reciprocal %56 {approx = true} : vector<8x1xf32> -> vector<8x1xf32>
    %58 = vector.broadcast %57 : vector<8x1xf32> to vector<8x128xf32>
    %59 = arith.mulf %52, %58 : vector<8x128xf32>
    %cst_30 = arith.constant 0.000000e+00 : f32
    %60 = vector.broadcast %cst_30 : f32 to vector<1x128xf32>
    %61 = arith.cmpf ogt, %6, %60 : vector<1x128xf32>
    %cst_31 = arith.constant -1.000000e+30 : f32
    %62 = vector.shape_cast %61 : vector<1x128xi1> to vector<1x128xi1>
    %63 = vector.broadcast %62 : vector<1x128xi1> to vector<8x128xi1>
    %64 = vector.broadcast %cst_31 : f32 to vector<8x128xf32>
    %65 = arith.select %63, %35, %64 : vector<8x128xi1>, vector<8x128xf32>
    %cst_32 = arith.constant dense<0xFF800000> : vector<8xf32>
    %66 = vector.multi_reduction <maximumf>, %65, %cst_32 [1] : vector<8x128xf32> to vector<8xf32>
    %67 = vector.shape_cast %66 : vector<8xf32> to vector<8x1xf32>
    %cst_33 = arith.constant 0.000000e+00 : f32
    %68 = vector.broadcast %cst_33 : f32 to vector<1x128xf32>
    %69 = arith.cmpf ogt, %6, %68 : vector<1x128xf32>
    %70 = vector.broadcast %67 : vector<8x1xf32> to vector<8x128xf32>
    %71 = arith.subf %65, %70 : vector<8x128xf32>
    %72 = math.exp %71 : vector<8x128xf32>
    %cst_34 = arith.constant 0.000000e+00 : f32
    %73 = vector.shape_cast %69 : vector<1x128xi1> to vector<1x128xi1>
    %74 = vector.broadcast %73 : vector<1x128xi1> to vector<8x128xi1>
    %75 = vector.broadcast %cst_34 : f32 to vector<8x128xf32>
    %76 = arith.select %74, %72, %75 : vector<8x128xi1>, vector<8x128xf32>
    %cst_35 = arith.constant dense<0.000000e+00> : vector<8xf32>
    %77 = vector.multi_reduction <add>, %76, %cst_35 [1] : vector<8x128xf32> to vector<8xf32>
    %78 = vector.shape_cast %77 : vector<8xf32> to vector<8x1xf32>
    %cst_36 = arith.constant 1.000000e-30 : f32
    %79 = vector.broadcast %cst_36 : f32 to vector<8x1xf32>
    %80 = arith.maximumf %78, %79 : vector<8x1xf32>
    %81 = tpu.reciprocal %80 {approx = true} : vector<8x1xf32> -> vector<8x1xf32>
    %82 = vector.broadcast %81 : vector<8x1xf32> to vector<8x128xf32>
    %83 = arith.mulf %76, %82 : vector<8x128xf32>
    %cst_37 = arith.constant dense<0xFF800000> : vector<128xf32>
    %84 = vector.multi_reduction <maximumf>, %34, %cst_37 [0] : vector<8x128xf32> to vector<128xf32>
    %85 = vector.shape_cast %84 : vector<128xf32> to vector<1x128xf32>
    %86 = vector.broadcast %85 : vector<1x128xf32> to vector<8x128xf32>
    %87 = arith.cmpf oge, %34, %86 : vector<8x128xf32>
    %cst_38 = arith.constant 8.000000e+00 : f32
    %88 = vector.broadcast %cst_38 : f32 to vector<8x128xf32>
    %89 = arith.select %87, %32, %88 : vector<8x128xi1>, vector<8x128xf32>
    %cst_39 = arith.constant dense<0x7F800000> : vector<128xf32>
    %90 = vector.multi_reduction <minimumf>, %89, %cst_39 [0] : vector<8x128xf32> to vector<128xf32>
    %91 = vector.shape_cast %90 : vector<128xf32> to vector<1x128xf32>
    %92 = vector.broadcast %91 : vector<1x128xf32> to vector<8x128xf32>
    %93 = arith.cmpf oeq, %32, %92 : vector<8x128xf32>
    %94 = arith.extui %93 : vector<8x128xi1> to vector<8x128xi32>
    %95 = arith.sitofp %94 : vector<8x128xi32> to vector<8x128xf32>
    %cst_40 = arith.constant dense<0xFF800000> : vector<128xf32>
    %96 = vector.multi_reduction <maximumf>, %35, %cst_40 [0] : vector<8x128xf32> to vector<128xf32>
    %97 = vector.shape_cast %96 : vector<128xf32> to vector<1x128xf32>
    %98 = vector.broadcast %97 : vector<1x128xf32> to vector<8x128xf32>
    %99 = arith.cmpf oge, %35, %98 : vector<8x128xf32>
    %cst_41 = arith.constant 8.000000e+00 : f32
    %100 = vector.broadcast %cst_41 : f32 to vector<8x128xf32>
    %101 = arith.select %99, %32, %100 : vector<8x128xi1>, vector<8x128xf32>
    %cst_42 = arith.constant dense<0x7F800000> : vector<128xf32>
    %102 = vector.multi_reduction <minimumf>, %101, %cst_42 [0] : vector<8x128xf32> to vector<128xf32>
    %103 = vector.shape_cast %102 : vector<128xf32> to vector<1x128xf32>
    %104 = vector.broadcast %103 : vector<1x128xf32> to vector<8x128xf32>
    %105 = arith.cmpf oeq, %32, %104 : vector<8x128xf32>
    %106 = arith.extui %105 : vector<8x128xi1> to vector<8x128xi32>
    %107 = arith.sitofp %106 : vector<8x128xi32> to vector<8x128xf32>
    %108 = arith.mulf %95, %59 : vector<8x128xf32>
    %109 = arith.truncf %108 : vector<8x128xf32> to vector<8x128xbf16>
    %110 = arith.mulf %107, %83 : vector<8x128xf32>
    %111 = arith.truncf %110 : vector<8x128xf32> to vector<8x128xbf16>
    %112 = tpu.concatenate %11, %14 in 0 : vector<32x128xbf16>, vector<32x128xbf16> -> vector<64x128xbf16>
    %113 = tpu.concatenate %17, %20 in 0 : vector<32x128xbf16>, vector<32x128xbf16> -> vector<64x128xbf16>
    %cst_43 = arith.constant dense<0.000000e+00> : vector<8x64xf32>
    %114 = tpu.matmul %109, %112, %cst_43 {dimension_numbers = #tpu.dot_dimension_numbers<[1], [1], [0], [0], [0, 0, 1, 0], [], []>} : vector<8x128xbf16>, vector<64x128xbf16>, vector<8x64xf32> -> vector<8x64xf32>
    %cst_44 = arith.constant dense<0.000000e+00> : vector<8x64xf32>
    %115 = tpu.matmul %111, %113, %cst_44 {dimension_numbers = #tpu.dot_dimension_numbers<[1], [1], [0], [0], [0, 0, 1, 0], [], []>} : vector<8x128xbf16>, vector<64x128xbf16>, vector<8x64xf32> -> vector<8x64xf32>
    %116 = vector.extract_strided_slice %114 {offsets = [0, 0], sizes = [8, 32], strides = [1, 1]} : vector<8x64xf32> to vector<8x32xf32>
    %117 = vector.extract_strided_slice %114 {offsets = [0, 32], sizes = [8, 32], strides = [1, 1]} : vector<8x64xf32> to vector<8x32xf32>
    %118 = vector.extract_strided_slice %115 {offsets = [0, 0], sizes = [8, 32], strides = [1, 1]} : vector<8x64xf32> to vector<8x32xf32>
    %119 = vector.extract_strided_slice %115 {offsets = [0, 32], sizes = [8, 32], strides = [1, 1]} : vector<8x64xf32> to vector<8x32xf32>
    %120 = arith.mulf %116, %116 : vector<8x32xf32>
    %cst_45 = arith.constant dense<0.000000e+00> : vector<8xf32>
    %121 = vector.multi_reduction <add>, %120, %cst_45 [1] : vector<8x32xf32> to vector<8xf32>
    %122 = vector.shape_cast %121 : vector<8xf32> to vector<8x1xf32>
    %cst_46 = arith.constant 1.000000e-24 : f32
    %123 = vector.broadcast %cst_46 : f32 to vector<8x1xf32>
    %124 = arith.maximumf %122, %123 : vector<8x1xf32>
    %125 = math.rsqrt %124 : vector<8x1xf32>
    %126 = vector.broadcast %125 : vector<8x1xf32> to vector<8x32xf32>
    %127 = arith.mulf %116, %126 : vector<8x32xf32>
    %cst_47 = arith.constant 2.500000e-01 : f32
    %128 = vector.broadcast %cst_47 : f32 to vector<8x32xf32>
    %129 = arith.mulf %128, %127 : vector<8x32xf32>
    %130 = arith.mulf %118, %118 : vector<8x32xf32>
    %cst_48 = arith.constant dense<0.000000e+00> : vector<8xf32>
    %131 = vector.multi_reduction <add>, %130, %cst_48 [1] : vector<8x32xf32> to vector<8xf32>
    %132 = vector.shape_cast %131 : vector<8xf32> to vector<8x1xf32>
    %cst_49 = arith.constant 1.000000e-24 : f32
    %133 = vector.broadcast %cst_49 : f32 to vector<8x1xf32>
    %134 = arith.maximumf %132, %133 : vector<8x1xf32>
    %135 = math.rsqrt %134 : vector<8x1xf32>
    %136 = vector.broadcast %135 : vector<8x1xf32> to vector<8x32xf32>
    %137 = arith.mulf %118, %136 : vector<8x32xf32>
    %cst_50 = arith.constant 2.500000e-01 : f32
    %138 = vector.broadcast %cst_50 : f32 to vector<8x32xf32>
    %139 = arith.mulf %138, %137 : vector<8x32xf32>
    %140 = arith.addf %129, %139 : vector<8x32xf32>
    %cst_51 = arith.constant 5.000000e-01 : f32
    %141 = vector.broadcast %cst_51 : f32 to vector<8x32xf32>
    %142 = arith.mulf %141, %23 : vector<8x32xf32>
    %143 = arith.addf %140, %142 : vector<8x32xf32>
    %144 = arith.mulf %143, %143 : vector<8x32xf32>
    %cst_52 = arith.constant dense<0.000000e+00> : vector<8xf32>
    %145 = vector.multi_reduction <add>, %144, %cst_52 [1] : vector<8x32xf32> to vector<8xf32>
    %146 = vector.shape_cast %145 : vector<8xf32> to vector<8x1xf32>
    %cst_53 = arith.constant 1.000000e-24 : f32
    %147 = vector.broadcast %cst_53 : f32 to vector<8x1xf32>
    %148 = arith.maximumf %146, %147 : vector<8x1xf32>
    %149 = math.rsqrt %148 : vector<8x1xf32>
    %150 = vector.broadcast %149 : vector<8x1xf32> to vector<8x32xf32>
    %151 = arith.mulf %143, %150 : vector<8x32xf32>
    %cst_54 = arith.constant dense<0.000000e+00> : vector<8xf32>
    %152 = vector.multi_reduction <add>, %117, %cst_54 [1] : vector<8x32xf32> to vector<8xf32>
    %153 = vector.shape_cast %152 : vector<8xf32> to vector<8x1xf32>
    %cst_55 = arith.constant 3.200000e+01 : f32
    %154 = vector.broadcast %cst_55 : f32 to vector<8x1xf32>
    %155 = arith.divf %153, %154 : vector<8x1xf32>
    %156 = vector.broadcast %155 : vector<8x1xf32> to vector<8x32xf32>
    %157 = arith.subf %117, %156 : vector<8x32xf32>
    %158 = arith.mulf %157, %157 : vector<8x32xf32>
    %cst_56 = arith.constant dense<0.000000e+00> : vector<8xf32>
    %159 = vector.multi_reduction <add>, %158, %cst_56 [1] : vector<8x32xf32> to vector<8xf32>
    %160 = vector.shape_cast %159 : vector<8xf32> to vector<8x1xf32>
    %cst_57 = arith.constant 3.200000e+01 : f32
    %161 = vector.broadcast %cst_57 : f32 to vector<8x1xf32>
    %162 = arith.divf %160, %161 : vector<8x1xf32>
    %163 = vector.broadcast %155 : vector<8x1xf32> to vector<8x32xf32>
    %164 = arith.subf %117, %163 : vector<8x32xf32>
    %cst_58 = arith.constant 9.99999974E-6 : f32
    %165 = vector.broadcast %cst_58 : f32 to vector<8x1xf32>
    %166 = arith.addf %162, %165 : vector<8x1xf32>
    %167 = math.rsqrt %166 : vector<8x1xf32>
    %168 = vector.broadcast %167 : vector<8x1xf32> to vector<8x32xf32>
    %169 = arith.mulf %164, %168 : vector<8x32xf32>
    %cst_59 = arith.constant 5.000000e-01 : f32
    %170 = vector.broadcast %cst_59 : f32 to vector<8x32xf32>
    %171 = arith.mulf %170, %169 : vector<8x32xf32>
    %cst_60 = arith.constant 5.000000e-01 : f32
    %172 = vector.broadcast %cst_60 : f32 to vector<8x32xf32>
    %173 = arith.mulf %172, %25 : vector<8x32xf32>
    %174 = arith.addf %171, %173 : vector<8x32xf32>
    %cst_61 = arith.constant dense<0.000000e+00> : vector<8xf32>
    %175 = vector.multi_reduction <add>, %119, %cst_61 [1] : vector<8x32xf32> to vector<8xf32>
    %176 = vector.shape_cast %175 : vector<8xf32> to vector<8x1xf32>
    %cst_62 = arith.constant 3.200000e+01 : f32
    %177 = vector.broadcast %cst_62 : f32 to vector<8x1xf32>
    %178 = arith.divf %176, %177 : vector<8x1xf32>
    %179 = vector.broadcast %178 : vector<8x1xf32> to vector<8x32xf32>
    %180 = arith.subf %119, %179 : vector<8x32xf32>
    %181 = arith.mulf %180, %180 : vector<8x32xf32>
    %cst_63 = arith.constant dense<0.000000e+00> : vector<8xf32>
    %182 = vector.multi_reduction <add>, %181, %cst_63 [1] : vector<8x32xf32> to vector<8xf32>
    %183 = vector.shape_cast %182 : vector<8xf32> to vector<8x1xf32>
    %cst_64 = arith.constant 3.200000e+01 : f32
    %184 = vector.broadcast %cst_64 : f32 to vector<8x1xf32>
    %185 = arith.divf %183, %184 : vector<8x1xf32>
    %186 = vector.broadcast %178 : vector<8x1xf32> to vector<8x32xf32>
    %187 = arith.subf %119, %186 : vector<8x32xf32>
    %cst_65 = arith.constant 9.99999974E-6 : f32
    %188 = vector.broadcast %cst_65 : f32 to vector<8x1xf32>
    %189 = arith.addf %185, %188 : vector<8x1xf32>
    %190 = math.rsqrt %189 : vector<8x1xf32>
    %191 = vector.broadcast %190 : vector<8x1xf32> to vector<8x32xf32>
    %192 = arith.mulf %187, %191 : vector<8x32xf32>
    %cst_66 = arith.constant 5.000000e-01 : f32
    %193 = vector.broadcast %cst_66 : f32 to vector<8x32xf32>
    %194 = arith.mulf %193, %192 : vector<8x32xf32>
    %cst_67 = arith.constant 5.000000e-01 : f32
    %195 = vector.broadcast %cst_67 : f32 to vector<8x32xf32>
    %196 = arith.mulf %195, %27 : vector<8x32xf32>
    %197 = arith.addf %194, %196 : vector<8x32xf32>
    %c0_68 = arith.constant 0 : index
    %c0_69 = arith.constant 0 : index
    %c0_70 = arith.constant 0 : index
    %198 = vector.load %arg13[%c0_68, %c0_69, %c0_70] : memref<1x8x32xf32, #tpu.memory_space<vmem>>, vector<1x8x32xf32>
    %199 = vector.shape_cast %198 : vector<1x8x32xf32> to vector<8x32xf32>
    %200 = vector.shape_cast %151 : vector<8x32xf32> to vector<1x8x32xf32>
    tpu.vector_store %arg13[%c0_68, %c0_69, %c0_70], %200 {strides = array<i32>} : memref<1x8x32xf32, #tpu.memory_space<vmem>>, vector<1x8x32xf32>,
    %c0_71 = arith.constant 0 : index
    %c0_72 = arith.constant 0 : index
    %c0_73 = arith.constant 0 : index
    %201 = vector.load %arg14[%c0_71, %c0_72, %c0_73] : memref<1x8x32xf32, #tpu.memory_space<vmem>>, vector<1x8x32xf32>
    %202 = vector.shape_cast %201 : vector<1x8x32xf32> to vector<8x32xf32>
    %203 = vector.shape_cast %174 : vector<8x32xf32> to vector<1x8x32xf32>
    tpu.vector_store %arg14[%c0_71, %c0_72, %c0_73], %203 {strides = array<i32>} : memref<1x8x32xf32, #tpu.memory_space<vmem>>, vector<1x8x32xf32>,
    %c0_74 = arith.constant 0 : index
    %c0_75 = arith.constant 0 : index
    %c0_76 = arith.constant 0 : index
    %204 = vector.load %arg15[%c0_74, %c0_75, %c0_76] : memref<1x8x32xf32, #tpu.memory_space<vmem>>, vector<1x8x32xf32>
    %205 = vector.shape_cast %204 : vector<1x8x32xf32> to vector<8x32xf32>
    %206 = vector.shape_cast %197 : vector<8x32xf32> to vector<1x8x32xf32>
    tpu.vector_store %arg15[%c0_74, %c0_75, %c0_76], %206 {strides = array<i32>} : memref<1x8x32xf32, #tpu.memory_space<vmem>>, vector<1x8x32xf32>,
    %207 = arith.truncf %151 : vector<8x32xf32> to vector<8x32xbf16>
    %cst_77 = arith.constant dense<0.000000e+00> : vector<8x256xf32>
    %208 = tpu.matmul %207, %21, %cst_77 {dimension_numbers = #tpu.dot_dimension_numbers<[1], [0], [0], [1], [0, 0, 1, 1], [], []>} : vector<8x32xbf16>, vector<32x256xbf16>, vector<8x256xf32> -> vector<8x256xf32>
    %cst_78 = arith.constant dense<0xFF800000> : vector<256xf32>
    %209 = vector.multi_reduction <maximumf>, %208, %cst_78 [0] : vector<8x256xf32> to vector<256xf32>
    %210 = vector.shape_cast %209 : vector<256xf32> to vector<1x256xf32>
    %211 = vector.broadcast %210 : vector<1x256xf32> to vector<8x256xf32>
    %212 = arith.subf %208, %211 : vector<8x256xf32>
    %213 = math.exp %212 : vector<8x256xf32>
    %cst_79 = arith.constant dense<0.000000e+00> : vector<256xf32>
    %214 = vector.multi_reduction <add>, %213, %cst_79 [0] : vector<8x256xf32> to vector<256xf32>
    %215 = vector.shape_cast %214 : vector<256xf32> to vector<1x256xf32>
    %216 = tpu.reciprocal %215 {approx = true} : vector<1x256xf32> -> vector<1x256xf32>
    %217 = vector.broadcast %216 : vector<1x256xf32> to vector<8x256xf32>
    %218 = arith.mulf %213, %217 : vector<8x256xf32>
    %219 = arith.truncf %174 : vector<8x32xf32> to vector<8x32xbf16>
    %220 = arith.truncf %197 : vector<8x32xf32> to vector<8x32xbf16>
    %c0_80 = arith.constant 0 : index
    %c0_81 = arith.constant 0 : index
    %c0_82 = arith.constant 0 : index
    %221 = vector.load %arg10[%c0_80, %c0_81, %c0_82] : memref<1x8x32xbf16, #tpu.memory_space<vmem>>, vector<1x8x32xbf16>
    %222 = vector.shape_cast %221 : vector<1x8x32xbf16> to vector<8x32xbf16>
    %c0_83 = arith.constant 0 : index
    %c0_84 = arith.constant 0 : index
    %c0_85 = arith.constant 0 : index
    %223 = vector.load %arg11[%c0_83, %c0_84, %c0_85] : memref<1x8x32xbf16, #tpu.memory_space<vmem>>, vector<1x8x32xbf16>
    %224 = vector.shape_cast %223 : vector<1x8x32xbf16> to vector<8x32xbf16>
    %225 = tpu.concatenate %219, %220, %222, %224 in 1 : vector<8x32xbf16>, vector<8x32xbf16>, vector<8x32xbf16>, vector<8x32xbf16> -> vector<8x128xbf16>
    %226 = arith.truncf %218 : vector<8x256xf32> to vector<8x256xbf16>
    %cst_86 = arith.constant dense<0.000000e+00> : vector<128x256xf32>
    %227 = tpu.matmul %225, %226, %cst_86 {dimension_numbers = #tpu.dot_dimension_numbers<[0], [0], [1], [1], [0, 1, 1, 1], [], []>} : vector<8x128xbf16>, vector<8x256xbf16>, vector<128x256xf32> -> vector<128x256xf32>
    %228 = vector.extract_strided_slice %227 {offsets = [0, 0], sizes = [32, 128], strides = [1, 1]} : vector<128x256xf32> to vector<32x128xf32>
    %229 = vector.extract_strided_slice %227 {offsets = [0, 128], sizes = [32, 128], strides = [1, 1]} : vector<128x256xf32> to vector<32x128xf32>
    %230 = vector.extract_strided_slice %227 {offsets = [32, 0], sizes = [32, 128], strides = [1, 1]} : vector<128x256xf32> to vector<32x128xf32>
    %231 = vector.extract_strided_slice %227 {offsets = [32, 128], sizes = [32, 128], strides = [1, 1]} : vector<128x256xf32> to vector<32x128xf32>
    %232 = vector.extract_strided_slice %227 {offsets = [64, 0], sizes = [32, 128], strides = [1, 1]} : vector<128x256xf32> to vector<32x128xf32>
    %233 = vector.extract_strided_slice %227 {offsets = [96, 128], sizes = [32, 128], strides = [1, 1]} : vector<128x256xf32> to vector<32x128xf32>
    %cst_87 = arith.constant 0.000000e+00 : f32
    %234 = vector.broadcast %cst_87 : f32 to vector<1x128xf32>
    %235 = arith.cmpf ogt, %4, %234 : vector<1x128xf32>
    %cst_88 = arith.constant 0.000000e+00 : f32
    %236 = vector.broadcast %cst_88 : f32 to vector<1x128xf32>
    %237 = arith.cmpf ogt, %6, %236 : vector<1x128xf32>
    %c0_89 = arith.constant 0 : index
    %c0_90 = arith.constant 0 : index
    %238 = vector.load %arg16[%c0_89, %c0_90] : memref<32x128xf32, #tpu.memory_space<vmem>>, vector<32x128xf32>
    %239 = vector.shape_cast %235 : vector<1x128xi1> to vector<1x128xi1>
    %240 = vector.broadcast %239 : vector<1x128xi1> to vector<32x128xi1>
    %241 = arith.select %240, %228, %238 : vector<32x128xi1>, vector<32x128xf32>
    %c0_91 = arith.constant 0 : index
    %c0_92 = arith.constant 0 : index
    %242 = vector.load %arg16[%c0_91, %c0_92] : memref<32x128xf32, #tpu.memory_space<vmem>>, vector<32x128xf32>
    tpu.vector_store %arg16[%c0_91, %c0_92], %241 {strides = array<i32>} : memref<32x128xf32, #tpu.memory_space<vmem>>, vector<32x128xf32>,
    %c0_93 = arith.constant 0 : index
    %c0_94 = arith.constant 0 : index
    %243 = vector.load %arg17[%c0_93, %c0_94] : memref<32x128xf32, #tpu.memory_space<vmem>>, vector<32x128xf32>
    %244 = vector.shape_cast %235 : vector<1x128xi1> to vector<1x128xi1>
    %245 = vector.broadcast %244 : vector<1x128xi1> to vector<32x128xi1>
    %246 = arith.select %245, %230, %243 : vector<32x128xi1>, vector<32x128xf32>
    %c0_95 = arith.constant 0 : index
    %c0_96 = arith.constant 0 : index
    %247 = vector.load %arg17[%c0_95, %c0_96] : memref<32x128xf32, #tpu.memory_space<vmem>>, vector<32x128xf32>
    tpu.vector_store %arg17[%c0_95, %c0_96], %246 {strides = array<i32>} : memref<32x128xf32, #tpu.memory_space<vmem>>, vector<32x128xf32>,
    %c0_97 = arith.constant 0 : index
    %c0_98 = arith.constant 0 : index
    %248 = vector.load %arg18[%c0_97, %c0_98] : memref<32x128xf32, #tpu.memory_space<vmem>>, vector<32x128xf32>
    %249 = vector.shape_cast %237 : vector<1x128xi1> to vector<1x128xi1>
    %250 = vector.broadcast %249 : vector<1x128xi1> to vector<32x128xi1>
    %251 = arith.select %250, %229, %248 : vector<32x128xi1>, vector<32x128xf32>
    %c0_99 = arith.constant 0 : index
    %c0_100 = arith.constant 0 : index
    %252 = vector.load %arg18[%c0_99, %c0_100] : memref<32x128xf32, #tpu.memory_space<vmem>>, vector<32x128xf32>
    tpu.vector_store %arg18[%c0_99, %c0_100], %251 {strides = array<i32>} : memref<32x128xf32, #tpu.memory_space<vmem>>, vector<32x128xf32>,
    %c0_101 = arith.constant 0 : index
    %c0_102 = arith.constant 0 : index
    %253 = vector.load %arg19[%c0_101, %c0_102] : memref<32x128xf32, #tpu.memory_space<vmem>>, vector<32x128xf32>
    %254 = vector.shape_cast %237 : vector<1x128xi1> to vector<1x128xi1>
    %255 = vector.broadcast %254 : vector<1x128xi1> to vector<32x128xi1>
    %256 = arith.select %255, %231, %253 : vector<32x128xi1>, vector<32x128xf32>
    %c0_103 = arith.constant 0 : index
    %c0_104 = arith.constant 0 : index
    %257 = vector.load %arg19[%c0_103, %c0_104] : memref<32x128xf32, #tpu.memory_space<vmem>>, vector<32x128xf32>
    tpu.vector_store %arg19[%c0_103, %c0_104], %256 {strides = array<i32>} : memref<32x128xf32, #tpu.memory_space<vmem>>, vector<32x128xf32>,
    %c0_105 = arith.constant 0 : index
    %c0_106 = arith.constant 0 : index
    %258 = vector.load %arg20[%c0_105, %c0_106] : memref<32x128xf32, #tpu.memory_space<vmem>>, vector<32x128xf32>
    %259 = vector.shape_cast %235 : vector<1x128xi1> to vector<1x128xi1>
    %260 = vector.broadcast %259 : vector<1x128xi1> to vector<32x128xi1>
    %261 = arith.select %260, %232, %258 : vector<32x128xi1>, vector<32x128xf32>
    %c0_107 = arith.constant 0 : index
    %c0_108 = arith.constant 0 : index
    %262 = vector.load %arg20[%c0_107, %c0_108] : memref<32x128xf32, #tpu.memory_space<vmem>>, vector<32x128xf32>
    tpu.vector_store %arg20[%c0_107, %c0_108], %261 {strides = array<i32>} : memref<32x128xf32, #tpu.memory_space<vmem>>, vector<32x128xf32>,
    %c0_109 = arith.constant 0 : index
    %c0_110 = arith.constant 0 : index
    %263 = vector.load %arg21[%c0_109, %c0_110] : memref<32x128xf32, #tpu.memory_space<vmem>>, vector<32x128xf32>
    %264 = vector.shape_cast %235 : vector<1x128xi1> to vector<1x128xi1>
    %265 = vector.broadcast %264 : vector<1x128xi1> to vector<32x128xi1>
    %266 = arith.select %265, %232, %263 : vector<32x128xi1>, vector<32x128xf32>
    %c0_111 = arith.constant 0 : index
    %c0_112 = arith.constant 0 : index
    %267 = vector.load %arg21[%c0_111, %c0_112] : memref<32x128xf32, #tpu.memory_space<vmem>>, vector<32x128xf32>
    tpu.vector_store %arg21[%c0_111, %c0_112], %266 {strides = array<i32>} : memref<32x128xf32, #tpu.memory_space<vmem>>, vector<32x128xf32>,
    %c0_113 = arith.constant 0 : index
    %c0_114 = arith.constant 0 : index
    %268 = vector.load %arg22[%c0_113, %c0_114] : memref<32x128xf32, #tpu.memory_space<vmem>>, vector<32x128xf32>
    %269 = vector.shape_cast %237 : vector<1x128xi1> to vector<1x128xi1>
    %270 = vector.broadcast %269 : vector<1x128xi1> to vector<32x128xi1>
    %271 = arith.select %270, %233, %268 : vector<32x128xi1>, vector<32x128xf32>
    %c0_115 = arith.constant 0 : index
    %c0_116 = arith.constant 0 : index
    %272 = vector.load %arg22[%c0_115, %c0_116] : memref<32x128xf32, #tpu.memory_space<vmem>>, vector<32x128xf32>
    tpu.vector_store %arg22[%c0_115, %c0_116], %271 {strides = array<i32>} : memref<32x128xf32, #tpu.memory_space<vmem>>, vector<32x128xf32>,
    %c0_117 = arith.constant 0 : index
    %c0_118 = arith.constant 0 : index
    %273 = vector.load %arg23[%c0_117, %c0_118] : memref<32x128xf32, #tpu.memory_space<vmem>>, vector<32x128xf32>
    %274 = vector.shape_cast %237 : vector<1x128xi1> to vector<1x128xi1>
    %275 = vector.broadcast %274 : vector<1x128xi1> to vector<32x128xi1>
    %276 = arith.select %275, %233, %273 : vector<32x128xi1>, vector<32x128xf32>
    %c0_119 = arith.constant 0 : index
    %c0_120 = arith.constant 0 : index
    %277 = vector.load %arg23[%c0_119, %c0_120] : memref<32x128xf32, #tpu.memory_space<vmem>>, vector<32x128xf32>
    tpu.vector_store %arg23[%c0_119, %c0_120], %276 {strides = array<i32>} : memref<32x128xf32, #tpu.memory_space<vmem>>, vector<32x128xf32>,
    %cst_121 = arith.constant dense<0xFF800000> : vector<128xf32>
    %278 = vector.multi_reduction <maximumf>, %59, %cst_121 [0] : vector<8x128xf32> to vector<128xf32>
    %279 = vector.shape_cast %278 : vector<128xf32> to vector<1x128xf32>
    %280 = vector.broadcast %279 : vector<1x128xf32> to vector<8x128xf32>
    %281 = arith.cmpf oge, %59, %280 : vector<8x128xf32>
    %cst_122 = arith.constant 8.000000e+00 : f32
    %282 = vector.broadcast %cst_122 : f32 to vector<8x128xf32>
    %283 = arith.select %281, %32, %282 : vector<8x128xi1>, vector<8x128xf32>
    %cst_123 = arith.constant dense<0x7F800000> : vector<128xf32>
    %284 = vector.multi_reduction <minimumf>, %283, %cst_123 [0] : vector<8x128xf32> to vector<128xf32>
    %285 = vector.shape_cast %284 : vector<128xf32> to vector<1x128xf32>
    %286 = vector.broadcast %285 : vector<1x128xf32> to vector<8x128xf32>
    %287 = arith.cmpf oeq, %32, %286 : vector<8x128xf32>
    %288 = arith.extui %287 : vector<8x128xi1> to vector<8x128xi32>
    %289 = arith.sitofp %288 : vector<8x128xi32> to vector<8x128xf32>
    %cst_124 = arith.constant dense<0xFF800000> : vector<128xf32>
    %290 = vector.multi_reduction <maximumf>, %83, %cst_124 [0] : vector<8x128xf32> to vector<128xf32>
    %291 = vector.shape_cast %290 : vector<128xf32> to vector<1x128xf32>
    %292 = vector.broadcast %291 : vector<1x128xf32> to vector<8x128xf32>
    %293 = arith.cmpf oge, %83, %292 : vector<8x128xf32>
    %cst_125 = arith.constant 8.000000e+00 : f32
    %294 = vector.broadcast %cst_125 : f32 to vector<8x128xf32>
    %295 = arith.select %293, %32, %294 : vector<8x128xi1>, vector<8x128xf32>
    %cst_126 = arith.constant dense<0x7F800000> : vector<128xf32>
    %296 = vector.multi_reduction <minimumf>, %295, %cst_126 [0] : vector<8x128xf32> to vector<128xf32>
    %297 = vector.shape_cast %296 : vector<128xf32> to vector<1x128xf32>
    %298 = vector.broadcast %297 : vector<1x128xf32> to vector<8x128xf32>
    %299 = arith.cmpf oeq, %32, %298 : vector<8x128xf32>
    %300 = arith.extui %299 : vector<8x128xi1> to vector<8x128xi32>
    %301 = arith.sitofp %300 : vector<8x128xi32> to vector<8x128xf32>
    %cst_127 = arith.constant dense<0.000000e+00> : vector<8x128xf32>
    %302 = tpu.matmul %29, %14, %cst_127 {dimension_numbers = #tpu.dot_dimension_numbers<[1], [0], [0], [1], [0, 0, 1, 1], [], []>} : vector<8x32xbf16>, vector<32x128xbf16>, vector<8x128xf32> -> vector<8x128xf32>
    %cst_128 = arith.constant 0.000000e+00 : f32
    %303 = vector.broadcast %cst_128 : f32 to vector<1x128xf32>
    %304 = arith.cmpf ogt, %4, %303 : vector<1x128xf32>
    %cst_129 = arith.constant -1.000000e+30 : f32
    %305 = vector.shape_cast %304 : vector<1x128xi1> to vector<1x128xi1>
    %306 = vector.broadcast %305 : vector<1x128xi1> to vector<8x128xi1>
    %307 = vector.broadcast %cst_129 : f32 to vector<8x128xf32>
    %308 = arith.select %306, %302, %307 : vector<8x128xi1>, vector<8x128xf32>
    %cst_130 = arith.constant dense<0xFF800000> : vector<8xf32>
    %309 = vector.multi_reduction <maximumf>, %308, %cst_130 [1] : vector<8x128xf32> to vector<8xf32>
    %310 = vector.shape_cast %309 : vector<8xf32> to vector<8x1xf32>
    %cst_131 = arith.constant 0.000000e+00 : f32
    %311 = vector.broadcast %cst_131 : f32 to vector<1x128xf32>
    %312 = arith.cmpf ogt, %4, %311 : vector<1x128xf32>
    %313 = vector.broadcast %310 : vector<8x1xf32> to vector<8x128xf32>
    %314 = arith.subf %308, %313 : vector<8x128xf32>
    %315 = math.exp %314 : vector<8x128xf32>
    %cst_132 = arith.constant 0.000000e+00 : f32
    %316 = vector.shape_cast %312 : vector<1x128xi1> to vector<1x128xi1>
    %317 = vector.broadcast %316 : vector<1x128xi1> to vector<8x128xi1>
    %318 = vector.broadcast %cst_132 : f32 to vector<8x128xf32>
    %319 = arith.select %317, %315, %318 : vector<8x128xi1>, vector<8x128xf32>
    %cst_133 = arith.constant dense<0.000000e+00> : vector<8xf32>
    %320 = vector.multi_reduction <add>, %319, %cst_133 [1] : vector<8x128xf32> to vector<8xf32>
    %321 = vector.shape_cast %320 : vector<8xf32> to vector<8x1xf32>
    %cst_134 = arith.constant 1.000000e-30 : f32
    %322 = vector.broadcast %cst_134 : f32 to vector<8x1xf32>
    %323 = arith.maximumf %321, %322 : vector<8x1xf32>
    %324 = tpu.reciprocal %323 {approx = true} : vector<8x1xf32> -> vector<8x1xf32>
    %325 = vector.broadcast %324 : vector<8x1xf32> to vector<8x128xf32>
    %326 = arith.mulf %319, %325 : vector<8x128xf32>
    %cst_135 = arith.constant dense<0.000000e+00> : vector<8x128xf32>
    %327 = tpu.matmul %30, %20, %cst_135 {dimension_numbers = #tpu.dot_dimension_numbers<[1], [0], [0], [1], [0, 0, 1, 1], [], []>} : vector<8x32xbf16>, vector<32x128xbf16>, vector<8x128xf32> -> vector<8x128xf32>
    %cst_136 = arith.constant 0.000000e+00 : f32
    %328 = vector.broadcast %cst_136 : f32 to vector<1x128xf32>
    %329 = arith.cmpf ogt, %6, %328 : vector<1x128xf32>
    %cst_137 = arith.constant -1.000000e+30 : f32
    %330 = vector.shape_cast %329 : vector<1x128xi1> to vector<1x128xi1>
    %331 = vector.broadcast %330 : vector<1x128xi1> to vector<8x128xi1>
    %332 = vector.broadcast %cst_137 : f32 to vector<8x128xf32>
    %333 = arith.select %331, %327, %332 : vector<8x128xi1>, vector<8x128xf32>
    %cst_138 = arith.constant dense<0xFF800000> : vector<8xf32>
    %334 = vector.multi_reduction <maximumf>, %333, %cst_138 [1] : vector<8x128xf32> to vector<8xf32>
    %335 = vector.shape_cast %334 : vector<8xf32> to vector<8x1xf32>
    %cst_139 = arith.constant 0.000000e+00 : f32
    %336 = vector.broadcast %cst_139 : f32 to vector<1x128xf32>
    %337 = arith.cmpf ogt, %6, %336 : vector<1x128xf32>
    %338 = vector.broadcast %335 : vector<8x1xf32> to vector<8x128xf32>
    %339 = arith.subf %333, %338 : vector<8x128xf32>
    %340 = math.exp %339 : vector<8x128xf32>
    %cst_140 = arith.constant 0.000000e+00 : f32
    %341 = vector.shape_cast %337 : vector<1x128xi1> to vector<1x128xi1>
    %342 = vector.broadcast %341 : vector<1x128xi1> to vector<8x128xi1>
    %343 = vector.broadcast %cst_140 : f32 to vector<8x128xf32>
    %344 = arith.select %342, %340, %343 : vector<8x128xi1>, vector<8x128xf32>
    %cst_141 = arith.constant dense<0.000000e+00> : vector<8xf32>
    %345 = vector.multi_reduction <add>, %344, %cst_141 [1] : vector<8x128xf32> to vector<8xf32>
    %346 = vector.shape_cast %345 : vector<8xf32> to vector<8x1xf32>
    %cst_142 = arith.constant 1.000000e-30 : f32
    %347 = vector.broadcast %cst_142 : f32 to vector<8x1xf32>
    %348 = arith.maximumf %346, %347 : vector<8x1xf32>
    %349 = tpu.reciprocal %348 {approx = true} : vector<8x1xf32> -> vector<8x1xf32>
    %350 = vector.broadcast %349 : vector<8x1xf32> to vector<8x128xf32>
    %351 = arith.mulf %344, %350 : vector<8x128xf32>
    %cst_143 = arith.constant dense<0.000000e+00> : vector<1xf32>
    %352 = vector.multi_reduction <add>, %4, %cst_143 [1] : vector<1x128xf32> to vector<1xf32>
    %353 = vector.shape_cast %352 : vector<1xf32> to vector<1x1xf32>
    %cst_144 = arith.constant 1.000000e+00 : f32
    %354 = vector.broadcast %cst_144 : f32 to vector<1x1xf32>
    %355 = arith.maximumf %353, %354 : vector<1x1xf32>
    %cst_145 = arith.constant dense<0.000000e+00> : vector<1xf32>
    %356 = vector.multi_reduction <add>, %6, %cst_145 [1] : vector<1x128xf32> to vector<1xf32>
    %357 = vector.shape_cast %356 : vector<1xf32> to vector<1x1xf32>
    %cst_146 = arith.constant 1.000000e+00 : f32
    %358 = vector.broadcast %cst_146 : f32 to vector<1x1xf32>
    %359 = arith.maximumf %357, %358 : vector<1x1xf32>
    %c0_147 = arith.constant 0 : index
    %c0_148 = arith.constant 0 : index
    %360 = vector.load %arg26[%c0_147, %c0_148] : memref<1x1xf32, #tpu.memory_space<vmem>>, vector<1x1xf32>
    %361 = arith.mulf %59, %289 : vector<8x128xf32>
    %cst_149 = arith.constant dense<0.000000e+00> : vector<128xf32>
    %362 = vector.multi_reduction <add>, %361, %cst_149 [0] : vector<8x128xf32> to vector<128xf32>
    %363 = vector.shape_cast %362 : vector<128xf32> to vector<1x128xf32>
    %364 = arith.mulf %363, %4 : vector<1x128xf32>
    %cst_150 = arith.constant dense<0.000000e+00> : vector<1xf32>
    %365 = vector.multi_reduction <add>, %364, %cst_150 [1] : vector<1x128xf32> to vector<1xf32>
    %366 = vector.shape_cast %365 : vector<1xf32> to vector<1x1xf32>
    %cst_151 = arith.constant 0.000000e+00 : f32
    %367 = vector.broadcast %cst_151 : f32 to vector<1x1xf32>
    %368 = arith.subf %367, %366 : vector<1x1xf32>
    %369 = arith.divf %368, %355 : vector<1x1xf32>
    %370 = math.exp %369 : vector<1x1xf32>
    %cst_152 = arith.constant 1.000000e-01 : f32
    %371 = vector.broadcast %cst_152 : f32 to vector<1x1xf32>
    %372 = arith.mulf %371, %370 : vector<1x1xf32>
    %373 = arith.mulf %83, %301 : vector<8x128xf32>
    %cst_153 = arith.constant dense<0.000000e+00> : vector<128xf32>
    %374 = vector.multi_reduction <add>, %373, %cst_153 [0] : vector<8x128xf32> to vector<128xf32>
    %375 = vector.shape_cast %374 : vector<128xf32> to vector<1x128xf32>
    %376 = arith.mulf %375, %6 : vector<1x128xf32>
    %cst_154 = arith.constant dense<0.000000e+00> : vector<1xf32>
    %377 = vector.multi_reduction <add>, %376, %cst_154 [1] : vector<1x128xf32> to vector<1xf32>
    %378 = vector.shape_cast %377 : vector<1xf32> to vector<1x1xf32>
    %cst_155 = arith.constant 0.000000e+00 : f32
    %379 = vector.broadcast %cst_155 : f32 to vector<1x1xf32>
    %380 = arith.subf %379, %378 : vector<1x1xf32>
    %381 = arith.divf %380, %359 : vector<1x1xf32>
    %382 = math.exp %381 : vector<1x1xf32>
    %cst_156 = arith.constant 1.000000e-01 : f32
    %383 = vector.broadcast %cst_156 : f32 to vector<1x1xf32>
    %384 = arith.mulf %383, %382 : vector<1x1xf32>
    %385 = arith.addf %372, %384 : vector<1x1xf32>
    %386 = arith.addf %360, %385 : vector<1x1xf32>
    %c0_157 = arith.constant 0 : index
    %c0_158 = arith.constant 0 : index
    %387 = vector.load %arg26[%c0_157, %c0_158] : memref<1x1xf32, #tpu.memory_space<vmem>>, vector<1x1xf32>
    tpu.vector_store %arg26[%c0_157, %c0_158], %386 {strides = array<i32>} : memref<1x1xf32, #tpu.memory_space<vmem>>, vector<1x1xf32>,
    %c0_159 = arith.constant 0 : index
    %c0_160 = arith.constant 0 : index
    %388 = vector.load %arg27[%c0_159, %c0_160] : memref<1x1xf32, #tpu.memory_space<vmem>>, vector<1x1xf32>
    %389 = arith.mulf %326, %289 : vector<8x128xf32>
    %cst_161 = arith.constant dense<0.000000e+00> : vector<128xf32>
    %390 = vector.multi_reduction <add>, %389, %cst_161 [0] : vector<8x128xf32> to vector<128xf32>
    %391 = vector.shape_cast %390 : vector<128xf32> to vector<1x128xf32>
    %392 = arith.mulf %391, %4 : vector<1x128xf32>
    %cst_162 = arith.constant dense<0.000000e+00> : vector<1xf32>
    %393 = vector.multi_reduction <add>, %392, %cst_162 [1] : vector<1x128xf32> to vector<1xf32>
    %394 = vector.shape_cast %393 : vector<1xf32> to vector<1x1xf32>
    %cst_163 = arith.constant 0.000000e+00 : f32
    %395 = vector.broadcast %cst_163 : f32 to vector<1x1xf32>
    %396 = arith.subf %395, %394 : vector<1x1xf32>
    %397 = arith.divf %396, %355 : vector<1x1xf32>
    %398 = math.exp %397 : vector<1x1xf32>
    %cst_164 = arith.constant 1.000000e-01 : f32
    %399 = vector.broadcast %cst_164 : f32 to vector<1x1xf32>
    %400 = arith.mulf %399, %398 : vector<1x1xf32>
    %401 = arith.mulf %351, %301 : vector<8x128xf32>
    %cst_165 = arith.constant dense<0.000000e+00> : vector<128xf32>
    %402 = vector.multi_reduction <add>, %401, %cst_165 [0] : vector<8x128xf32> to vector<128xf32>
    %403 = vector.shape_cast %402 : vector<128xf32> to vector<1x128xf32>
    %404 = arith.mulf %403, %6 : vector<1x128xf32>
    %cst_166 = arith.constant dense<0.000000e+00> : vector<1xf32>
    %405 = vector.multi_reduction <add>, %404, %cst_166 [1] : vector<1x128xf32> to vector<1xf32>
    %406 = vector.shape_cast %405 : vector<1xf32> to vector<1x1xf32>
    %cst_167 = arith.constant 0.000000e+00 : f32
    %407 = vector.broadcast %cst_167 : f32 to vector<1x1xf32>
    %408 = arith.subf %407, %406 : vector<1x1xf32>
    %409 = arith.divf %408, %359 : vector<1x1xf32>
    %410 = math.exp %409 : vector<1x1xf32>
    %cst_168 = arith.constant 1.000000e-01 : f32
    %411 = vector.broadcast %cst_168 : f32 to vector<1x1xf32>
    %412 = arith.mulf %411, %410 : vector<1x1xf32>
    %413 = arith.addf %400, %412 : vector<1x1xf32>
    %414 = arith.addf %388, %413 : vector<1x1xf32>
    %c0_169 = arith.constant 0 : index
    %c0_170 = arith.constant 0 : index
    %415 = vector.load %arg27[%c0_169, %c0_170] : memref<1x1xf32, #tpu.memory_space<vmem>>, vector<1x1xf32>
    tpu.vector_store %arg27[%c0_169, %c0_170], %414 {strides = array<i32>} : memref<1x1xf32, #tpu.memory_space<vmem>>, vector<1x1xf32>,
    %c8_i32 = arith.constant 8 : i32
    %416 = arith.muli %arg0, %c8_i32 : i32
    %417 = arith.sitofp %416 : i32 to f32
    %418 = vector.broadcast %417 : f32 to vector<1x128xf32>
    %419 = arith.addf %285, %418 : vector<1x128xf32>
    %c0_171 = arith.constant 0 : index
    %c0_172 = arith.constant 0 : index
    %420 = vector.load %arg24[%c0_171, %c0_172] : memref<1x128xf32, #tpu.memory_space<vmem>>, vector<1x128xf32>
    %421 = arith.select %235, %419, %420 : vector<1x128xi1>, vector<1x128xf32>
    %c0_173 = arith.constant 0 : index
    %c0_174 = arith.constant 0 : index
    %422 = vector.load %arg24[%c0_173, %c0_174] : memref<1x128xf32, #tpu.memory_space<vmem>>, vector<1x128xf32>
    tpu.vector_store %arg24[%c0_173, %c0_174], %421 {strides = array<i32>} : memref<1x128xf32, #tpu.memory_space<vmem>>, vector<1x128xf32>,
    %423 = vector.broadcast %417 : f32 to vector<1x128xf32>
    %424 = arith.addf %297, %423 : vector<1x128xf32>
    %c0_175 = arith.constant 0 : index
    %c0_176 = arith.constant 0 : index
    %425 = vector.load %arg25[%c0_175, %c0_176] : memref<1x128xf32, #tpu.memory_space<vmem>>, vector<1x128xf32>
    %426 = arith.select %237, %424, %425 : vector<1x128xi1>, vector<1x128xf32>
    %c0_177 = arith.constant 0 : index
    %c0_178 = arith.constant 0 : index
    %427 = vector.load %arg25[%c0_177, %c0_178] : memref<1x128xf32, #tpu.memory_space<vmem>>, vector<1x128xf32>
    tpu.vector_store %arg25[%c0_177, %c0_178], %426 {strides = array<i32>} : memref<1x128xf32, #tpu.memory_space<vmem>>, vector<1x128xf32>,
    %c1_i32 = arith.constant 1 : i32
    %428 = arith.cmpi eq, %arg0, %c1_i32 : i32
    %429 = arith.extui %428 : i1 to i32
    %c0_i32_179 = arith.constant 0 : i32
    %430 = arith.cmpi ne, %429, %c0_i32_179 : i32
    scf.if %430 {
      %c0_180 = arith.constant 0 : index
      %c0_181 = arith.constant 0 : index
      %431 = vector.load %arg12[%c0_180, %c0_181] : memref<16x32xbf16, #tpu.memory_space<vmem>>, vector<16x32xbf16>
      %432 = tpu.iota {dimensions = array<i32: 0>} : vector<16x128xi32>
      %433 = arith.sitofp %432 : vector<16x128xi32> to vector<16x128xf32>
      %c0_182 = arith.constant 0 : index
      %c0_183 = arith.constant 0 : index
      %434 = vector.load %arg1[%c0_182, %c0_183] : memref<32x128xbf16, #tpu.memory_space<vmem>>, vector<32x128xbf16>
      %c0_184 = arith.constant 0 : index
      %c0_185 = arith.constant 0 : index
      %435 = vector.load %arg3[%c0_184, %c0_185] : memref<32x128xbf16, #tpu.memory_space<vmem>>, vector<32x128xbf16>
      %436 = tpu.concatenate %434, %435 in 1 : vector<32x128xbf16>, vector<32x128xbf16> -> vector<32x256xbf16>
      %cst_186 = arith.constant dense<0.000000e+00> : vector<16x256xf32>
      %437 = tpu.matmul %431, %436, %cst_186 {dimension_numbers = #tpu.dot_dimension_numbers<[1], [0], [0], [1], [0, 0, 1, 1], [], []>} : vector<16x32xbf16>, vector<32x256xbf16>, vector<16x256xf32> -> vector<16x256xf32>
      %c0_187 = arith.constant 0 : index
      %c0_188 = arith.constant 0 : index
      %438 = vector.load %arg26[%c0_187, %c0_188] : memref<1x1xf32, #tpu.memory_space<vmem>>, vector<1x1xf32>
      %439 = vector.extract_strided_slice %437 {offsets = [0, 0], sizes = [16, 128], strides = [1, 1]} : vector<16x256xf32> to vector<16x128xf32>
      %c0_189 = arith.constant 0 : index
      %c0_190 = arith.constant 0 : index
      %440 = vector.load %arg24[%c0_189, %c0_190] : memref<1x128xf32, #tpu.memory_space<vmem>>, vector<1x128xf32>
      %cst_191 = arith.constant dense<0xFF800000> : vector<16xf32>
      %441 = vector.multi_reduction <maximumf>, %439, %cst_191 [1] : vector<16x128xf32> to vector<16xf32>
      %442 = vector.shape_cast %441 : vector<16xf32> to vector<16x1xf32>
      %443 = vector.broadcast %442 : vector<16x1xf32> to vector<16x128xf32>
      %444 = arith.subf %439, %443 : vector<16x128xf32>
      %445 = math.exp %444 : vector<16x128xf32>
      %cst_192 = arith.constant dense<0.000000e+00> : vector<16xf32>
      %446 = vector.multi_reduction <add>, %445, %cst_192 [1] : vector<16x128xf32> to vector<16xf32>
      %447 = vector.shape_cast %446 : vector<16xf32> to vector<16x1xf32>
      %448 = tpu.reciprocal %447 {approx = true} : vector<16x1xf32> -> vector<16x1xf32>
      %449 = vector.broadcast %448 : vector<16x1xf32> to vector<16x128xf32>
      %450 = arith.mulf %445, %449 : vector<16x128xf32>
      %451 = vector.broadcast %440 : vector<1x128xf32> to vector<16x128xf32>
      %452 = arith.cmpf oeq, %433, %451 : vector<16x128xf32>
      %453 = arith.extui %452 : vector<16x128xi1> to vector<16x128xi32>
      %454 = arith.sitofp %453 : vector<16x128xi32> to vector<16x128xf32>
      %455 = arith.mulf %450, %454 : vector<16x128xf32>
      %cst_193 = arith.constant dense<0.000000e+00> : vector<128xf32>
      %456 = vector.multi_reduction <add>, %455, %cst_193 [0] : vector<16x128xf32> to vector<128xf32>
      %457 = vector.shape_cast %456 : vector<128xf32> to vector<1x128xf32>
      %cst_194 = arith.constant dense<0.000000e+00> : vector<1xf32>
      %458 = vector.multi_reduction <add>, %457, %cst_194 [1] : vector<1x128xf32> to vector<1xf32>
      %459 = vector.shape_cast %458 : vector<1xf32> to vector<1x1xf32>
      %cst_195 = arith.constant 0.000000e+00 : f32
      %460 = vector.broadcast %cst_195 : f32 to vector<1x1xf32>
      %461 = arith.subf %460, %459 : vector<1x1xf32>
      %cst_196 = arith.constant 1.280000e+02 : f32
      %462 = vector.broadcast %cst_196 : f32 to vector<1x1xf32>
      %463 = arith.divf %461, %462 : vector<1x1xf32>
      %464 = math.exp %463 : vector<1x1xf32>
      %cst_197 = arith.constant 1.000000e-01 : f32
      %465 = vector.broadcast %cst_197 : f32 to vector<1x1xf32>
      %466 = arith.mulf %465, %464 : vector<1x1xf32>
      %467 = vector.extract_strided_slice %437 {offsets = [0, 128], sizes = [16, 128], strides = [1, 1]} : vector<16x256xf32> to vector<16x128xf32>
      %c0_198 = arith.constant 0 : index
      %c0_199 = arith.constant 0 : index
      %468 = vector.load %arg25[%c0_198, %c0_199] : memref<1x128xf32, #tpu.memory_space<vmem>>, vector<1x128xf32>
      %cst_200 = arith.constant dense<0xFF800000> : vector<16xf32>
      %469 = vector.multi_reduction <maximumf>, %467, %cst_200 [1] : vector<16x128xf32> to vector<16xf32>
      %470 = vector.shape_cast %469 : vector<16xf32> to vector<16x1xf32>
      %471 = vector.broadcast %470 : vector<16x1xf32> to vector<16x128xf32>
      %472 = arith.subf %467, %471 : vector<16x128xf32>
      %473 = math.exp %472 : vector<16x128xf32>
      %cst_201 = arith.constant dense<0.000000e+00> : vector<16xf32>
      %474 = vector.multi_reduction <add>, %473, %cst_201 [1] : vector<16x128xf32> to vector<16xf32>
      %475 = vector.shape_cast %474 : vector<16xf32> to vector<16x1xf32>
      %476 = tpu.reciprocal %475 {approx = true} : vector<16x1xf32> -> vector<16x1xf32>
      %477 = vector.broadcast %476 : vector<16x1xf32> to vector<16x128xf32>
      %478 = arith.mulf %473, %477 : vector<16x128xf32>
      %479 = vector.broadcast %468 : vector<1x128xf32> to vector<16x128xf32>
      %480 = arith.cmpf oeq, %433, %479 : vector<16x128xf32>
      %481 = arith.extui %480 : vector<16x128xi1> to vector<16x128xi32>
      %482 = arith.sitofp %481 : vector<16x128xi32> to vector<16x128xf32>
      %483 = arith.mulf %478, %482 : vector<16x128xf32>
      %cst_202 = arith.constant dense<0.000000e+00> : vector<128xf32>
      %484 = vector.multi_reduction <add>, %483, %cst_202 [0] : vector<16x128xf32> to vector<128xf32>
      %485 = vector.shape_cast %484 : vector<128xf32> to vector<1x128xf32>
      %cst_203 = arith.constant dense<0.000000e+00> : vector<1xf32>
      %486 = vector.multi_reduction <add>, %485, %cst_203 [1] : vector<1x128xf32> to vector<1xf32>
      %487 = vector.shape_cast %486 : vector<1xf32> to vector<1x1xf32>
      %cst_204 = arith.constant 0.000000e+00 : f32
      %488 = vector.broadcast %cst_204 : f32 to vector<1x1xf32>
      %489 = arith.subf %488, %487 : vector<1x1xf32>
      %cst_205 = arith.constant 1.280000e+02 : f32
      %490 = vector.broadcast %cst_205 : f32 to vector<1x1xf32>
      %491 = arith.divf %489, %490 : vector<1x1xf32>
      %492 = math.exp %491 : vector<1x1xf32>
      %cst_206 = arith.constant 1.000000e-01 : f32
      %493 = vector.broadcast %cst_206 : f32 to vector<1x1xf32>
      %494 = arith.mulf %493, %492 : vector<1x1xf32>
      %495 = arith.addf %466, %494 : vector<1x1xf32>
      %496 = arith.addf %438, %495 : vector<1x1xf32>
      %c0_207 = arith.constant 0 : index
      %c0_208 = arith.constant 0 : index
      %497 = vector.load %arg26[%c0_207, %c0_208] : memref<1x1xf32, #tpu.memory_space<vmem>>, vector<1x1xf32>
      tpu.vector_store %arg26[%c0_207, %c0_208], %496 {strides = array<i32>} : memref<1x1xf32, #tpu.memory_space<vmem>>, vector<1x1xf32>,
    } else {
    }
    return
  }
  func.func @transform_0(%arg0: i32) -> (i32, i32) {
    %c0_i32 = arith.constant 0 : i32
    %c0_i32_0 = arith.constant 0 : i32
    %c0_i32_1 = arith.constant 0 : i32
    return %c0_i32, %c0_i32_0 : i32, i32
  }
  func.func @transform_1(%arg0: i32) -> (i32, i32) {
    %c0_i32 = arith.constant 0 : i32
    %c0_i32_0 = arith.constant 0 : i32
    %c0_i32_1 = arith.constant 0 : i32
    return %c0_i32, %c0_i32_0 : i32, i32
  }
  func.func @transform_2(%arg0: i32) -> (i32, i32) {
    %c0_i32 = arith.constant 0 : i32
    %c0_i32_0 = arith.constant 0 : i32
    %c0_i32_1 = arith.constant 0 : i32
    return %c0_i32, %c0_i32_0 : i32, i32
  }
  func.func @transform_3(%arg0: i32) -> (i32, i32) {
    %c0_i32 = arith.constant 0 : i32
    %c0_i32_0 = arith.constant 0 : i32
    %c0_i32_1 = arith.constant 0 : i32
    return %c0_i32, %c0_i32_0 : i32, i32
  }
  func.func @transform_4(%arg0: i32) -> (i32, i32, i32) {
    %c0_i32 = arith.constant 0 : i32
    %c0_i32_0 = arith.constant 0 : i32
    %c0_i32_1 = arith.constant 0 : i32
    return %arg0, %c0_i32, %c0_i32_0 : i32, i32, i32
  }
  func.func @transform_5(%arg0: i32) -> (i32, i32, i32) {
    %c0_i32 = arith.constant 0 : i32
    %c0_i32_0 = arith.constant 0 : i32
    %c0_i32_1 = arith.constant 0 : i32
    return %arg0, %c0_i32, %c0_i32_0 : i32, i32, i32
  }
  func.func @transform_6(%arg0: i32) -> (i32, i32, i32) {
    %c0_i32 = arith.constant 0 : i32
    %c0_i32_0 = arith.constant 0 : i32
    %c0_i32_1 = arith.constant 0 : i32
    return %arg0, %c0_i32, %c0_i32_0 : i32, i32, i32
  }
  func.func @transform_7(%arg0: i32) -> (i32, i32, i32) {
    %c0_i32 = arith.constant 0 : i32
    %c0_i32_0 = arith.constant 0 : i32
    %c0_i32_1 = arith.constant 0 : i32
    return %arg0, %c0_i32, %c0_i32_0 : i32, i32, i32
  }
  func.func @transform_8(%arg0: i32) -> (i32, i32, i32) {
    %c0_i32 = arith.constant 0 : i32
    %c0_i32_0 = arith.constant 0 : i32
    %c0_i32_1 = arith.constant 0 : i32
    return %arg0, %c0_i32, %c0_i32_0 : i32, i32, i32
  }
  func.func @transform_9(%arg0: i32) -> (i32, i32, i32) {
    %c0_i32 = arith.constant 0 : i32
    %c0_i32_0 = arith.constant 0 : i32
    %c0_i32_1 = arith.constant 0 : i32
    return %arg0, %c0_i32, %c0_i32_0 : i32, i32, i32
  }
  func.func @transform_10(%arg0: i32) -> (i32, i32, i32) {
    %c0_i32 = arith.constant 0 : i32
    %c0_i32_0 = arith.constant 0 : i32
    %c0_i32_1 = arith.constant 0 : i32
    return %arg0, %c0_i32, %c0_i32_0 : i32, i32, i32
  }
  func.func @transform_11(%arg0: i32) -> (i32, i32) {
    %c0_i32 = arith.constant 0 : i32
    %c0_i32_0 = arith.constant 0 : i32
    %c0_i32_1 = arith.constant 0 : i32
    return %c0_i32, %c0_i32_0 : i32, i32
  }
  func.func @transform_12(%arg0: i32) -> (i32, i32, i32) {
    %c0_i32 = arith.constant 0 : i32
    %c0_i32_0 = arith.constant 0 : i32
    %c0_i32_1 = arith.constant 0 : i32
    return %arg0, %c0_i32, %c0_i32_0 : i32, i32, i32
  }
  func.func @transform_13(%arg0: i32) -> (i32, i32, i32) {
    %c0_i32 = arith.constant 0 : i32
    %c0_i32_0 = arith.constant 0 : i32
    %c0_i32_1 = arith.constant 0 : i32
    return %arg0, %c0_i32, %c0_i32_0 : i32, i32, i32
  }
  func.func @transform_14(%arg0: i32) -> (i32, i32, i32) {
    %c0_i32 = arith.constant 0 : i32
    %c0_i32_0 = arith.constant 0 : i32
    %c0_i32_1 = arith.constant 0 : i32
    return %arg0, %c0_i32, %c0_i32_0 : i32, i32, i32
  }
  func.func @transform_15(%arg0: i32) -> (i32, i32) {
    %c0_i32 = arith.constant 0 : i32
    %c0_i32_0 = arith.constant 0 : i32
    %c0_i32_1 = arith.constant 0 : i32
    return %c0_i32, %c0_i32_0 : i32, i32
  }
  func.func @transform_16(%arg0: i32) -> (i32, i32) {
    %c0_i32 = arith.constant 0 : i32
    %c0_i32_0 = arith.constant 0 : i32
    %c0_i32_1 = arith.constant 0 : i32
    return %c0_i32, %c0_i32_0 : i32, i32
  }
  func.func @transform_17(%arg0: i32) -> (i32, i32) {
    %c0_i32 = arith.constant 0 : i32
    %c0_i32_0 = arith.constant 0 : i32
    %c0_i32_1 = arith.constant 0 : i32
    return %c0_i32, %c0_i32_0 : i32, i32
  }
  func.func @transform_18(%arg0: i32) -> (i32, i32) {
    %c0_i32 = arith.constant 0 : i32
    %c0_i32_0 = arith.constant 0 : i32
    %c0_i32_1 = arith.constant 0 : i32
    return %c0_i32, %c0_i32_0 : i32, i32
  }
  func.func @transform_19(%arg0: i32) -> (i32, i32) {
    %c0_i32 = arith.constant 0 : i32
    %c0_i32_0 = arith.constant 0 : i32
    %c0_i32_1 = arith.constant 0 : i32
    return %c0_i32, %c0_i32_0 : i32, i32
  }
  func.func @transform_20(%arg0: i32) -> (i32, i32) {
    %c0_i32 = arith.constant 0 : i32
    %c0_i32_0 = arith.constant 0 : i32
    %c0_i32_1 = arith.constant 0 : i32
    return %c0_i32, %c0_i32_0 : i32, i32
  }
  func.func @transform_21(%arg0: i32) -> (i32, i32) {
    %c0_i32 = arith.constant 0 : i32
    %c0_i32_0 = arith.constant 0 : i32
    %c0_i32_1 = arith.constant 0 : i32
    return %c0_i32, %c0_i32_0 : i32, i32
  }
  func.func @transform_22(%arg0: i32) -> (i32, i32) {
    %c0_i32 = arith.constant 0 : i32
    %c0_i32_0 = arith.constant 0 : i32
    %c0_i32_1 = arith.constant 0 : i32
    return %c0_i32, %c0_i32_0 : i32, i32
  }
  func.func @transform_23(%arg0: i32) -> (i32, i32) {
    %c0_i32 = arith.constant 0 : i32
    %c0_i32_0 = arith.constant 0 : i32
    %c0_i32_1 = arith.constant 0 : i32
    return %c0_i32, %c0_i32_0 : i32, i32
  }
  func.func @transform_24(%arg0: i32) -> (i32, i32) {
    %c0_i32 = arith.constant 0 : i32
    %c0_i32_0 = arith.constant 0 : i32
    %c0_i32_1 = arith.constant 0 : i32
    return %c0_i32, %c0_i32_0 : i32, i32
  }
  func.func @transform_25(%arg0: i32) -> (i32, i32) {
    %c0_i32 = arith.constant 0 : i32
    %c0_i32_0 = arith.constant 0 : i32
    %c0_i32_1 = arith.constant 0 : i32
    return %c0_i32, %c0_i32_0 : i32, i32
  }
  func.func @transform_26(%arg0: i32) -> (i32, i32) {
    %c0_i32 = arith.constant 0 : i32
    %c0_i32_0 = arith.constant 0 : i32
    %c0_i32_1 = arith.constant 0 : i32
    return %c0_i32, %c0_i32_0 : i32, i32
  }
}

</mosaic_0001>

<llo_original>
// kernel: memory_forward.1
$region0: #{memory_forward.1}
  #allocation0 [shape = 'u32[]', space=smem, size = 0x4, offset = 0x4, fixed_abs, tag = 'smem constant byte address 0x4 - core index']
  #allocation1 [shape = 'u32[144,128]{1,0:T(1,128)}', space=vmem, size = 0x12000, scoped, tag = 'internal scratch']
  %s0 = inlined_call_operand.vmem [shape: bf16[32,128], index: 0, kind: input, shape index: {}]
  %s1 = inlined_call_operand.vmem [shape: bf16[32,128], index: 1, kind: input, shape index: {}]
  %s2 = inlined_call_operand.vmem [shape: bf16[32,128], index: 2, kind: input, shape index: {}]
  %s3 = inlined_call_operand.vmem [shape: bf16[32,128], index: 3, kind: input, shape index: {}]
  %s4 = inlined_call_operand.vmem [shape: f32[2,1,128], index: 4, kind: input, shape index: {}]
  %s5 = inlined_call_operand.vmem [shape: f32[2,1,128], index: 5, kind: input, shape index: {}]
  %s6 = inlined_call_operand.vmem [shape: f32[2,8,32], index: 6, kind: input, shape index: {}]
  %s7 = inlined_call_operand.vmem [shape: f32[2,8,32], index: 7, kind: input, shape index: {}]
  %s8 = inlined_call_operand.vmem [shape: f32[2,8,32], index: 8, kind: input, shape index: {}]
  %s9 = inlined_call_operand.vmem [shape: bf16[2,8,32], index: 9, kind: input, shape index: {}]
  %s10 = inlined_call_operand.vmem [shape: bf16[2,8,32], index: 10, kind: input, shape index: {}]
  %s11 = inlined_call_operand.vmem [shape: bf16[16,32], index: 11, kind: input, shape index: {}]
  %s12 = inlined_call_operand.vmem [shape: f32[2,8,32], index: 12, kind: output, shape index: {0}]
  %s13 = inlined_call_operand.vmem [shape: f32[2,8,32], index: 13, kind: output, shape index: {1}]
  %s14 = inlined_call_operand.vmem [shape: f32[2,8,32], index: 14, kind: output, shape index: {2}]
  %s15 = inlined_call_operand.vmem [shape: f32[32,128], index: 15, kind: output, shape index: {3}]
  %s16 = inlined_call_operand.vmem [shape: f32[32,128], index: 16, kind: output, shape index: {4}]
  %s17 = inlined_call_operand.vmem [shape: f32[32,128], index: 17, kind: output, shape index: {5}]
  %s18 = inlined_call_operand.vmem [shape: f32[32,128], index: 18, kind: output, shape index: {6}]
  %s19 = inlined_call_operand.vmem [shape: f32[32,128], index: 19, kind: output, shape index: {7}]
  %s20 = inlined_call_operand.vmem [shape: f32[32,128], index: 20, kind: output, shape index: {8}]
  %s21 = inlined_call_operand.vmem [shape: f32[32,128], index: 21, kind: output, shape index: {9}]
  %s22 = inlined_call_operand.vmem [shape: f32[32,128], index: 22, kind: output, shape index: {10}]
  %s23 = inlined_call_operand.hbm [shape: f32[1,128], index: 23, kind: output, shape index: {11}]
  %s24 = inlined_call_operand.hbm [shape: f32[1,128], index: 24, kind: output, shape index: {12}]
  %s25 = inlined_call_operand.hbm [shape: f32[1,1], index: 25, kind: output, shape index: {13}]
  %s26 = inlined_call_operand.hbm [shape: f32[1,1], index: 26, kind: output, shape index: {14}]
  %27 = xla_tuple %s12, %s13, %s14, %s15, %s16, %s17, %s18, %s19, %s20, %s21, %s22, %s23, %s24, %s25, %s26
  %s28 = sld [smem:[#allocation0]]
  $region201: #{memory_forward.1} parent=0
    _
  %s30 = ssub.s32 1, %s28
  %s31 = scalar_select 0, %s30, %s28
  $region1: #{memory_forward.1} parent=0
    #allocation2 [shape = 'u8[512]{0}', space=vmem, size = 0x400, scoped, tag = 'output window, operand 11, single buffered']
    #allocation3 [shape = 's32[2]{0}', space=sflag, size = 0x8, scoped, tag = 'scoped memory for memory_forward.1']
    #allocation4 [shape = 'u8[512]{0}', space=vmem, size = 0x400, scoped, tag = 'output window, operand 12, single buffered']
    #allocation5 [shape = 's32[1]{0}', space=sflag, size = 0x4, scoped, tag = 'scoped memory for memory_forward.1']
    #allocation6 [shape = 'u8[512]{0}', space=vmem, size = 0x400, scoped, tag = 'output window, operand 13, single buffered']
    #allocation7 [shape = 'u8[512]{0}', space=vmem, size = 0x400, scoped, tag = 'output window, operand 14, single buffered']
    #allocation8 [shape = 's32[1]{0}', space=sflag, size = 0x4, scoped, tag = 'scoped memory for memory_forward.1']
    %32 = vsyncpa [#allocation3], 0
    %33 = vsyncpa [#allocation5], 0
    %34 = vsyncpa [#allocation8], 0
    loop: start=0, step=1, limit=4
    $region2: #{memory_forward.1} parent=1 // loop_pre_header
      _
    $region3: #{memory_forward.1} parent=1 // loop_header
      %s36 = sphi 0, %s40
      %p37 = scmp.ge.s32.totalorder %s36, 4
      %s44 = sphi 0, %s44
      %s46 = sphi 0, %s44
      %s47 = sphi 0, %s46
      %s61 = sphi 0, %s47
      %s65 = sphi 0, %s65
      %s67 = sphi 0, %s65
      %s68 = sphi 0, %s67
      %s82 = sphi 0, %s68
      %s86 = sphi 0, %s86
      %s88 = sphi 0, %s86
      %s89 = sphi 0, %s88
      %s103 = sphi 0, %s89
      %s107 = sphi 0, %s107
      %s109 = sphi 0, %s107
      %s110 = sphi 0, %s109
      %s124 = sphi 0, %s110
      %s130 = sphi 0, %s132
      %s133 = sphi 0, %s130
      %s134 = sphi 0, %s133
      %s150 = sphi 0, %s134
      %s156 = sphi 0, %s158
      %s159 = sphi 0, %s156
      %s160 = sphi 0, %s159
      %s176 = sphi 0, %s160
      %s182 = sphi 0, %s184
      %s185 = sphi 0, %s182
      %s186 = sphi 0, %s185
      %s202 = sphi 0, %s186
      %s208 = sphi 0, %s210
      %s211 = sphi 0, %s208
      %s212 = sphi 0, %s211
      %s228 = sphi 0, %s212
      %s234 = sphi 0, %s236
      %s237 = sphi 0, %s234
      %s238 = sphi 0, %s237
      %s254 = sphi 0, %s238
      %s260 = sphi 0, %s262
      %s263 = sphi 0, %s260
      %s264 = sphi 0, %s263
      %s280 = sphi 0, %s264
      %s286 = sphi 0, %s288
      %s289 = sphi 0, %s286
      %s290 = sphi 0, %s289
      %s306 = sphi 0, %s290
      %s310 = sphi 0, %s310
      %s312 = sphi 0, %s310
      %s313 = sphi 0, %s312
      %s327 = sphi 0, %s313
      %s333 = sphi 0, %s335
      %s336 = sphi 0, %s333
      %s337 = sphi 0, %s336
      %s353 = sphi 0, %s337
      %s359 = sphi 0, %s361
      %s362 = sphi 0, %s359
      %s363 = sphi 0, %s362
      %s379 = sphi 0, %s363
      %s385 = sphi 0, %s387
      %s388 = sphi 0, %s385
      %s389 = sphi 0, %s388
      %s405 = sphi 0, %s389
      %s409 = sphi 0, %s409
      %s411 = sphi 0, %s409
      %s412 = sphi 0, %s411
      %s426 = sphi 0, %s412
      %s430 = sphi 0, %s430
      %s432 = sphi 0, %s430
      %s433 = sphi 0, %s432
      %s447 = sphi 0, %s433
      %s451 = sphi 0, %s451
      %s453 = sphi 0, %s451
      %s454 = sphi 0, %s453
      %s468 = sphi 0, %s454
      %s472 = sphi 0, %s472
      %s474 = sphi 0, %s472
      %s475 = sphi 0, %s474
      %s489 = sphi 0, %s475
      %s493 = sphi 0, %s493
      %s495 = sphi 0, %s493
      %s496 = sphi 0, %s495
      %s510 = sphi 0, %s496
      %s514 = sphi 0, %s514
      %s516 = sphi 0, %s514
      %s517 = sphi 0, %s516
      %s531 = sphi 0, %s517
      %s535 = sphi 0, %s535
      %s537 = sphi 0, %s535
      %s538 = sphi 0, %s537
      %s552 = sphi 0, %s538
      %s556 = sphi 0, %s556
      %s558 = sphi 0, %s556
      %s559 = sphi 0, %s558
      %s573 = sphi 0, %s559
      %s577 = sphi 0, %s577
      %s579 = sphi 0, %s577
      %s580 = sphi 0, %s579
      %s594 = sphi 0, %s580
      %s598 = sphi 0, %s598
      %s600 = sphi 0, %s598
      %s601 = sphi 0, %s600
      %s615 = sphi 0, %s601
      %s619 = sphi 0, %s619
      %s621 = sphi 0, %s619
      %s622 = sphi 0, %s621
      %s636 = sphi 0, %s622
      %s640 = sphi 0, %s640
      %s642 = sphi 0, %s640
      %s643 = sphi 0, %s642
      %s657 = sphi 0, %s643
    $region4: #{memory_forward.1} parent=1 // loop_header_branch
      %39 = sbr.rel (%p37) target = $region8
    $region5: #{memory_forward.1} parent=1 // loop_body
      %s41 = ssub.s32 %s36, 1
      %s42 = ssub.s32 %s36, 2
      %s43 = sadd.s32 %s36, 1
      %s45 = sadd.s32 %s44, 1
      %p48 = scmp.eq.s32.totalorder %s36, 1
      %p49 = scmp.ne.s32.totalorder %s44, %s46
      %p50 = scmp.eq.s32.totalorder %s36, 0
      %p51 = por %p49, %p50
      %p52 = scmp.ne.s32.totalorder %s44, %s46
      %p53 = scmp.eq.s32.totalorder %s41, 1
      %p54 = por %p52, %p53
      %p55 = scmp.ne.s32.totalorder %s46, %s47
      %p56 = scmp.eq.s32.totalorder %s41, 0
      %p57 = por %p55, %p56
      %p58 = scmp.ne.s32.totalorder %s46, %s47
      %p59 = scmp.eq.s32.totalorder %s42, 1
      %p60 = por %p58, %p59
      %p62 = scmp.ne.s32.totalorder %s47, %s61
      %p63 = scmp.eq.s32.totalorder %s42, 0
      %p64 = por %p62, %p63
      %s66 = sadd.s32 %s65, 1
      %p69 = scmp.eq.s32.totalorder %s36, 1
      %p70 = scmp.ne.s32.totalorder %s65, %s67
      %p71 = scmp.eq.s32.totalorder %s36, 0
      %p72 = por %p70, %p71
      %p73 = scmp.ne.s32.totalorder %s65, %s67
      %p74 = scmp.eq.s32.totalorder %s41, 1
      %p75 = por %p73, %p74
      %p76 = scmp.ne.s32.totalorder %s67, %s68
      %p77 = scmp.eq.s32.totalorder %s41, 0
      %p78 = por %p76, %p77
      %p79 = scmp.ne.s32.totalorder %s67, %s68
      %p80 = scmp.eq.s32.totalorder %s42, 1
      %p81 = por %p79, %p80
      %p83 = scmp.ne.s32.totalorder %s68, %s82
      %p84 = scmp.eq.s32.totalorder %s42, 0
      %p85 = por %p83, %p84
      %s87 = sadd.s32 %s86, 1
      %p90 = scmp.eq.s32.totalorder %s36, 1
      %p91 = scmp.ne.s32.totalorder %s86, %s88
      %p92 = scmp.eq.s32.totalorder %s36, 0
      %p93 = por %p91, %p92
      %p94 = scmp.ne.s32.totalorder %s86, %s88
      %p95 = scmp.eq.s32.totalorder %s41, 1
      %p96 = por %p94, %p95
      %p97 = scmp.ne.s32.totalorder %s88, %s89
      %p98 = scmp.eq.s32.totalorder %s41, 0
      %p99 = por %p97, %p98
      %p100 = scmp.ne.s32.totalorder %s88, %s89
      %p101 = scmp.eq.s32.totalorder %s42, 1
      %p102 = por %p100, %p101
      %p104 = scmp.ne.s32.totalorder %s89, %s103
      %p105 = scmp.eq.s32.totalorder %s42, 0
      %p106 = por %p104, %p105
      %s108 = sadd.s32 %s107, 1
      %p111 = scmp.eq.s32.totalorder %s36, 1
      %p112 = scmp.ne.s32.totalorder %s107, %s109
      %p113 = scmp.eq.s32.totalorder %s36, 0
      %p114 = por %p112, %p113
      %p115 = scmp.ne.s32.totalorder %s107, %s109
      %p116 = scmp.eq.s32.totalorder %s41, 1
      %p117 = por %p115, %p116
      %p118 = scmp.ne.s32.totalorder %s109, %s110
      %p119 = scmp.eq.s32.totalorder %s41, 0
      %p120 = por %p118, %p119
      %p121 = scmp.ne.s32.totalorder %s109, %s110
      %p122 = scmp.eq.s32.totalorder %s42, 1
      %p123 = por %p121, %p122
      %p125 = scmp.ne.s32.totalorder %s110, %s124
      %p126 = scmp.eq.s32.totalorder %s42, 0
      %p127 = por %p125, %p126
      %s128 = ssub.s32 %s36, %s43
      %p129 = scmp.eq.s32.totalorder %s128, 0
      %s131 = sadd.s32 %s130, 1
      %s132 = scalar_select %p129, %s130, %s131
      %p135 = pneg %p129
      %p136 = scmp.eq.s32.totalorder %s36, 1
      %p137 = por %p135, %p136
      %p138 = scmp.ne.s32.totalorder %s130, %s133
      %p139 = scmp.eq.s32.totalorder %s36, 0
      %p140 = por %p138, %p139
      %p141 = scmp.ne.s32.totalorder %s130, %s133
      %p142 = scmp.eq.s32.totalorder %s41, 1
      %p143 = por %p141, %p142
      %p144 = scmp.ne.s32.totalorder %s133, %s134
      %p145 = scmp.eq.s32.totalorder %s41, 0
      %p146 = por %p144, %p145
      %p147 = scmp.ne.s32.totalorder %s133, %s134
      %p148 = scmp.eq.s32.totalorder %s42, 1
      %p149 = por %p147, %p148
      %p151 = scmp.ne.s32.totalorder %s134, %s150
      %p152 = scmp.eq.s32.totalorder %s42, 0
      %p153 = por %p151, %p152
      %s154 = ssub.s32 %s36, %s43
      %p155 = scmp.eq.s32.totalorder %s154, 0
      %s157 = sadd.s32 %s156, 1
      %s158 = scalar_select %p155, %s156, %s157
      %p161 = pneg %p155
      %p162 = scmp.eq.s32.totalorder %s36, 1
      %p163 = por %p161, %p162
      %p164 = scmp.ne.s32.totalorder %s156, %s159
      %p165 = scmp.eq.s32.totalorder %s36, 0
      %p166 = por %p164, %p165
      %p167 = scmp.ne.s32.totalorder %s156, %s159
      %p168 = scmp.eq.s32.totalorder %s41, 1
      %p169 = por %p167, %p168
      %p170 = scmp.ne.s32.totalorder %s159, %s160
      %p171 = scmp.eq.s32.totalorder %s41, 0
      %p172 = por %p170, %p171
      %p173 = scmp.ne.s32.totalorder %s159, %s160
      %p174 = scmp.eq.s32.totalorder %s42, 1
      %p175 = por %p173, %p174
      %p177 = scmp.ne.s32.totalorder %s160, %s176
      %p178 = scmp.eq.s32.totalorder %s42, 0
      %p179 = por %p177, %p178
      %s180 = ssub.s32 %s36, %s43
      %p181 = scmp.eq.s32.totalorder %s180, 0
      %s183 = sadd.s32 %s182, 1
      %s184 = scalar_select %p181, %s182, %s183
      %p187 = pneg %p181
      %p188 = scmp.eq.s32.totalorder %s36, 1
      %p189 = por %p187, %p188
      %p190 = scmp.ne.s32.totalorder %s182, %s185
      %p191 = scmp.eq.s32.totalorder %s36, 0
      %p192 = por %p190, %p191
      %p193 = scmp.ne.s32.totalorder %s182, %s185
      %p194 = scmp.eq.s32.totalorder %s41, 1
      %p195 = por %p193, %p194
      %p196 = scmp.ne.s32.totalorder %s185, %s186
      %p197 = scmp.eq.s32.totalorder %s41, 0
      %p198 = por %p196, %p197
      %p199 = scmp.ne.s32.totalorder %s185, %s186
      %p200 = scmp.eq.s32.totalorder %s42, 1
      %p201 = por %p199, %p200
      %p203 = scmp.ne.s32.totalorder %s186, %s202
      %p204 = scmp.eq.s32.totalorder %s42, 0
      %p205 = por %p203, %p204
      %s206 = ssub.s32 %s36, %s43
      %p207 = scmp.eq.s32.totalorder %s206, 0
      %s209 = sadd.s32 %s208, 1
      %s210 = scalar_select %p207, %s208, %s209
      %p213 = pneg %p207
      %p214 = scmp.eq.s32.totalorder %s36, 1
      %p215 = por %p213, %p214
      %p216 = scmp.ne.s32.totalorder %s208, %s211
      %p217 = scmp.eq.s32.totalorder %s36, 0
      %p218 = por %p216, %p217
      %p219 = scmp.ne.s32.totalorder %s208, %s211
      %p220 = scmp.eq.s32.totalorder %s41, 1
      %p221 = por %p219, %p220
      %p222 = scmp.ne.s32.totalorder %s211, %s212
      %p223 = scmp.eq.s32.totalorder %s41, 0
      %p224 = por %p222, %p223
      %p225 = scmp.ne.s32.totalorder %s211, %s212
      %p226 = scmp.eq.s32.totalorder %s42, 1
      %p227 = por %p225, %p226
      %p229 = scmp.ne.s32.totalorder %s212, %s228
      %p230 = scmp.eq.s32.totalorder %s42, 0
      %p231 = por %p229, %p230
      %s232 = ssub.s32 %s36, %s43
      %p233 = scmp.eq.s32.totalorder %s232, 0
      %s235 = sadd.s32 %s234, 1
      %s236 = scalar_select %p233, %s234, %s235
      %p239 = pneg %p233
      %p240 = scmp.eq.s32.totalorder %s36, 1
      %p241 = por %p239, %p240
      %p242 = scmp.ne.s32.totalorder %s234, %s237
      %p243 = scmp.eq.s32.totalorder %s36, 0
      %p244 = por %p242, %p243
      %p245 = scmp.ne.s32.totalorder %s234, %s237
      %p246 = scmp.eq.s32.totalorder %s41, 1
      %p247 = por %p245, %p246
      %p248 = scmp.ne.s32.totalorder %s237, %s238
      %p249 = scmp.eq.s32.totalorder %s41, 0
      %p250 = por %p248, %p249
      %p251 = scmp.ne.s32.totalorder %s237, %s238
      %p252 = scmp.eq.s32.totalorder %s42, 1
      %p253 = por %p251, %p252
      %p255 = scmp.ne.s32.totalorder %s238, %s254
      %p256 = scmp.eq.s32.totalorder %s42, 0
      %p257 = por %p255, %p256
      %s258 = ssub.s32 %s36, %s43
      %p259 = scmp.eq.s32.totalorder %s258, 0
      %s261 = sadd.s32 %s260, 1
      %s262 = scalar_select %p259, %s260, %s261
      %p265 = pneg %p259
      %p266 = scmp.eq.s32.totalorder %s36, 1
      %p267 = por %p265, %p266
      %p268 = scmp.ne.s32.totalorder %s260, %s263
      %p269 = scmp.eq.s32.totalorder %s36, 0
      %p270 = por %p268, %p269
      %p271 = scmp.ne.s32.totalorder %s260, %s263
      %p272 = scmp.eq.s32.totalorder %s41, 1
      %p273 = por %p271, %p272
      %p274 = scmp.ne.s32.totalorder %s263, %s264
      %p275 = scmp.eq.s32.totalorder %s41, 0
      %p276 = por %p274, %p275
      %p277 = scmp.ne.s32.totalorder %s263, %s264
      %p278 = scmp.eq.s32.totalorder %s42, 1
      %p279 = por %p277, %p278
      %p281 = scmp.ne.s32.totalorder %s264, %s280
      %p282 = scmp.eq.s32.totalorder %s42, 0
      %p283 = por %p281, %p282
      %s284 = ssub.s32 %s36, %s43
      %p285 = scmp.eq.s32.totalorder %s284, 0
      %s287 = sadd.s32 %s286, 1
      %s288 = scalar_select %p285, %s286, %s287
      %p291 = pneg %p285
      %p292 = scmp.eq.s32.totalorder %s36, 1
      %p293 = por %p291, %p292
      %p294 = scmp.ne.s32.totalorder %s286, %s289
      %p295 = scmp.eq.s32.totalorder %s36, 0
      %p296 = por %p294, %p295
      %p297 = scmp.ne.s32.totalorder %s286, %s289
      %p298 = scmp.eq.s32.totalorder %s41, 1
      %p299 = por %p297, %p298
      %p300 = scmp.ne.s32.totalorder %s289, %s290
      %p301 = scmp.eq.s32.totalorder %s41, 0
      %p302 = por %p300, %p301
      %p303 = scmp.ne.s32.totalorder %s289, %s290
      %p304 = scmp.eq.s32.totalorder %s42, 1
      %p305 = por %p303, %p304
      %p307 = scmp.ne.s32.totalorder %s290, %s306
      %p308 = scmp.eq.s32.totalorder %s42, 0
      %p309 = por %p307, %p308
      %s311 = sadd.s32 %s310, 1
      %p314 = scmp.eq.s32.totalorder %s36, 1
      %p315 = scmp.ne.s32.totalorder %s310, %s312
      %p316 = scmp.eq.s32.totalorder %s36, 0
      %p317 = por %p315, %p316
      %p318 = scmp.ne.s32.totalorder %s310, %s312
      %p319 = scmp.eq.s32.totalorder %s41, 1
      %p320 = por %p318, %p319
      %p321 = scmp.ne.s32.totalorder %s312, %s313
      %p322 = scmp.eq.s32.totalorder %s41, 0
      %p323 = por %p321, %p322
      %p324 = scmp.ne.s32.totalorder %s312, %s313
      %p325 = scmp.eq.s32.totalorder %s42, 1
      %p326 = por %p324, %p325
      %p328 = scmp.ne.s32.totalorder %s313, %s327
      %p329 = scmp.eq.s32.totalorder %s42, 0
      %p330 = por %p328, %p329
      %s331 = ssub.s32 %s36, %s43
      %p332 = scmp.eq.s32.totalorder %s331, 0
      %s334 = sadd.s32 %s333, 1
      %s335 = scalar_select %p332, %s333, %s334
      %p338 = pneg %p332
      %p339 = scmp.eq.s32.totalorder %s36, 1
      %p340 = por %p338, %p339
      %p341 = scmp.ne.s32.totalorder %s333, %s336
      %p342 = scmp.eq.s32.totalorder %s36, 0
      %p343 = por %p341, %p342
      %p344 = scmp.ne.s32.totalorder %s333, %s336
      %p345 = scmp.eq.s32.totalorder %s41, 1
      %p346 = por %p344, %p345
      %p347 = scmp.ne.s32.totalorder %s336, %s337
      %p348 = scmp.eq.s32.totalorder %s41, 0
      %p349 = por %p347, %p348
      %p350 = scmp.ne.s32.totalorder %s336, %s337
      %p351 = scmp.eq.s32.totalorder %s42, 1
      %p352 = por %p350, %p351
      %p354 = scmp.ne.s32.totalorder %s337, %s353
      %p355 = scmp.eq.s32.totalorder %s42, 0
      %p356 = por %p354, %p355
      %s357 = ssub.s32 %s36, %s43
      %p358 = scmp.eq.s32.totalorder %s357, 0
      %s360 = sadd.s32 %s359, 1
      %s361 = scalar_select %p358, %s359, %s360
      %p364 = pneg %p358
      %p365 = scmp.eq.s32.totalorder %s36, 1
      %p366 = por %p364, %p365
      %p367 = scmp.ne.s32.totalorder %s359, %s362
      %p368 = scmp.eq.s32.totalorder %s36, 0
      %p369 = por %p367, %p368
      %p370 = scmp.ne.s32.totalorder %s359, %s362
      %p371 = scmp.eq.s32.totalorder %s41, 1
      %p372 = por %p370, %p371
      %p373 = scmp.ne.s32.totalorder %s362, %s363
      %p374 = scmp.eq.s32.totalorder %s41, 0
      %p375 = por %p373, %p374
      %p376 = scmp.ne.s32.totalorder %s362, %s363
      %p377 = scmp.eq.s32.totalorder %s42, 1
      %p378 = por %p376, %p377
      %p380 = scmp.ne.s32.totalorder %s363, %s379
      %p381 = scmp.eq.s32.totalorder %s42, 0
      %p382 = por %p380, %p381
      %s383 = ssub.s32 %s36, %s43
      %p384 = scmp.eq.s32.totalorder %s383, 0
      %s386 = sadd.s32 %s385, 1
      %s387 = scalar_select %p384, %s385, %s386
      %p390 = pneg %p384
      %p391 = scmp.eq.s32.totalorder %s36, 1
      %p392 = por %p390, %p391
      %p393 = scmp.ne.s32.totalorder %s385, %s388
      %p394 = scmp.eq.s32.totalorder %s36, 0
      %p395 = por %p393, %p394
      %p396 = scmp.ne.s32.totalorder %s385, %s388
      %p397 = scmp.eq.s32.totalorder %s41, 1
      %p398 = por %p396, %p397
      %p399 = scmp.ne.s32.totalorder %s388, %s389
      %p400 = scmp.eq.s32.totalorder %s41, 0
      %p401 = por %p399, %p400
      %p402 = scmp.ne.s32.totalorder %s388, %s389
      %p403 = scmp.eq.s32.totalorder %s42, 1
      %p404 = por %p402, %p403
      %p406 = scmp.ne.s32.totalorder %s389, %s405
      %p407 = scmp.eq.s32.totalorder %s42, 0
      %p408 = por %p406, %p407
      %s410 = sadd.s32 %s409, 1
      %p413 = scmp.eq.s32.totalorder %s36, 1
      %p414 = scmp.ne.s32.totalorder %s409, %s411
      %p415 = scmp.eq.s32.totalorder %s36, 0
      %p416 = por %p414, %p415
      %p417 = scmp.ne.s32.totalorder %s409, %s411
      %p418 = scmp.eq.s32.totalorder %s41, 1
      %p419 = por %p417, %p418
      %p420 = scmp.ne.s32.totalorder %s411, %s412
      %p421 = scmp.eq.s32.totalorder %s41, 0
      %p422 = por %p420, %p421
      %p423 = scmp.ne.s32.totalorder %s411, %s412
      %p424 = scmp.eq.s32.totalorder %s42, 1
      %p425 = por %p423, %p424
      %p427 = scmp.ne.s32.totalorder %s412, %s426
      %p428 = scmp.eq.s32.totalorder %s42, 0
      %p429 = por %p427, %p428
      %s431 = sadd.s32 %s430, 1
      %p434 = scmp.eq.s32.totalorder %s36, 1
      %p435 = scmp.ne.s32.totalorder %s430, %s432
      %p436 = scmp.eq.s32.totalorder %s36, 0
      %p437 = por %p435, %p436
      %p438 = scmp.ne.s32.totalorder %s430, %s432
      %p439 = scmp.eq.s32.totalorder %s41, 1
      %p440 = por %p438, %p439
      %p441 = scmp.ne.s32.totalorder %s432, %s433
      %p442 = scmp.eq.s32.totalorder %s41, 0
      %p443 = por %p441, %p442
      %p444 = scmp.ne.s32.totalorder %s432, %s433
      %p445 = scmp.eq.s32.totalorder %s42, 1
      %p446 = por %p444, %p445
      %p448 = scmp.ne.s32.totalorder %s433, %s447
      %p449 = scmp.eq.s32.totalorder %s42, 0
      %p450 = por %p448, %p449
      %s452 = sadd.s32 %s451, 1
      %p455 = scmp.eq.s32.totalorder %s36, 1
      %p456 = scmp.ne.s32.totalorder %s451, %s453
      %p457 = scmp.eq.s32.totalorder %s36, 0
      %p458 = por %p456, %p457
      %p459 = scmp.ne.s32.totalorder %s451, %s453
      %p460 = scmp.eq.s32.totalorder %s41, 1
      %p461 = por %p459, %p460
      %p462 = scmp.ne.s32.totalorder %s453, %s454
      %p463 = scmp.eq.s32.totalorder %s41, 0
      %p464 = por %p462, %p463
      %p465 = scmp.ne.s32.totalorder %s453, %s454
      %p466 = scmp.eq.s32.totalorder %s42, 1
      %p467 = por %p465, %p466
      %p469 = scmp.ne.s32.totalorder %s454, %s468
      %p470 = scmp.eq.s32.totalorder %s42, 0
      %p471 = por %p469, %p470
      %s473 = sadd.s32 %s472, 1
      %p476 = scmp.eq.s32.totalorder %s36, 1
      %p477 = scmp.ne.s32.totalorder %s472, %s474
      %p478 = scmp.eq.s32.totalorder %s36, 0
      %p479 = por %p477, %p478
      %p480 = scmp.ne.s32.totalorder %s472, %s474
      %p481 = scmp.eq.s32.totalorder %s41, 1
      %p482 = por %p480, %p481
      %p483 = scmp.ne.s32.totalorder %s474, %s475
      %p484 = scmp.eq.s32.totalorder %s41, 0
      %p485 = por %p483, %p484
      %p486 = scmp.ne.s32.totalorder %s474, %s475
      %p487 = scmp.eq.s32.totalorder %s42, 1
      %p488 = por %p486, %p487
      %p490 = scmp.ne.s32.totalorder %s475, %s489
      %p491 = scmp.eq.s32.totalorder %s42, 0
      %p492 = por %p490, %p491
      %s494 = sadd.s32 %s493, 1
      %p497 = scmp.eq.s32.totalorder %s36, 1
      %p498 = scmp.ne.s32.totalorder %s493, %s495
      %p499 = scmp.eq.s32.totalorder %s36, 0
      %p500 = por %p498, %p499
      %p501 = scmp.ne.s32.totalorder %s493, %s495
      %p502 = scmp.eq.s32.totalorder %s41, 1
      %p503 = por %p501, %p502
      %p504 = scmp.ne.s32.totalorder %s495, %s496
      %p505 = scmp.eq.s32.totalorder %s41, 0
      %p506 = por %p504, %p505
      %p507 = scmp.ne.s32.totalorder %s495, %s496
      %p508 = scmp.eq.s32.totalorder %s42, 1
      %p509 = por %p507, %p508
      %p511 = scmp.ne.s32.totalorder %s496, %s510
      %p512 = scmp.eq.s32.totalorder %s42, 0
      %p513 = por %p511, %p512
      %s515 = sadd.s32 %s514, 1
      %p518 = scmp.eq.s32.totalorder %s36, 1
      %p519 = scmp.ne.s32.totalorder %s514, %s516
      %p520 = scmp.eq.s32.totalorder %s36, 0
      %p521 = por %p519, %p520
      %p522 = scmp.ne.s32.totalorder %s514, %s516
      %p523 = scmp.eq.s32.totalorder %s41, 1
      %p524 = por %p522, %p523
      %p525 = scmp.ne.s32.totalorder %s516, %s517
      %p526 = scmp.eq.s32.totalorder %s41, 0
      %p527 = por %p525, %p526
      %p528 = scmp.ne.s32.totalorder %s516, %s517
      %p529 = scmp.eq.s32.totalorder %s42, 1
      %p530 = por %p528, %p529
      %p532 = scmp.ne.s32.totalorder %s517, %s531
      %p533 = scmp.eq.s32.totalorder %s42, 0
      %p534 = por %p532, %p533
      %s536 = sadd.s32 %s535, 1
      %p539 = scmp.eq.s32.totalorder %s36, 1
      %p540 = scmp.ne.s32.totalorder %s535, %s537
      %p541 = scmp.eq.s32.totalorder %s36, 0
      %p542 = por %p540, %p541
      %p543 = scmp.ne.s32.totalorder %s535, %s537
      %p544 = scmp.eq.s32.totalorder %s41, 1
      %p545 = por %p543, %p544
      %p546 = scmp.ne.s32.totalorder %s537, %s538
      %p547 = scmp.eq.s32.totalorder %s41, 0
      %p548 = por %p546, %p547
      %p549 = scmp.ne.s32.totalorder %s537, %s538
      %p550 = scmp.eq.s32.totalorder %s42, 1
      %p551 = por %p549, %p550
      %p553 = scmp.ne.s32.totalorder %s538, %s552
      %p554 = scmp.eq.s32.totalorder %s42, 0
      %p555 = por %p553, %p554
      %s557 = sadd.s32 %s556, 1
      %p560 = scmp.eq.s32.totalorder %s36, 1
      %p561 = scmp.ne.s32.totalorder %s556, %s558
      %p562 = scmp.eq.s32.totalorder %s36, 0
      %p563 = por %p561, %p562
      %p564 = scmp.ne.s32.totalorder %s556, %s558
      %p565 = scmp.eq.s32.totalorder %s41, 1
      %p566 = por %p564, %p565
      %p567 = scmp.ne.s32.totalorder %s558, %s559
      %p568 = scmp.eq.s32.totalorder %s41, 0
      %p569 = por %p567, %p568
      %p570 = scmp.ne.s32.totalorder %s558, %s559
      %p571 = scmp.eq.s32.totalorder %s42, 1
      %p572 = por %p570, %p571
      %p574 = scmp.ne.s32.totalorder %s559, %s573
      %p575 = scmp.eq.s32.totalorder %s42, 0
      %p576 = por %p574, %p575
      %s578 = sadd.s32 %s577, 1
      %p581 = scmp.eq.s32.totalorder %s36, 1
      %p582 = scmp.ne.s32.totalorder %s577, %s579
      %p583 = scmp.eq.s32.totalorder %s36, 0
      %p584 = por %p582, %p583
      %p585 = scmp.ne.s32.totalorder %s577, %s579
      %p586 = scmp.eq.s32.totalorder %s41, 1
      %p587 = por %p585, %p586
      %p588 = scmp.ne.s32.totalorder %s579, %s580
      %p589 = scmp.eq.s32.totalorder %s41, 0
      %p590 = por %p588, %p589
      %p591 = scmp.ne.s32.totalorder %s579, %s580
      %p592 = scmp.eq.s32.totalorder %s42, 1
      %p593 = por %p591, %p592
      %p595 = scmp.ne.s32.totalorder %s580, %s594
      %p596 = scmp.eq.s32.totalorder %s42, 0
      %p597 = por %p595, %p596
      %s599 = sadd.s32 %s598, 1
      %p602 = scmp.eq.s32.totalorder %s36, 1
      %p603 = scmp.ne.s32.totalorder %s598, %s600
      %p604 = scmp.eq.s32.totalorder %s36, 0
      %p605 = por %p603, %p604
      %p606 = scmp.ne.s32.totalorder %s598, %s600
      %p607 = scmp.eq.s32.totalorder %s41, 1
      %p608 = por %p606, %p607
      %p609 = scmp.ne.s32.totalorder %s600, %s601
      %p610 = scmp.eq.s32.totalorder %s41, 0
      %p611 = por %p609, %p610
      %p612 = scmp.ne.s32.totalorder %s600, %s601
      %p613 = scmp.eq.s32.totalorder %s42, 1
      %p614 = por %p612, %p613
      %p616 = scmp.ne.s32.totalorder %s601, %s615
      %p617 = scmp.eq.s32.totalorder %s42, 0
      %p618 = por %p616, %p617
      %s620 = sadd.s32 %s619, 1
      %p623 = scmp.eq.s32.totalorder %s36, 1
      %p624 = scmp.ne.s32.totalorder %s619, %s621
      %p625 = scmp.eq.s32.totalorder %s36, 0
      %p626 = por %p624, %p625
      %p627 = scmp.ne.s32.totalorder %s619, %s621
      %p628 = scmp.eq.s32.totalorder %s41, 1
      %p629 = por %p627, %p628
      %p630 = scmp.ne.s32.totalorder %s621, %s622
      %p631 = scmp.eq.s32.totalorder %s41, 0
      %p632 = por %p630, %p631
      %p633 = scmp.ne.s32.totalorder %s621, %s622
      %p634 = scmp.eq.s32.totalorder %s42, 1
      %p635 = por %p633, %p634
      %p637 = scmp.ne.s32.totalorder %s622, %s636
      %p638 = scmp.eq.s32.totalorder %s42, 0
      %p639 = por %p637, %p638
      %s641 = sadd.s32 %s640, 1
      %p644 = scmp.eq.s32.totalorder %s36, 1
      %p645 = scmp.ne.s32.totalorder %s640, %s642
      %p646 = scmp.eq.s32.totalorder %s36, 0
      %p647 = por %p645, %p646
      %p648 = scmp.ne.s32.totalorder %s640, %s642
      %p649 = scmp.eq.s32.totalorder %s41, 1
      %p650 = por %p648, %p649
      %p651 = scmp.ne.s32.totalorder %s642, %s643
      %p652 = scmp.eq.s32.totalorder %s41, 0
      %p653 = por %p651, %p652
      %p654 = scmp.ne.s32.totalorder %s642, %s643
      %p655 = scmp.eq.s32.totalorder %s42, 1
      %p656 = por %p654, %p655
      %p658 = scmp.ne.s32.totalorder %s643, %s657
      %p659 = scmp.eq.s32.totalorder %s42, 0
      %p660 = por %p658, %p659
      %p661 = scmp.le.s32.totalorder 1, %s36
      %p662 = scmp.lt.s32.totalorder %s36, 3
      %p663 = pnand %p661, %p662
      %p664 = pneg %p663
      // Predicated region
      $region9: #{memory_forward.1} parent=5 // pred_check
        _
      $region10: #{memory_forward.1} parent=5 // pred_check_branch
        %666 = sbr.rel (%p663) target = $region12
      $region11: #{memory_forward.1} parent=5 // pred_region
        %s667 = ssub.s32 %s36, 1
        // Predicated region
        $region13: #{memory_forward.1} parent=11 // pred_check
          %p668 = pneg %p57
        $region14: #{memory_forward.1} parent=11 // pred_check_branch
          %670 = sbr.rel (%p668) target = $region16
        $region15: #{memory_forward.1} parent=11 // pred_region
          _
        $region16: #{memory_forward.1} parent=11 // pred_fallthru
          _
        // Predicated region
        $region17: #{memory_forward.1} parent=11 // pred_check
          %p671 = pneg %p78
        $region18: #{memory_forward.1} parent=11 // pred_check_branch
          %673 = sbr.rel (%p671) target = $region20
        $region19: #{memory_forward.1} parent=11 // pred_region
          _
        $region20: #{memory_forward.1} parent=11 // pred_fallthru
          _
        // Predicated region
        $region21: #{memory_forward.1} parent=11 // pred_check
          %p674 = pneg %p99
        $region22: #{memory_forward.1} parent=11 // pred_check_branch
          %676 = sbr.rel (%p674) target = $region24
        $region23: #{memory_forward.1} parent=11 // pred_region
          _
        $region24: #{memory_forward.1} parent=11 // pred_fallthru
          _
        // Predicated region
        $region25: #{memory_forward.1} parent=11 // pred_check
          %p677 = pneg %p120
        $region26: #{memory_forward.1} parent=11 // pred_check_branch
          %679 = sbr.rel (%p677) target = $region28
        $region27: #{memory_forward.1} parent=11 // pred_region
          _
        $region28: #{memory_forward.1} parent=11 // pred_fallthru
          _
        // Predicated region
        $region29: #{memory_forward.1} parent=11 // pred_check
          %p680 = pneg %p323
        $region30: #{memory_forward.1} parent=11 // pred_check_branch
          %682 = sbr.rel (%p680) target = $region32
        $region31: #{memory_forward.1} parent=11 // pred_region
          _
        $region32: #{memory_forward.1} parent=11 // pred_fallthru
          _
      $region12: #{memory_forward.1} parent=5 // pred_fallthru
        _
      %p683 = scmp.lt.s32.totalorder %s36, 2
      // Predicated region
      $region33: #{memory_forward.1} parent=5 // pred_check
        %p684 = pneg %p683
      $region34: #{memory_forward.1} parent=5 // pred_check_branch
        %686 = sbr.rel (%p684) target = $region36
      $region35: #{memory_forward.1} parent=5 // pred_region
        // Predicated region
        $region37: #{memory_forward.1} parent=35 // pred_check
          %p687 = pneg %p140
        $region38: #{memory_forward.1} parent=35 // pred_check_branch
          %689 = sbr.rel (%p687) target = $region40
        $region39: #{memory_forward.1} parent=35 // pred_region
          %p690 = scmp.lt.s32.totalorder %s36, 1
          %s691 = scalar_select %p690, %s36, 1
          %s692 = scalar_lea.vmem %s4, %s691
        $region40: #{memory_forward.1} parent=35 // pred_fallthru
          _
        // Predicated region
        $region41: #{memory_forward.1} parent=35 // pred_check
          %p693 = pneg %p166
        $region42: #{memory_forward.1} parent=35 // pred_check_branch
          %695 = sbr.rel (%p693) target = $region44
        $region43: #{memory_forward.1} parent=35 // pred_region
          %p696 = scmp.lt.s32.totalorder %s36, 1
          %s697 = scalar_select %p696, %s36, 1
          %s698 = scalar_lea.vmem %s5, %s697
        $region44: #{memory_forward.1} parent=35 // pred_fallthru
          _
        // Predicated region
        $region45: #{memory_forward.1} parent=35 // pred_check
          %p699 = pneg %p192
        $region46: #{memory_forward.1} parent=35 // pred_check_branch
          %701 = sbr.rel (%p699) target = $region48
        $region47: #{memory_forward.1} parent=35 // pred_region
          %p702 = scmp.lt.s32.totalorder %s36, 1
          %s703 = scalar_select %p702, %s36, 1
          %s704 = smul.addr %s703, 8
          %s705 = scalar_lea.vmem %s6, %s704
        $region48: #{memory_forward.1} parent=35 // pred_fallthru
          _
        // Predicated region
        $region49: #{memory_forward.1} parent=35 // pred_check
          %p706 = pneg %p218
        $region50: #{memory_forward.1} parent=35 // pred_check_branch
          %708 = sbr.rel (%p706) target = $region52
        $region51: #{memory_forward.1} parent=35 // pred_region
          %p709 = scmp.lt.s32.totalorder %s36, 1
          %s710 = scalar_select %p709, %s36, 1
          %s711 = smul.addr %s710, 8
          %s712 = scalar_lea.vmem %s7, %s711
        $region52: #{memory_forward.1} parent=35 // pred_fallthru
          _
        // Predicated region
        $region53: #{memory_forward.1} parent=35 // pred_check
          %p713 = pneg %p244
        $region54: #{memory_forward.1} parent=35 // pred_check_branch
          %715 = sbr.rel (%p713) target = $region56
        $region55: #{memory_forward.1} parent=35 // pred_region
          %p716 = scmp.lt.s32.totalorder %s36, 1
          %s717 = scalar_select %p716, %s36, 1
          %s718 = smul.addr %s717, 8
          %s719 = scalar_lea.vmem %s8, %s718
        $region56: #{memory_forward.1} parent=35 // pred_fallthru
          _
        // Predicated region
        $region57: #{memory_forward.1} parent=35 // pred_check
          %p720 = pneg %p270
        $region58: #{memory_forward.1} parent=35 // pred_check_branch
          %722 = sbr.rel (%p720) target = $region60
        $region59: #{memory_forward.1} parent=35 // pred_region
          %p723 = scmp.lt.s32.totalorder %s36, 1
          %s724 = scalar_select %p723, %s36, 1
          %s725 = smul.addr %s724, 4
          %s726 = scalar_lea.vmem %s9, %s725
        $region60: #{memory_forward.1} parent=35 // pred_fallthru
          _
        // Predicated region
        $region61: #{memory_forward.1} parent=35 // pred_check
          %p727 = pneg %p296
        $region62: #{memory_forward.1} parent=35 // pred_check_branch
          %729 = sbr.rel (%p727) target = $region64
        $region63: #{memory_forward.1} parent=35 // pred_region
          %p730 = scmp.lt.s32.totalorder %s36, 1
          %s731 = scalar_select %p730, %s36, 1
          %s732 = smul.addr %s731, 4
          %s733 = scalar_lea.vmem %s10, %s732
        $region64: #{memory_forward.1} parent=35 // pred_fallthru
          _
      $region36: #{memory_forward.1} parent=5 // pred_fallthru
        _
      %p734 = scmp.le.s32.totalorder 1, %s36
      %p735 = scmp.lt.s32.totalorder %s36, 3
      %p736 = pnand %p734, %p735
      %p737 = pneg %p736
      // Predicated region
      $region65: #{memory_forward.1} parent=5 // pred_check
        _
      $region66: #{memory_forward.1} parent=5 // pred_check_branch
        %739 = sbr.rel (%p736) target = $region68
      $region67: #{memory_forward.1} parent=5 // pred_region
        %s740 = ssub.s32 %s36, 1
        %p741 = pneg %p57
        %p742 = pneg %p54
        %p743 = pneg %p78
        %p744 = pneg %p75
        %p745 = pneg %p99
        %p746 = pneg %p96
        %p747 = pneg %p120
        %p748 = pneg %p117
        %p749 = scmp.lt.s32.totalorder %s41, 1
        %s750 = scalar_select %p749, %s41, 1
        %s751 = scalar_lea.vmem %s4, %s750
        %p752 = pneg %p146
        %p753 = pneg %p143
        %p754 = scmp.lt.s32.totalorder %s41, 1
        %s755 = scalar_select %p754, %s41, 1
        %s756 = scalar_lea.vmem %s5, %s755
        %p757 = pneg %p172
        %p758 = pneg %p169
        %p759 = scmp.lt.s32.totalorder %s41, 1
        %s760 = scalar_select %p759, %s41, 1
        %s761 = smul.addr %s760, 8
        %s762 = scalar_lea.vmem %s6, %s761
        %p763 = pneg %p198
        %p764 = pneg %p195
        %p765 = scmp.lt.s32.totalorder %s41, 1
        %s766 = scalar_select %p765, %s41, 1
        %s767 = smul.addr %s766, 8
        %s768 = scalar_lea.vmem %s7, %s767
        %p769 = pneg %p224
        %p770 = pneg %p221
        %p771 = scmp.lt.s32.totalorder %s41, 1
        %s772 = scalar_select %p771, %s41, 1
        %s773 = smul.addr %s772, 8
        %s774 = scalar_lea.vmem %s8, %s773
        %p775 = pneg %p250
        %p776 = pneg %p247
        %p777 = scmp.lt.s32.totalorder %s41, 1
        %s778 = scalar_select %p777, %s41, 1
        %s779 = smul.addr %s778, 4
        %s780 = scalar_lea.vmem %s9, %s779
        %p781 = pneg %p276
        %p782 = pneg %p273
        %p783 = scmp.lt.s32.totalorder %s41, 1
        %s784 = scalar_select %p783, %s41, 1
        %s785 = smul.addr %s784, 4
        %s786 = scalar_lea.vmem %s10, %s785
        %p787 = pneg %p302
        %p788 = pneg %p299
        %p789 = pneg %p323
        %p790 = pneg %p320
        %p791 = pneg %p349
        %p792 = pneg %p346
        %p793 = scmp.lt.s32.totalorder %s41, 1
        %s794 = scalar_select %p793, %s41, 1
        %s795 = smul.addr %s794, 8
        %s796 = scalar_lea.vmem %s12, %s795
        %p797 = pneg %p375
        %p798 = pneg %p372
        %p799 = scmp.lt.s32.totalorder %s41, 1
        %s800 = scalar_select %p799, %s41, 1
        %s801 = smul.addr %s800, 8
        %s802 = scalar_lea.vmem %s13, %s801
        %p803 = pneg %p401
        %p804 = pneg %p398
        %p805 = scmp.lt.s32.totalorder %s41, 1
        %s806 = scalar_select %p805, %s41, 1
        %s807 = smul.addr %s806, 8
        %s808 = scalar_lea.vmem %s14, %s807
        %p809 = pneg %p422
        %p810 = pneg %p419
        %p811 = pneg %p443
        %p812 = pneg %p440
        %p813 = pneg %p464
        %p814 = pneg %p461
        %p815 = pneg %p485
        %p816 = pneg %p482
        %p817 = pneg %p506
        %p818 = pneg %p503
        %p819 = pneg %p527
        %p820 = pneg %p524
        %p821 = pneg %p548
        %p822 = pneg %p545
        %p823 = pneg %p569
        %p824 = pneg %p566
        %p825 = pneg %p590
        %p826 = pneg %p587
        %p827 = pneg %p611
        %p828 = pneg %p608
        %p829 = pneg %p632
        %p830 = pneg %p629
        %p831 = pneg %p653
        %p832 = pneg %p650
        %p833 = scmp.lt.s32.totalorder %s41, 1
        %s834 = scalar_select %p833, %s41, 1
        %s835 = scalar_lea.vmem %s4, %s834
        %p836 = scmp.lt.s32.totalorder %s41, 1
        %s837 = scalar_select %p836, %s41, 1
        %s838 = scalar_lea.vmem %s5, %s837
        %p839 = scmp.lt.s32.totalorder %s41, 1
        %s840 = scalar_select %p839, %s41, 1
        %s841 = smul.addr %s840, 8
        %s842 = scalar_lea.vmem %s6, %s841
        %p843 = scmp.lt.s32.totalorder %s41, 1
        %s844 = scalar_select %p843, %s41, 1
        %s845 = smul.addr %s844, 8
        %s846 = scalar_lea.vmem %s7, %s845
        %p847 = scmp.lt.s32.totalorder %s41, 1
        %s848 = scalar_select %p847, %s41, 1
        %s849 = smul.addr %s848, 8
        %s850 = scalar_lea.vmem %s8, %s849
        %p851 = scmp.lt.s32.totalorder %s41, 1
        %s852 = scalar_select %p851, %s41, 1
        %s853 = smul.addr %s852, 4
        %s854 = scalar_lea.vmem %s9, %s853
        %p855 = scmp.lt.s32.totalorder %s41, 1
        %s856 = scalar_select %p855, %s41, 1
        %s857 = smul.addr %s856, 4
        %s858 = scalar_lea.vmem %s10, %s857
        %p859 = scmp.lt.s32.totalorder %s41, 1
        %s860 = scalar_select %p859, %s41, 1
        %s861 = smul.addr %s860, 8
        %s862 = scalar_lea.vmem %s12, %s861
        %p863 = scmp.lt.s32.totalorder %s41, 1
        %s864 = scalar_select %p863, %s41, 1
        %s865 = smul.addr %s864, 8
        %s866 = scalar_lea.vmem %s13, %s865
        %p867 = scmp.lt.s32.totalorder %s41, 1
        %s868 = scalar_select %p867, %s41, 1
        %s869 = smul.addr %s868, 8
        %s870 = scalar_lea.vmem %s14, %s869
        %p872 = scmp.eq.s32.totalorder %s41, 0
        // Predicated region
        $region69: #{memory_forward.1} parent=67 // pred_check
          %p873 = pneg %p872
        $region70: #{memory_forward.1} parent=67 // pred_check_branch
          %875 = sbr.rel (%p873) target = $region72
        $region71: #{memory_forward.1} parent=67 // pred_region
          %876 = vst [vmem:[%s15] sm:$0xff] 0.0
          %877 = vst [vmem:[%s15 + $0x8] sm:$0xff] 0.0
          %878 = vst [vmem:[%s15 + $0x10] sm:$0xff] 0.0
          %879 = vst [vmem:[%s15 + $0x18] sm:$0xff] 0.0
          %880 = vst [vmem:[%s16] sm:$0xff] 0.0
          %881 = vst [vmem:[%s16 + $0x8] sm:$0xff] 0.0
          %882 = vst [vmem:[%s16 + $0x10] sm:$0xff] 0.0
          %883 = vst [vmem:[%s16 + $0x18] sm:$0xff] 0.0
          %884 = vst [vmem:[%s17] sm:$0xff] 0.0
          %885 = vst [vmem:[%s17 + $0x8] sm:$0xff] 0.0
          %886 = vst [vmem:[%s17 + $0x10] sm:$0xff] 0.0
          %887 = vst [vmem:[%s17 + $0x18] sm:$0xff] 0.0
          %888 = vst [vmem:[%s18] sm:$0xff] 0.0
          %889 = vst [vmem:[%s18 + $0x8] sm:$0xff] 0.0
          %890 = vst [vmem:[%s18 + $0x10] sm:$0xff] 0.0
          %891 = vst [vmem:[%s18 + $0x18] sm:$0xff] 0.0
          %892 = vst [vmem:[%s19] sm:$0xff] 0.0
          %893 = vst [vmem:[%s19 + $0x8] sm:$0xff] 0.0
          %894 = vst [vmem:[%s19 + $0x10] sm:$0xff] 0.0
          %895 = vst [vmem:[%s19 + $0x18] sm:$0xff] 0.0
          %896 = vst [vmem:[%s20] sm:$0xff] 0.0
          %897 = vst [vmem:[%s20 + $0x8] sm:$0xff] 0.0
          %898 = vst [vmem:[%s20 + $0x10] sm:$0xff] 0.0
          %899 = vst [vmem:[%s20 + $0x18] sm:$0xff] 0.0
          %900 = vst [vmem:[%s21] sm:$0xff] 0.0
          %901 = vst [vmem:[%s21 + $0x8] sm:$0xff] 0.0
          %902 = vst [vmem:[%s21 + $0x10] sm:$0xff] 0.0
          %903 = vst [vmem:[%s21 + $0x18] sm:$0xff] 0.0
          %904 = vst [vmem:[%s22] sm:$0xff] 0.0
          %905 = vst [vmem:[%s22 + $0x8] sm:$0xff] 0.0
          %906 = vst [vmem:[%s22 + $0x10] sm:$0xff] 0.0
          %907 = vst [vmem:[%s22 + $0x18] sm:$0xff] 0.0
          %908 = vst [vmem:[#allocation2] sm:$0x1] 0.0
          %909 = vst [vmem:[#allocation4] sm:$0x1] 0.0
          %vm910 = vcmask 0
          %911 = vst.msk [vmem:[#allocation6] sm:$0x1] %vm910, 0.0
          %912 = vst.msk [vmem:[#allocation7] sm:$0x1] %vm910, 0.0
        $region72: #{memory_forward.1} parent=67 // pred_fallthru
          _
        %v913 = vld [vmem:[%s835] sm:$0x1]
        %v914 = vld [vmem:[%s838] sm:$0x1]
        %v915 = vpack.c.bf16 %v913, %v913
        %v916 = vpack.c.bf16 %v914, %v914
        %v917 = vld [vmem:[%s0] sm:$0xf]
        %v918 = vld [vmem:[%s0 + $0x4] sm:$0xf]
        %v919 = vld [vmem:[%s0 + $0x8] sm:$0xf]
        %v920 = vld [vmem:[%s0 + $0xc] sm:$0xf]
        %v922 = vpack.i.b16 %v915, %v915
        %v924 = vlaneseq
        %v925 = vshrl.u32 %v924, 7
        %v926 = vsub.s32 0, %v925
        %v927 = vrot.slane %v922, %v926
        %v929 = vunpack.c.l.b16 %v927
        %v930 = vpack.c.b16 %v929, %v929
        %v932 = vmul.bf16 %v917, %v930
        %v933 = vmul.bf16 %v918, %v930
        %v934 = vmul.bf16 %v919, %v930
        %v935 = vmul.bf16 %v920, %v930
        %v936 = vld [vmem:[%s1] sm:$0xf]
        %v937 = vld [vmem:[%s1 + $0x4] sm:$0xf]
        %v938 = vld [vmem:[%s1 + $0x8] sm:$0xf]
        %v939 = vld [vmem:[%s1 + $0xc] sm:$0xf]
        %v940 = vmul.bf16 %v936, %v930
        %v941 = vmul.bf16 %v937, %v930
        %v942 = vmul.bf16 %v938, %v930
        %v943 = vmul.bf16 %v939, %v930
        %v944 = vld [vmem:[%s2] sm:$0xf]
        %v945 = vld [vmem:[%s2 + $0x4] sm:$0xf]
        %v946 = vld [vmem:[%s2 + $0x8] sm:$0xf]
        %v947 = vld [vmem:[%s2 + $0xc] sm:$0xf]
        %v949 = vpack.i.b16 %v916, %v916
        %v951 = vlaneseq
        %v952 = vshrl.u32 %v951, 7
        %v953 = vsub.s32 0, %v952
        %v954 = vrot.slane %v949, %v953
        %v956 = vunpack.c.l.b16 %v954
        %v957 = vpack.c.b16 %v956, %v956
        %v959 = vmul.bf16 %v944, %v957
        %v960 = vmul.bf16 %v945, %v957
        %v961 = vmul.bf16 %v946, %v957
        %v962 = vmul.bf16 %v947, %v957
        %v963 = vld [vmem:[%s3] sm:$0xf]
        %v964 = vld [vmem:[%s3 + $0x4] sm:$0xf]
        %v965 = vld [vmem:[%s3 + $0x8] sm:$0xf]
        %v966 = vld [vmem:[%s3 + $0xc] sm:$0xf]
        %v967 = vmul.bf16 %v963, %v957
        %v968 = vmul.bf16 %v964, %v957
        %v969 = vmul.bf16 %v965, %v957
        %v970 = vmul.bf16 %v966, %v957
        %v975 = vunpack.c.l.b16 %v932
        %v976 = vunpack.c.l.b16 %v933
        %v977 = vunpack.c.l.b16 %v934
        %v978 = vunpack.c.l.b16 %v935
        %v979 = vpack.c.b16 %v976, %v975
        %v980 = vpack.c.b16 %v978, %v977
        %v987 = vunpack.c.l.b16 %v959
        %v988 = vunpack.c.l.b16 %v960
        %v989 = vunpack.c.l.b16 %v961
        %v990 = vunpack.c.l.b16 %v962
        %v991 = vpack.c.b16 %v988, %v987
        %v992 = vpack.c.b16 %v990, %v989
        %v995 = vld [vmem:[%s842] sm:$0xff]
        %v996 = vld [vmem:[%s846] sm:$0xff]
        %v997 = vld [vmem:[%s850] sm:$0xff]
        %v998 = vpack.c.bf16 %v995, %v995
        %v999 = vpack.c.bf16 %v996, %v996
        %v1000 = vpack.c.bf16 %v997, %v997
        %v1001 = vlaneseq
        %v1002 = vshrl.u32 %v1001, 7
        %v1003 = vcvt.s32.f32 %v1002
        %vm1004 = vcmask 261120
        %v1006 = vsel %vm1004, %v998, 0
        %1008 = vmatprep.subr.bf16.mxu0 %v991
        %1009 = vmatpush1.bf16.msra.mxu0 %v979
        %1010 = vmatprep.subr.bf16.mxu0 %v992
        %1011 = vmatpush1.bf16.msra.mxu0 %v980
        %1012 = vmatprep.subr.bf16.mxu0 0
        %1013 = vmatpush1.bf16.msra.mxu0 0
        %1014 = vmatprep.subr.bf16.mxu0 0
        %1015 = vmatpush1.bf16.msra.mxu0 0
        %1016 = vmatprep.subr.bf16.mxu0 0
        %1017 = vmatpush1.bf16.msra.mxu0 0
        %1018 = vmatprep.subr.bf16.mxu0 0
        %1019 = vmatpush1.bf16.msra.mxu0 0
        %1020 = vmatprep.subr.bf16.mxu0 0
        %1021 = vmatpush1.bf16.msra.mxu0 0
        %1022 = vmatprep.subr.bf16.mxu0 0
        %1023 = vmatpush1.bf16.msra.mxu0 0
        %1024 = vmatprep.subr.bf16.mxu0 0
        %1025 = vmatpush1.bf16.msra.mxu0 0
        %1026 = vmatprep.subr.bf16.mxu0 0
        %1027 = vmatpush1.bf16.msra.mxu0 0
        %1028 = vmatprep.subr.bf16.mxu0 0
        %1029 = vmatpush1.bf16.msra.mxu0 0
        %1030 = vmatprep.subr.bf16.mxu0 0
        %1031 = vmatpush1.bf16.msra.mxu0 0
        %1032 = vmatprep.subr.bf16.mxu0 0
        %1033 = vmatpush1.bf16.msra.mxu0 0
        %1034 = vmatprep.subr.bf16.mxu0 0
        %1035 = vmatpush1.bf16.msra.mxu0 0
        %1036 = vmatprep.subr.bf16.mxu0 0
        %1037 = vmatpush1.bf16.msra.mxu0 0
        %1038 = vmatprep.subr.bf16.mxu0 0
        %1039 = vmatpush1.bf16.msra.mxu0 0
        %1040 = vmatprep.mubr.bf16.mxu0 0
        %1041 = vmatmul.mubr.bf16.gmra.mrb[0].mxu0 %v1006
        %v1042 = vpop.f32.mrb[0].mxu0
        %v1043 = vadd.f32 0.0, %v1042
        %v1044 = vpop.f32.mrb[0].mxu0
        %v1045 = vadd.f32 0.0, %v1044
        %v1046 = vpop.f32.mrb[0].mxu0
        %v1047 = vpop.f32.mrb[0].mxu0
        %1048 = vdwg.mxu0
        %vm1049 = vcmp.gt.f32.partialorder %v913, 0.0
        %v1050 = vsel %vm1049, 1, 0
        %v1051 = vlaneseq
        %v1052 = vshrl.u32 %v1051, 7
        %v1053 = vsub.s32 0, %v1052
        %v1054 = vrot.slane %v1050, %v1053
        %vm1055 = vcmp.eq.s32.totalorder %v1054, 1
        %v1056 = vsel %vm1055, %v1043, -1e+30
        %1057 = vmax.xlane.f32.xlu0 %v1056
        %v1058 = vpop.xlane.xlu0 %1057
        %v1059 = vsub.f32 %v1056, %v1058
        %v1060 = vmul.f32 %v1059, 1.442695
        %v1061 = vpow.pop %v1060
        %v1062 = vsel %vm1055, %v1061, 0.0
        %1063 = vadd.xlane.f32.xlu0 %v1062
        %v1064 = vpop.xlane.xlu0 %1063
        %v1065 = vmax.f32 %v1064, 1e-30
        %v1066 = vrcp.pop %v1065
        %v1067 = vmul.f32 %v1062, %v1066
        %vm1068 = vcmp.gt.f32.partialorder %v914, 0.0
        %v1069 = vsel %vm1068, 1, 0
        %v1070 = vlaneseq
        %v1071 = vshrl.u32 %v1070, 7
        %v1072 = vsub.s32 0, %v1071
        %v1073 = vrot.slane %v1069, %v1072
        %vm1074 = vcmp.eq.s32.totalorder %v1073, 1
        %v1075 = vsel %vm1074, %v1045, -1e+30
        %1076 = vmax.xlane.f32.xlu0 %v1075
        %v1077 = vpop.xlane.xlu0 %1076
        %v1078 = vsub.f32 %v1075, %v1077
        %v1079 = vmul.f32 %v1078, 1.442695
        %v1080 = vpow.pop %v1079
        %v1081 = vsel %vm1074, %v1080, 0.0
        %1082 = vadd.xlane.f32.xlu0 %v1081
        %v1083 = vpop.xlane.xlu0 %1082
        %v1084 = vmax.f32 %v1083, 1e-30
        %v1085 = vrcp.pop %v1084
        %v1086 = vmul.f32 %v1081, %v1085
        %v1087 = vrot.slane %v1043, 4
        %v1088 = vmax.f32 %v1043, %v1087
        %v1089 = vrot.slane %v1088, 2
        %v1090 = vmax.f32 %v1088, %v1089
        %v1091 = vrot.slane %v1090, 1
        %v1092 = vmax.f32 %v1090, %v1091
        %vm1093 = vcmp.ge.f32.partialorder %v1043, %v1092
        %v1094 = vsel %vm1093, %v1003, 8.0
        %v1095 = vrot.slane %v1094, 4
        %v1096 = vmin.f32 %v1094, %v1095
        %v1097 = vrot.slane %v1096, 2
        %v1098 = vmin.f32 %v1096, %v1097
        %v1099 = vrot.slane %v1098, 1
        %v1100 = vmin.f32 %v1098, %v1099
        %vm1101 = vcmp.eq.f32.partialorder %v1003, %v1100
        %v1102 = vsel %vm1101, 1, 0
        %v1103 = vcvt.s32.f32 %v1102
        %v1104 = vrot.slane %v1045, 4
        %v1105 = vmax.f32 %v1045, %v1104
        %v1106 = vrot.slane %v1105, 2
        %v1107 = vmax.f32 %v1105, %v1106
        %v1108 = vrot.slane %v1107, 1
        %v1109 = vmax.f32 %v1107, %v1108
        %vm1110 = vcmp.ge.f32.partialorder %v1045, %v1109
        %v1111 = vsel %vm1110, %v1003, 8.0
        %v1112 = vrot.slane %v1111, 4
        %v1113 = vmin.f32 %v1111, %v1112
        %v1114 = vrot.slane %v1113, 2
        %v1115 = vmin.f32 %v1113, %v1114
        %v1116 = vrot.slane %v1115, 1
        %v1117 = vmin.f32 %v1115, %v1116
        %vm1118 = vcmp.eq.f32.partialorder %v1003, %v1117
        %v1119 = vsel %vm1118, 1, 0
        %v1120 = vcvt.s32.f32 %v1119
        %v1121 = vmul.f32 %v1103, %v1067
        %v1122 = vpack.c.bf16 %v1121, %v1121
        %v1123 = vmul.f32 %v1120, %v1086
        %v1124 = vpack.c.bf16 %v1123, %v1123
        %v1129 = vunpack.c.l.b16 %v940
        %v1130 = vunpack.c.l.b16 %v941
        %v1131 = vunpack.c.l.b16 %v942
        %v1132 = vunpack.c.l.b16 %v943
        %v1133 = vpack.c.b16 %v1130, %v1129
        %v1134 = vpack.c.b16 %v1132, %v1131
        %v1141 = vunpack.c.l.b16 %v967
        %v1142 = vunpack.c.l.b16 %v968
        %v1143 = vunpack.c.l.b16 %v969
        %v1144 = vunpack.c.l.b16 %v970
        %v1145 = vpack.c.b16 %v1142, %v1141
        %v1146 = vpack.c.b16 %v1144, %v1143
        %1149 = vmatprep.subr.bf16.mxu0 0
        %1150 = vmatpush1.bf16.xpose.msra.mxu0 %v979
        %1151 = vmatprep.subr.bf16.mxu0 0
        %1152 = vmatpush1.bf16.xpose.msra.mxu0 %v980
        %1153 = vmatprep.subr.bf16.mxu0 0
        %1154 = vmatpush1.bf16.xpose.msra.mxu0 %v1133
        %1155 = vmatprep.subr.bf16.mxu0 0
        %1156 = vmatpush1.bf16.xpose.msra.mxu0 %v1134
        %1157 = vmatprep.subr.bf16.mxu0 0
        %1158 = vmatpush1.bf16.xpose.msra.mxu0 0
        %1159 = vmatprep.subr.bf16.mxu0 0
        %1160 = vmatpush1.bf16.xpose.msra.mxu0 0
        %1161 = vmatprep.subr.bf16.mxu0 0
        %1162 = vmatpush1.bf16.xpose.msra.mxu0 0
        %1163 = vmatprep.subr.bf16.mxu0 0
        %1164 = vmatpush1.bf16.xpose.msra.mxu0 0
        %1165 = vmatprep.subr.bf16.mxu0 0
        %1166 = vmatpush1.bf16.xpose.msra.mxu0 0
        %1167 = vmatprep.subr.bf16.mxu0 0
        %1168 = vmatpush1.bf16.xpose.msra.mxu0 0
        %1169 = vmatprep.subr.bf16.mxu0 0
        %1170 = vmatpush1.bf16.xpose.msra.mxu0 0
        %1171 = vmatprep.subr.bf16.mxu0 0
        %1172 = vmatpush1.bf16.xpose.msra.mxu0 0
        %1173 = vmatprep.subr.bf16.mxu0 0
        %1174 = vmatpush1.bf16.xpose.msra.mxu0 0
        %1175 = vmatprep.subr.bf16.mxu0 0
        %1176 = vmatpush1.bf16.xpose.msra.mxu0 0
        %1177 = vmatprep.subr.bf16.mxu0 0
        %1178 = vmatpush1.bf16.xpose.msra.mxu0 0
        %1179 = vmatprep.subr.bf16.mxu0 0
        %1180 = vmatpush1.bf16.xpose.msra.mxu0 0
        %1181 = vmatprep.mubr.bf16.mxu0 0
        %1182 = vmatmul.mubr.bf16.gmra.mrb[0].mxu0 %v1122
        %v1183 = vpop.f32.mrb[0].mxu0
        %v1184 = vadd.f32 0.0, %v1183
        %v1185 = vpop.f32.mrb[0].mxu0
        %v1186 = vpop.f32.mrb[0].mxu0
        %v1187 = vpop.f32.mrb[0].mxu0
        %1188 = vdwg.mxu0
        %1189 = vmatprep.subr.bf16.mxu0 0
        %1190 = vmatpush1.bf16.xpose.msra.mxu0 %v991
        %1191 = vmatprep.subr.bf16.mxu0 0
        %1192 = vmatpush1.bf16.xpose.msra.mxu0 %v992
        %1193 = vmatprep.subr.bf16.mxu0 0
        %1194 = vmatpush1.bf16.xpose.msra.mxu0 %v1145
        %1195 = vmatprep.subr.bf16.mxu0 0
        %1196 = vmatpush1.bf16.xpose.msra.mxu0 %v1146
        %1197 = vmatprep.subr.bf16.mxu0 0
        %1198 = vmatpush1.bf16.xpose.msra.mxu0 0
        %1199 = vmatprep.subr.bf16.mxu0 0
        %1200 = vmatpush1.bf16.xpose.msra.mxu0 0
        %1201 = vmatprep.subr.bf16.mxu0 0
        %1202 = vmatpush1.bf16.xpose.msra.mxu0 0
        %1203 = vmatprep.subr.bf16.mxu0 0
        %1204 = vmatpush1.bf16.xpose.msra.mxu0 0
        %1205 = vmatprep.subr.bf16.mxu0 0
        %1206 = vmatpush1.bf16.xpose.msra.mxu0 0
        %1207 = vmatprep.subr.bf16.mxu0 0
        %1208 = vmatpush1.bf16.xpose.msra.mxu0 0
        %1209 = vmatprep.subr.bf16.mxu0 0
        %1210 = vmatpush1.bf16.xpose.msra.mxu0 0
        %1211 = vmatprep.subr.bf16.mxu0 0
        %1212 = vmatpush1.bf16.xpose.msra.mxu0 0
        %1213 = vmatprep.subr.bf16.mxu0 0
        %1214 = vmatpush1.bf16.xpose.msra.mxu0 0
        %1215 = vmatprep.subr.bf16.mxu0 0
        %1216 = vmatpush1.bf16.xpose.msra.mxu0 0
        %1217 = vmatprep.subr.bf16.mxu0 0
        %1218 = vmatpush1.bf16.xpose.msra.mxu0 0
        %1219 = vmatprep.subr.bf16.mxu0 0
        %1220 = vmatpush1.bf16.xpose.msra.mxu0 0
        %1221 = vmatprep.mubr.bf16.mxu0 0
        %1222 = vmatmul.mubr.bf16.gmra.mrb[0].mxu0 %v1124
        %v1223 = vpop.f32.mrb[0].mxu0
        %v1224 = vadd.f32 0.0, %v1223
        %v1225 = vpop.f32.mrb[0].mxu0
        %v1226 = vpop.f32.mrb[0].mxu0
        %v1227 = vpop.f32.mrb[0].mxu0
        %1228 = vdwg.mxu0
        %v1229 = vmul.f32 %v1184, %v1184
        %v1230 = vsel %vm1004, %v1229, 0.0
        %1231 = vadd.xlane.f32.xlu0 %v1230
        %v1232 = vpop.xlane.xlu0 %1231
        %v1233 = vmax.f32 %v1232, 1e-24
        %v1234 = vrsqrt.pop %v1233
        %v1235 = vmul.f32 %v1184, %v1234
        %v1236 = vmul.f32 %v1235, 0.25
        %v1237 = vmul.f32 %v1224, %v1224
        %v1238 = vsel %vm1004, %v1237, 0.0
        %1239 = vadd.xlane.f32.xlu0 %v1238
        %v1240 = vpop.xlane.xlu0 %1239
        %v1241 = vmax.f32 %v1240, 1e-24
        %v1242 = vrsqrt.pop %v1241
        %v1243 = vmul.f32 %v1224, %v1242
        %v1244 = vmul.f32 %v1243, 0.25
        %v1245 = vadd.f32 %v1236, %v1244
        %v1246 = vmul.f32 %v995, 0.5
        %v1247 = vadd.f32 %v1245, %v1246
        %v1248 = vmul.f32 %v1247, %v1247
        %v1249 = vsel %vm1004, %v1248, 0.0
        %1250 = vadd.xlane.f32.xlu0 %v1249
        %v1251 = vpop.xlane.xlu0 %1250
        %v1252 = vmax.f32 %v1251, 1e-24
        %v1253 = vrsqrt.pop %v1252
        %v1254 = vmul.f32 %v1247, %v1253
        %1256 = vrot.lane.b32.xlu0 %v1184, 96
        %v1257 = vpop.permute.xlu0 %1256
        %v1259 = vsel %vm1004, %v1257, 0.0
        %1260 = vadd.xlane.f32.xlu0 %v1259
        %v1261 = vpop.xlane.xlu0 %1260
        %v1262 = vrcp.pop 32.0
        %v1263 = vmul.f32 %v1261, %v1262
        %v1264 = vsub.f32 %v1184, %v1263
        %v1265 = vmul.f32 %v1264, %v1264
        %1267 = vrot.lane.b32.xlu0 %v1265, 96
        %v1268 = vpop.permute.xlu0 %1267
        %v1270 = vsel %vm1004, %v1268, 0.0
        %1271 = vadd.xlane.f32.xlu0 %v1270
        %v1272 = vpop.xlane.xlu0 %1271
        %v1273 = vmul.f32 %v1272, %v1262
        %v1274 = vadd.f32 %v1273, 1e-05
        %v1275 = vrsqrt.pop %v1274
        %v1276 = vmul.f32 %v1264, %v1275
        %v1277 = vmul.f32 %v1276, 0.5
        %v1278 = vmul.f32 %v996, 0.5
        %1280 = vrot.lane.b32.xlu0 %v1278, 32
        %v1281 = vpop.permute.xlu0 %1280
        %v1283 = vadd.f32 %v1277, %v1281
        %1285 = vrot.lane.b32.xlu0 %v1224, 96
        %v1286 = vpop.permute.xlu0 %1285
        %v1288 = vsel %vm1004, %v1286, 0.0
        %1289 = vadd.xlane.f32.xlu0 %v1288
        %v1290 = vpop.xlane.xlu0 %1289
        %v1291 = vmul.f32 %v1290, %v1262
        %v1292 = vsub.f32 %v1224, %v1291
        %v1293 = vmul.f32 %v1292, %v1292
        %1295 = vrot.lane.b32.xlu0 %v1293, 96
        %v1296 = vpop.permute.xlu0 %1295
        %v1298 = vsel %vm1004, %v1296, 0.0
        %1299 = vadd.xlane.f32.xlu0 %v1298
        %v1300 = vpop.xlane.xlu0 %1299
        %v1301 = vmul.f32 %v1300, %v1262
        %v1302 = vadd.f32 %v1301, 1e-05
        %v1303 = vrsqrt.pop %v1302
        %v1304 = vmul.f32 %v1292, %v1303
        %v1305 = vmul.f32 %v1304, 0.5
        %v1306 = vmul.f32 %v997, 0.5
        %1308 = vrot.lane.b32.xlu0 %v1306, 32
        %v1309 = vpop.permute.xlu0 %1308
        %v1311 = vadd.f32 %v1305, %v1309
        %1312 = vst.msk [vmem:[%s862] sm:$0xff] %vm1004, %v1254
        %1314 = vrot.lane.b32.xlu0 %v1283, 96
        %v1315 = vpop.permute.xlu0 %1314
        %1317 = vst.msk [vmem:[%s866] sm:$0xff] %vm1004, %v1315
        %1319 = vrot.lane.b32.xlu0 %v1311, 96
        %v1320 = vpop.permute.xlu0 %1319
        %1322 = vst.msk [vmem:[%s870] sm:$0xff] %vm1004, %v1320
        %v1323 = vpack.c.bf16 %v1254, %v1254
        %v1325 = vsel %vm1004, %v1323, 0
        %1327 = vmatprep.subr.bf16.mxu0 %v991
        %1328 = vmatpush1.bf16.msra.mxu0 %v979
        %1329 = vmatprep.subr.bf16.mxu0 %v992
        %1330 = vmatpush1.bf16.msra.mxu0 %v980
        %1331 = vmatprep.subr.bf16.mxu0 0
        %1332 = vmatpush1.bf16.msra.mxu0 0
        %1333 = vmatprep.subr.bf16.mxu0 0
        %1334 = vmatpush1.bf16.msra.mxu0 0
        %1335 = vmatprep.subr.bf16.mxu0 0
        %1336 = vmatpush1.bf16.msra.mxu0 0
        %1337 = vmatprep.subr.bf16.mxu0 0
        %1338 = vmatpush1.bf16.msra.mxu0 0
        %1339 = vmatprep.subr.bf16.mxu0 0
        %1340 = vmatpush1.bf16.msra.mxu0 0
        %1341 = vmatprep.subr.bf16.mxu0 0
        %1342 = vmatpush1.bf16.msra.mxu0 0
        %1343 = vmatprep.subr.bf16.mxu0 0
        %1344 = vmatpush1.bf16.msra.mxu0 0
        %1345 = vmatprep.subr.bf16.mxu0 0
        %1346 = vmatpush1.bf16.msra.mxu0 0
        %1347 = vmatprep.subr.bf16.mxu0 0
        %1348 = vmatpush1.bf16.msra.mxu0 0
        %1349 = vmatprep.subr.bf16.mxu0 0
        %1350 = vmatpush1.bf16.msra.mxu0 0
        %1351 = vmatprep.subr.bf16.mxu0 0
        %1352 = vmatpush1.bf16.msra.mxu0 0
        %1353 = vmatprep.subr.bf16.mxu0 0
        %1354 = vmatpush1.bf16.msra.mxu0 0
        %1355 = vmatprep.subr.bf16.mxu0 0
        %1356 = vmatpush1.bf16.msra.mxu0 0
        %1357 = vmatprep.subr.bf16.mxu0 0
        %1358 = vmatpush1.bf16.msra.mxu0 0
        %1359 = vmatprep.mubr.bf16.mxu0 0
        %1360 = vmatmul.mubr.bf16.gmra.mrb[0].mxu0 %v1325
        %v1361 = vpop.f32.mrb[0].mxu0
        %v1362 = vadd.f32 0.0, %v1361
        %v1363 = vpop.f32.mrb[0].mxu0
        %v1364 = vadd.f32 0.0, %v1363
        %v1365 = vpop.f32.mrb[0].mxu0
        %v1366 = vpop.f32.mrb[0].mxu0
        %1367 = vdwg.mxu0
        %v1368 = vrot.slane %v1362, 4
        %v1369 = vmax.f32 %v1362, %v1368
        %v1370 = vrot.slane %v1369, 2
        %v1371 = vmax.f32 %v1369, %v1370
        %v1372 = vrot.slane %v1371, 1
        %v1373 = vmax.f32 %v1371, %v1372
        %v1374 = vrot.slane %v1364, 4
        %v1375 = vmax.f32 %v1364, %v1374
        %v1376 = vrot.slane %v1375, 2
        %v1377 = vmax.f32 %v1375, %v1376
        %v1378 = vrot.slane %v1377, 1
        %v1379 = vmax.f32 %v1377, %v1378
        %v1380 = vsub.f32 %v1362, %v1373
        %v1381 = vsub.f32 %v1364, %v1379
        %v1382 = vmul.f32 %v1380, 1.442695
        %v1383 = vpow.pop %v1382
        %v1384 = vmul.f32 %v1381, 1.442695
        %v1385 = vpow.pop %v1384
        %v1386 = vrot.slane %v1383, 4
        %v1387 = vadd.f32 %v1383, %v1386
        %v1388 = vrot.slane %v1387, 2
        %v1389 = vadd.f32 %v1387, %v1388
        %v1390 = vrot.slane %v1389, 1
        %v1391 = vadd.f32 %v1389, %v1390
        %v1392 = vrot.slane %v1385, 4
        %v1393 = vadd.f32 %v1385, %v1392
        %v1394 = vrot.slane %v1393, 2
        %v1395 = vadd.f32 %v1393, %v1394
        %v1396 = vrot.slane %v1395, 1
        %v1397 = vadd.f32 %v1395, %v1396
        %v1398 = vrcp.pop %v1391
        %v1399 = vrcp.pop %v1397
        %v1400 = vmul.f32 %v1383, %v1398
        %v1401 = vmul.f32 %v1385, %v1399
        %v1402 = vpack.c.bf16 %v1283, %v1283
        %v1403 = vpack.c.bf16 %v1311, %v1311
        %v1404 = vld [vmem:[%s854] sm:$0xf]
        %v1405 = vld [vmem:[%s858] sm:$0xf]
        %1407 = vrot.lane.b32.xlu0 %v1402, 96
        %v1408 = vpop.permute.xlu0 %1407
        %v1410 = vunpack.c.l.b16 %v1404
        %v1411 = vpack.c.b16 %v1410, %v1410
        %1412 = vrot.lane.b32.xlu0 %v1411, 64
        %v1413 = vpop.permute.xlu0 %1412
        %v1415 = vunpack.c.l.b16 %v1405
        %v1416 = vpack.c.b16 %v1415, %v1415
        %1417 = vrot.lane.b32.xlu0 %v1416, 96
        %v1418 = vpop.permute.xlu0 %1417
        %v1421 = vsel %vm1004, %v1408, %v1403
        %vm1422 = vcmask 523264
        %v1424 = vsel %vm1422, %v1421, %v1413
        %vm1425 = vcmask 785408
        %v1427 = vsel %vm1425, %v1424, %v1418
        %v1429 = vpack.c.bf16 %v1400, %v1400
        %v1430 = vpack.c.bf16 %v1401, %v1401
        %1431 = vxpose.xlu0.c.b16.start [1/8] %v1427, 128
        %1432 = vxpose.xlu0.c.b16.cont [2/8] 0, 128
        %1433 = vxpose.xlu0.c.b16.cont [3/8] 0, 128
        %1434 = vxpose.xlu0.c.b16.cont [4/8] 0, 128
        %1435 = vxpose.xlu0.c.b16.cont [5/8] 0, 128
        %1436 = vxpose.xlu0.c.b16.cont [6/8] 0, 128
        %1437 = vxpose.xlu0.c.b16.cont [7/8] 0, 128
        %1438 = vxpose.xlu0.c.b16.end [8/8] 0, 128
        %v1439 = vpop.trf.xlu0
        %v1440 = vpop.trf.xlu0
        %v1441 = vpop.trf.xlu0
        %v1442 = vpop.trf.xlu0
        %v1443 = vpop.trf.xlu0
        %v1444 = vpop.trf.xlu0
        %v1445 = vpop.trf.xlu0
        %v1446 = vpop.trf.xlu0
        %vm1447 = vcmask 64512
        %v1449 = vsel %vm1447, %v1439, 0
        %v1452 = vsel %vm1447, %v1440, 0
        %v1455 = vsel %vm1447, %v1441, 0
        %v1458 = vsel %vm1447, %v1442, 0
        %v1461 = vsel %vm1447, %v1443, 0
        %v1464 = vsel %vm1447, %v1444, 0
        %v1467 = vsel %vm1447, %v1445, 0
        %v1470 = vsel %vm1447, %v1446, 0
        %vm1472 = vcmask 1043456
        %v1474 = vsel %vm1472, %v1429, 0
        %v1477 = vsel %vm1472, %v1430, 0
        %1479 = vmatprep.subr.bf16.mxu0 %v1477
        %1480 = vmatpush1.bf16.msra.mxu0 %v1474
        %1481 = vmatprep.subr.bf16.mxu0 0
        %1482 = vmatpush1.bf16.msra.mxu0 0
        %1483 = vmatprep.subr.bf16.mxu0 0
        %1484 = vmatpush1.bf16.msra.mxu0 0
        %1485 = vmatprep.subr.bf16.mxu0 0
        %1486 = vmatpush1.bf16.msra.mxu0 0
        %1487 = vmatprep.subr.bf16.mxu0 0
        %1488 = vmatpush1.bf16.msra.mxu0 0
        %1489 = vmatprep.subr.bf16.mxu0 0
        %1490 = vmatpush1.bf16.msra.mxu0 0
        %1491 = vmatprep.subr.bf16.mxu0 0
        %1492 = vmatpush1.bf16.msra.mxu0 0
        %1493 = vmatprep.subr.bf16.mxu0 0
        %1494 = vmatpush1.bf16.msra.mxu0 0
        %1495 = vmatprep.subr.bf16.mxu0 0
        %1496 = vmatpush1.bf16.msra.mxu0 0
        %1497 = vmatprep.subr.bf16.mxu0 0
        %1498 = vmatpush1.bf16.msra.mxu0 0
        %1499 = vmatprep.subr.bf16.mxu0 0
        %1500 = vmatpush1.bf16.msra.mxu0 0
        %1501 = vmatprep.subr.bf16.mxu0 0
        %1502 = vmatpush1.bf16.msra.mxu0 0
        %1503 = vmatprep.subr.bf16.mxu0 0
        %1504 = vmatpush1.bf16.msra.mxu0 0
        %1505 = vmatprep.subr.bf16.mxu0 0
        %1506 = vmatpush1.bf16.msra.mxu0 0
        %1507 = vmatprep.subr.bf16.mxu0 0
        %1508 = vmatpush1.bf16.msra.mxu0 0
        %1509 = vmatprep.subr.bf16.mxu0 0
        %1510 = vmatpush1.bf16.msra.mxu0 0
        %1511 = vmatprep.mubr.bf16.mxu0 0
        %1512 = vmatmul.mubr.bf16.gmra.mrb[0].mxu0 %v1449
        %v1513 = vpop.f32.mrb[0].mxu0
        %v1514 = vadd.f32 0.0, %v1513
        %v1515 = vpop.f32.mrb[0].mxu0
        %v1516 = vadd.f32 0.0, %v1515
        %v1517 = vpop.f32.mrb[0].mxu0
        %v1518 = vadd.f32 0.0, %v1517
        %v1519 = vpop.f32.mrb[0].mxu0
        %v1520 = vadd.f32 0.0, %v1519
        %1521 = vmatprep.mubr.bf16.mxu0 0
        %1522 = vmatmul.mubr.bf16.gmra.mrb[0].mxu0 %v1452
        %v1523 = vpop.f32.mrb[0].mxu0
        %v1524 = vadd.f32 0.0, %v1523
        %v1525 = vpop.f32.mrb[0].mxu0
        %v1526 = vadd.f32 0.0, %v1525
        %v1527 = vpop.f32.mrb[0].mxu0
        %v1528 = vadd.f32 0.0, %v1527
        %v1529 = vpop.f32.mrb[0].mxu0
        %v1530 = vadd.f32 0.0, %v1529
        %1531 = vmatprep.mubr.bf16.mxu0 0
        %1532 = vmatmul.mubr.bf16.gmra.mrb[0].mxu0 %v1455
        %v1533 = vpop.f32.mrb[0].mxu0
        %v1534 = vadd.f32 0.0, %v1533
        %v1535 = vpop.f32.mrb[0].mxu0
        %v1536 = vadd.f32 0.0, %v1535
        %v1537 = vpop.f32.mrb[0].mxu0
        %v1538 = vadd.f32 0.0, %v1537
        %v1539 = vpop.f32.mrb[0].mxu0
        %v1540 = vadd.f32 0.0, %v1539
        %1541 = vmatprep.mubr.bf16.mxu0 0
        %1542 = vmatmul.mubr.bf16.gmra.mrb[0].mxu0 %v1458
        %v1543 = vpop.f32.mrb[0].mxu0
        %v1544 = vadd.f32 0.0, %v1543
        %v1545 = vpop.f32.mrb[0].mxu0
        %v1546 = vadd.f32 0.0, %v1545
        %v1547 = vpop.f32.mrb[0].mxu0
        %v1548 = vadd.f32 0.0, %v1547
        %v1549 = vpop.f32.mrb[0].mxu0
        %v1550 = vadd.f32 0.0, %v1549
        %1551 = vmatprep.mubr.bf16.mxu0 0
        %1552 = vmatmul.mubr.bf16.gmra.mrb[0].mxu0 %v1461
        %v1553 = vpop.f32.mrb[0].mxu0
        %v1554 = vadd.f32 0.0, %v1553
        %v1555 = vpop.f32.mrb[0].mxu0
        %v1556 = vpop.f32.mrb[0].mxu0
        %v1557 = vadd.f32 0.0, %v1556
        %v1558 = vpop.f32.mrb[0].mxu0
        %1559 = vmatprep.mubr.bf16.mxu0 0
        %1560 = vmatmul.mubr.bf16.gmra.mrb[0].mxu0 %v1464
        %v1561 = vpop.f32.mrb[0].mxu0
        %v1562 = vadd.f32 0.0, %v1561
        %v1563 = vpop.f32.mrb[0].mxu0
        %v1564 = vpop.f32.mrb[0].mxu0
        %v1565 = vadd.f32 0.0, %v1564
        %v1566 = vpop.f32.mrb[0].mxu0
        %1567 = vmatprep.mubr.bf16.mxu0 0
        %1568 = vmatmul.mubr.bf16.gmra.mrb[0].mxu0 %v1467
        %v1569 = vpop.f32.mrb[0].mxu0
        %v1570 = vpop.f32.mrb[0].mxu0
        %v1571 = vadd.f32 0.0, %v1570
        %v1572 = vpop.f32.mrb[0].mxu0
        %v1573 = vpop.f32.mrb[0].mxu0
        %v1574 = vadd.f32 0.0, %v1573
        %1575 = vmatprep.mubr.bf16.mxu0 0
        %1576 = vmatmul.mubr.bf16.gmra.mrb[0].mxu0 %v1470
        %v1577 = vpop.f32.mrb[0].mxu0
        %v1578 = vpop.f32.mrb[0].mxu0
        %v1579 = vadd.f32 0.0, %v1578
        %v1580 = vpop.f32.mrb[0].mxu0
        %v1581 = vpop.f32.mrb[0].mxu0
        %v1582 = vadd.f32 0.0, %v1581
        %1583 = vdwg.mxu0
        %v1584 = vld [vmem:[%s15] sm:$0xff]
        %v1585 = vld [vmem:[%s15 + $0x8] sm:$0xff]
        %v1586 = vld [vmem:[%s15 + $0x10] sm:$0xff]
        %v1587 = vld [vmem:[%s15 + $0x18] sm:$0xff]
        %v1588 = vsel %vm1055, %v1514, %v1584
        %v1589 = vsel %vm1055, %v1518, %v1585
        %v1590 = vsel %vm1055, %v1524, %v1586
        %v1591 = vsel %vm1055, %v1528, %v1587
        %1592 = vst [vmem:[%s15] sm:$0xff] %v1588
        %1593 = vst [vmem:[%s15 + $0x8] sm:$0xff] %v1589
        %1594 = vst [vmem:[%s15 + $0x10] sm:$0xff] %v1590
        %1595 = vst [vmem:[%s15 + $0x18] sm:$0xff] %v1591
        %v1596 = vld [vmem:[%s16] sm:$0xff]
        %v1597 = vld [vmem:[%s16 + $0x8] sm:$0xff]
        %v1598 = vld [vmem:[%s16 + $0x10] sm:$0xff]
        %v1599 = vld [vmem:[%s16 + $0x18] sm:$0xff]
        %v1600 = vsel %vm1055, %v1534, %v1596
        %v1601 = vsel %vm1055, %v1538, %v1597
        %v1602 = vsel %vm1055, %v1544, %v1598
        %v1603 = vsel %vm1055, %v1548, %v1599
        %1604 = vst [vmem:[%s16] sm:$0xff] %v1600
        %1605 = vst [vmem:[%s16 + $0x8] sm:$0xff] %v1601
        %1606 = vst [vmem:[%s16 + $0x10] sm:$0xff] %v1602
        %1607 = vst [vmem:[%s16 + $0x18] sm:$0xff] %v1603
        %v1608 = vld [vmem:[%s17] sm:$0xff]
        %v1609 = vld [vmem:[%s17 + $0x8] sm:$0xff]
        %v1610 = vld [vmem:[%s17 + $0x10] sm:$0xff]
        %v1611 = vld [vmem:[%s17 + $0x18] sm:$0xff]
        %v1612 = vsel %vm1074, %v1516, %v1608
        %v1613 = vsel %vm1074, %v1520, %v1609
        %v1614 = vsel %vm1074, %v1526, %v1610
        %v1615 = vsel %vm1074, %v1530, %v1611
        %1616 = vst [vmem:[%s17] sm:$0xff] %v1612
        %1617 = vst [vmem:[%s17 + $0x8] sm:$0xff] %v1613
        %1618 = vst [vmem:[%s17 + $0x10] sm:$0xff] %v1614
        %1619 = vst [vmem:[%s17 + $0x18] sm:$0xff] %v1615
        %v1620 = vld [vmem:[%s18] sm:$0xff]
        %v1621 = vld [vmem:[%s18 + $0x8] sm:$0xff]
        %v1622 = vld [vmem:[%s18 + $0x10] sm:$0xff]
        %v1623 = vld [vmem:[%s18 + $0x18] sm:$0xff]
        %v1624 = vsel %vm1074, %v1536, %v1620
        %v1625 = vsel %vm1074, %v1540, %v1621
        %v1626 = vsel %vm1074, %v1546, %v1622
        %v1627 = vsel %vm1074, %v1550, %v1623
        %1628 = vst [vmem:[%s18] sm:$0xff] %v1624
        %1629 = vst [vmem:[%s18 + $0x8] sm:$0xff] %v1625
        %1630 = vst [vmem:[%s18 + $0x10] sm:$0xff] %v1626
        %1631 = vst [vmem:[%s18 + $0x18] sm:$0xff] %v1627
        %v1632 = vld [vmem:[%s19] sm:$0xff]
        %v1633 = vld [vmem:[%s19 + $0x8] sm:$0xff]
        %v1634 = vld [vmem:[%s19 + $0x10] sm:$0xff]
        %v1635 = vld [vmem:[%s19 + $0x18] sm:$0xff]
        %v1636 = vsel %vm1055, %v1554, %v1632
        %v1637 = vsel %vm1055, %v1557, %v1633
        %v1638 = vsel %vm1055, %v1562, %v1634
        %v1639 = vsel %vm1055, %v1565, %v1635
        %1640 = vst [vmem:[%s19] sm:$0xff] %v1636
        %1641 = vst [vmem:[%s19 + $0x8] sm:$0xff] %v1637
        %1642 = vst [vmem:[%s19 + $0x10] sm:$0xff] %v1638
        %1643 = vst [vmem:[%s19 + $0x18] sm:$0xff] %v1639
        %v1644 = vld [vmem:[%s20] sm:$0xff]
        %v1645 = vld [vmem:[%s20 + $0x8] sm:$0xff]
        %v1646 = vld [vmem:[%s20 + $0x10] sm:$0xff]
        %v1647 = vld [vmem:[%s20 + $0x18] sm:$0xff]
        %v1648 = vsel %vm1055, %v1554, %v1644
        %v1649 = vsel %vm1055, %v1557, %v1645
        %v1650 = vsel %vm1055, %v1562, %v1646
        %v1651 = vsel %vm1055, %v1565, %v1647
        %1652 = vst [vmem:[%s20] sm:$0xff] %v1648
        %1653 = vst [vmem:[%s20 + $0x8] sm:$0xff] %v1649
        %1654 = vst [vmem:[%s20 + $0x10] sm:$0xff] %v1650
        %1655 = vst [vmem:[%s20 + $0x18] sm:$0xff] %v1651
        %v1656 = vld [vmem:[%s21] sm:$0xff]
        %v1657 = vld [vmem:[%s21 + $0x8] sm:$0xff]
        %v1658 = vld [vmem:[%s21 + $0x10] sm:$0xff]
        %v1659 = vld [vmem:[%s21 + $0x18] sm:$0xff]
        %v1660 = vsel %vm1074, %v1571, %v1656
        %v1661 = vsel %vm1074, %v1574, %v1657
        %v1662 = vsel %vm1074, %v1579, %v1658
        %v1663 = vsel %vm1074, %v1582, %v1659
        %1664 = vst [vmem:[%s21] sm:$0xff] %v1660
        %1665 = vst [vmem:[%s21 + $0x8] sm:$0xff] %v1661
        %1666 = vst [vmem:[%s21 + $0x10] sm:$0xff] %v1662
        %1667 = vst [vmem:[%s21 + $0x18] sm:$0xff] %v1663
        %v1668 = vld [vmem:[%s22] sm:$0xff]
        %v1669 = vld [vmem:[%s22 + $0x8] sm:$0xff]
        %v1670 = vld [vmem:[%s22 + $0x10] sm:$0xff]
        %v1671 = vld [vmem:[%s22 + $0x18] sm:$0xff]
        %v1672 = vsel %vm1074, %v1571, %v1668
        %v1673 = vsel %vm1074, %v1574, %v1669
        %v1674 = vsel %vm1074, %v1579, %v1670
        %v1675 = vsel %vm1074, %v1582, %v1671
        %1676 = vst [vmem:[%s22] sm:$0xff] %v1672
        %1677 = vst [vmem:[%s22 + $0x8] sm:$0xff] %v1673
        %1678 = vst [vmem:[%s22 + $0x10] sm:$0xff] %v1674
        %1679 = vst [vmem:[%s22 + $0x18] sm:$0xff] %v1675
        %v1680 = vrot.slane %v1067, 4
        %v1681 = vmax.f32 %v1067, %v1680
        %v1682 = vrot.slane %v1681, 2
        %v1683 = vmax.f32 %v1681, %v1682
        %v1684 = vrot.slane %v1683, 1
        %v1685 = vmax.f32 %v1683, %v1684
        %vm1686 = vcmp.ge.f32.partialorder %v1067, %v1685
        %v1687 = vsel %vm1686, %v1003, 8.0
        %v1688 = vrot.slane %v1687, 4
        %v1689 = vmin.f32 %v1687, %v1688
        %v1690 = vrot.slane %v1689, 2
        %v1691 = vmin.f32 %v1689, %v1690
        %v1692 = vrot.slane %v1691, 1
        %v1693 = vmin.f32 %v1691, %v1692
        %vm1694 = vcmp.eq.f32.partialorder %v1003, %v1693
        %v1695 = vsel %vm1694, 1, 0
        %v1696 = vcvt.s32.f32 %v1695
        %v1697 = vrot.slane %v1086, 4
        %v1698 = vmax.f32 %v1086, %v1697
        %v1699 = vrot.slane %v1698, 2
        %v1700 = vmax.f32 %v1698, %v1699
        %v1701 = vrot.slane %v1700, 1
        %v1702 = vmax.f32 %v1700, %v1701
        %vm1703 = vcmp.ge.f32.partialorder %v1086, %v1702
        %v1704 = vsel %vm1703, %v1003, 8.0
        %v1705 = vrot.slane %v1704, 4
        %v1706 = vmin.f32 %v1704, %v1705
        %v1707 = vrot.slane %v1706, 2
        %v1708 = vmin.f32 %v1706, %v1707
        %v1709 = vrot.slane %v1708, 1
        %v1710 = vmin.f32 %v1708, %v1709
        %vm1711 = vcmp.eq.f32.partialorder %v1003, %v1710
        %v1712 = vsel %vm1711, 1, 0
        %v1713 = vcvt.s32.f32 %v1712
        %v1715 = vsel %vm1004, %v999, 0
        %1717 = vmatprep.subr.bf16.mxu0 0
        %1718 = vmatpush1.bf16.msra.mxu0 %v1133
        %1719 = vmatprep.subr.bf16.mxu0 0
        %1720 = vmatpush1.bf16.msra.mxu0 %v1134
        %1721 = vmatprep.subr.bf16.mxu0 0
        %1722 = vmatpush1.bf16.msra.mxu0 0
        %1723 = vmatprep.subr.bf16.mxu0 0
        %1724 = vmatpush1.bf16.msra.mxu0 0
        %1725 = vmatprep.subr.bf16.mxu0 0
        %1726 = vmatpush1.bf16.msra.mxu0 0
        %1727 = vmatprep.subr.bf16.mxu0 0
        %1728 = vmatpush1.bf16.msra.mxu0 0
        %1729 = vmatprep.subr.bf16.mxu0 0
        %1730 = vmatpush1.bf16.msra.mxu0 0
        %1731 = vmatprep.subr.bf16.mxu0 0
        %1732 = vmatpush1.bf16.msra.mxu0 0
        %1733 = vmatprep.subr.bf16.mxu0 0
        %1734 = vmatpush1.bf16.msra.mxu0 0
        %1735 = vmatprep.subr.bf16.mxu0 0
        %1736 = vmatpush1.bf16.msra.mxu0 0
        %1737 = vmatprep.subr.bf16.mxu0 0
        %1738 = vmatpush1.bf16.msra.mxu0 0
        %1739 = vmatprep.subr.bf16.mxu0 0
        %1740 = vmatpush1.bf16.msra.mxu0 0
        %1741 = vmatprep.subr.bf16.mxu0 0
        %1742 = vmatpush1.bf16.msra.mxu0 0
        %1743 = vmatprep.subr.bf16.mxu0 0
        %1744 = vmatpush1.bf16.msra.mxu0 0
        %1745 = vmatprep.subr.bf16.mxu0 0
        %1746 = vmatpush1.bf16.msra.mxu0 0
        %1747 = vmatprep.subr.bf16.mxu0 0
        %1748 = vmatpush1.bf16.msra.mxu0 0
        %1749 = vmatprep.mubr.bf16.mxu0 0
        %1750 = vmatmul.mubr.bf16.gmra.mrb[0].mxu0 %v1715
        %v1751 = vpop.f32.mrb[0].mxu0
        %v1752 = vadd.f32 0.0, %v1751
        %v1753 = vpop.f32.mrb[0].mxu0
        %v1754 = vpop.f32.mrb[0].mxu0
        %v1755 = vpop.f32.mrb[0].mxu0
        %1756 = vdwg.mxu0
        %v1757 = vsel %vm1055, %v1752, -1e+30
        %1758 = vmax.xlane.f32.xlu0 %v1757
        %v1759 = vpop.xlane.xlu0 %1758
        %v1760 = vsub.f32 %v1757, %v1759
        %v1761 = vmul.f32 %v1760, 1.442695
        %v1762 = vpow.pop %v1761
        %v1763 = vsel %vm1055, %v1762, 0.0
        %1764 = vadd.xlane.f32.xlu0 %v1763
        %v1765 = vpop.xlane.xlu0 %1764
        %v1766 = vmax.f32 %v1765, 1e-30
        %v1767 = vrcp.pop %v1766
        %v1768 = vmul.f32 %v1763, %v1767
        %v1770 = vsel %vm1004, %v1000, 0
        %1772 = vmatprep.subr.bf16.mxu0 0
        %1773 = vmatpush1.bf16.msra.mxu0 %v1145
        %1774 = vmatprep.subr.bf16.mxu0 0
        %1775 = vmatpush1.bf16.msra.mxu0 %v1146
        %1776 = vmatprep.subr.bf16.mxu0 0
        %1777 = vmatpush1.bf16.msra.mxu0 0
        %1778 = vmatprep.subr.bf16.mxu0 0
        %1779 = vmatpush1.bf16.msra.mxu0 0
        %1780 = vmatprep.subr.bf16.mxu0 0
        %1781 = vmatpush1.bf16.msra.mxu0 0
        %1782 = vmatprep.subr.bf16.mxu0 0
        %1783 = vmatpush1.bf16.msra.mxu0 0
        %1784 = vmatprep.subr.bf16.mxu0 0
        %1785 = vmatpush1.bf16.msra.mxu0 0
        %1786 = vmatprep.subr.bf16.mxu0 0
        %1787 = vmatpush1.bf16.msra.mxu0 0
        %1788 = vmatprep.subr.bf16.mxu0 0
        %1789 = vmatpush1.bf16.msra.mxu0 0
        %1790 = vmatprep.subr.bf16.mxu0 0
        %1791 = vmatpush1.bf16.msra.mxu0 0
        %1792 = vmatprep.subr.bf16.mxu0 0
        %1793 = vmatpush1.bf16.msra.mxu0 0
        %1794 = vmatprep.subr.bf16.mxu0 0
        %1795 = vmatpush1.bf16.msra.mxu0 0
        %1796 = vmatprep.subr.bf16.mxu0 0
        %1797 = vmatpush1.bf16.msra.mxu0 0
        %1798 = vmatprep.subr.bf16.mxu0 0
        %1799 = vmatpush1.bf16.msra.mxu0 0
        %1800 = vmatprep.subr.bf16.mxu0 0
        %1801 = vmatpush1.bf16.msra.mxu0 0
        %1802 = vmatprep.subr.bf16.mxu0 0
        %1803 = vmatpush1.bf16.msra.mxu0 0
        %1804 = vmatprep.mubr.bf16.mxu0 0
        %1805 = vmatmul.mubr.bf16.gmra.mrb[0].mxu0 %v1770
        %v1806 = vpop.f32.mrb[0].mxu0
        %v1807 = vadd.f32 0.0, %v1806
        %v1808 = vpop.f32.mrb[0].mxu0
        %v1809 = vpop.f32.mrb[0].mxu0
        %v1810 = vpop.f32.mrb[0].mxu0
        %1811 = vdwg.mxu0
        %v1812 = vsel %vm1074, %v1807, -1e+30
        %1813 = vmax.xlane.f32.xlu0 %v1812
        %v1814 = vpop.xlane.xlu0 %1813
        %v1815 = vsub.f32 %v1812, %v1814
        %v1816 = vmul.f32 %v1815, 1.442695
        %v1817 = vpow.pop %v1816
        %v1818 = vsel %vm1074, %v1817, 0.0
        %1819 = vadd.xlane.f32.xlu0 %v1818
        %v1820 = vpop.xlane.xlu0 %1819
        %v1821 = vmax.f32 %v1820, 1e-30
        %v1822 = vrcp.pop %v1821
        %v1823 = vmul.f32 %v1818, %v1822
        %vm1824 = vcmask 1040384
        %v1825 = vsel %vm1824, %v913, 0.0
        %1826 = vadd.xlane.f32.xlu0 %v1825
        %v1827 = vpop.xlane.xlu0 %1826
        %v1828 = vmax.f32 %v1827, 1.0
        %v1829 = vsel %vm1824, %v914, 0.0
        %1830 = vadd.xlane.f32.xlu0 %v1829
        %v1831 = vpop.xlane.xlu0 %1830
        %v1832 = vmax.f32 %v1831, 1.0
        %v1833 = vld [vmem:[#allocation6] sm:$0x1]
        %v1834 = vmul.f32 %v1067, %v1696
        %v1835 = vrot.slane %v1834, 4
        %v1836 = vadd.f32 %v1834, %v1835
        %v1837 = vrot.slane %v1836, 2
        %v1838 = vadd.f32 %v1836, %v1837
        %v1839 = vrot.slane %v1838, 1
        %v1840 = vadd.f32 %v1838, %v1839
        %v1841 = vmul.f32 %v1840, %v913
        %v1842 = vsel %vm1824, %v1841, 0.0
        %1843 = vadd.xlane.f32.xlu0 %v1842
        %v1844 = vpop.xlane.xlu0 %1843
        %v1845 = vsub.f32 0.0, %v1844
        %v1846 = vrcp.pop %v1828
        %v1847 = vmul.f32 %v1845, %v1846
        %v1848 = vmul.f32 %v1847, 1.442695
        %v1849 = vpow.pop %v1848
        %v1850 = vmul.f32 %v1849, 0.1
        %v1851 = vmul.f32 %v1086, %v1713
        %v1852 = vrot.slane %v1851, 4
        %v1853 = vadd.f32 %v1851, %v1852
        %v1854 = vrot.slane %v1853, 2
        %v1855 = vadd.f32 %v1853, %v1854
        %v1856 = vrot.slane %v1855, 1
        %v1857 = vadd.f32 %v1855, %v1856
        %v1858 = vmul.f32 %v1857, %v914
        %v1859 = vsel %vm1824, %v1858, 0.0
        %1860 = vadd.xlane.f32.xlu0 %v1859
        %v1861 = vpop.xlane.xlu0 %1860
        %v1862 = vsub.f32 0.0, %v1861
        %v1863 = vrcp.pop %v1832
        %v1864 = vmul.f32 %v1862, %v1863
        %v1865 = vmul.f32 %v1864, 1.442695
        %v1866 = vpow.pop %v1865
        %v1867 = vmul.f32 %v1866, 0.1
        %v1868 = vadd.f32 %v1850, %v1867
        %v1869 = vadd.f32 %v1833, %v1868
        %vm1870 = vcmask 0
        %1871 = vst.msk [vmem:[#allocation6] sm:$0x1] %vm1870, %v1869
        %v1872 = vld [vmem:[#allocation7] sm:$0x1]
        %v1873 = vmul.f32 %v1768, %v1696
        %v1874 = vrot.slane %v1873, 4
        %v1875 = vadd.f32 %v1873, %v1874
        %v1876 = vrot.slane %v1875, 2
        %v1877 = vadd.f32 %v1875, %v1876
        %v1878 = vrot.slane %v1877, 1
        %v1879 = vadd.f32 %v1877, %v1878
        %v1880 = vmul.f32 %v1879, %v913
        %v1881 = vsel %vm1824, %v1880, 0.0
        %1882 = vadd.xlane.f32.xlu0 %v1881
        %v1883 = vpop.xlane.xlu0 %1882
        %v1884 = vsub.f32 0.0, %v1883
        %v1885 = vmul.f32 %v1884, %v1846
        %v1886 = vmul.f32 %v1885, 1.442695
        %v1887 = vpow.pop %v1886
        %v1888 = vmul.f32 %v1887, 0.1
        %v1889 = vmul.f32 %v1823, %v1713
        %v1890 = vrot.slane %v1889, 4
        %v1891 = vadd.f32 %v1889, %v1890
        %v1892 = vrot.slane %v1891, 2
        %v1893 = vadd.f32 %v1891, %v1892
        %v1894 = vrot.slane %v1893, 1
        %v1895 = vadd.f32 %v1893, %v1894
        %v1896 = vmul.f32 %v1895, %v914
        %v1897 = vsel %vm1824, %v1896, 0.0
        %1898 = vadd.xlane.f32.xlu0 %v1897
        %v1899 = vpop.xlane.xlu0 %1898
        %v1900 = vsub.f32 0.0, %v1899
        %v1901 = vmul.f32 %v1900, %v1863
        %v1902 = vmul.f32 %v1901, 1.442695
        %v1903 = vpow.pop %v1902
        %v1904 = vmul.f32 %v1903, 0.1
        %v1905 = vadd.f32 %v1888, %v1904
        %v1906 = vadd.f32 %v1872, %v1905
        %1907 = vst.msk [vmem:[#allocation7] sm:$0x1] %vm1870, %v1906
        %s1908 = smul.u32 %s41, 8
        %s1909 = scvt.s32.f32 %s1908
        %v1910 = vstv %s1909
        %v1911 = vadd.f32 %v1693, %v1910
        %v1912 = vld [vmem:[#allocation2] sm:$0x1]
        %v1913 = vsel %vm1049, %v1911, %v1912
        %1914 = vst [vmem:[#allocation2] sm:$0x1] %v1913
        %v1915 = vadd.f32 %v1710, %v1910
        %v1916 = vld [vmem:[#allocation4] sm:$0x1]
        %v1917 = vsel %vm1068, %v1915, %v1916
        %1918 = vst [vmem:[#allocation4] sm:$0x1] %v1917
        %p1919 = scmp.eq.s32.totalorder %s41, 1
        // Predicated region
        $region73: #{memory_forward.1} parent=67 // pred_check
          %p1920 = pneg %p1919
        $region74: #{memory_forward.1} parent=67 // pred_check_branch
          %1922 = sbr.rel (%p1920) target = $region76
        $region75: #{memory_forward.1} parent=67 // pred_region
          %v1923 = vld [vmem:[%s11] sm:$0xf]
          %v1924 = vld [vmem:[%s11 + $0x4] sm:$0xf]
          %v1925 = vadd.s32 %v1002, 8
          %v1926 = vcvt.s32.f32 %v1925
          %v1927 = vld [vmem:[%s0] sm:$0xf]
          %v1928 = vld [vmem:[%s0 + $0x4] sm:$0xf]
          %v1929 = vld [vmem:[%s0 + $0x8] sm:$0xf]
          %v1930 = vld [vmem:[%s0 + $0xc] sm:$0xf]
          %v1931 = vld [vmem:[%s2] sm:$0xf]
          %v1932 = vld [vmem:[%s2 + $0x4] sm:$0xf]
          %v1933 = vld [vmem:[%s2 + $0x8] sm:$0xf]
          %v1934 = vld [vmem:[%s2 + $0xc] sm:$0xf]
          %v1939 = vunpack.c.l.b16 %v1927
          %v1940 = vunpack.c.l.b16 %v1928
          %v1941 = vunpack.c.l.b16 %v1929
          %v1942 = vunpack.c.l.b16 %v1930
          %v1943 = vpack.c.b16 %v1940, %v1939
          %v1944 = vpack.c.b16 %v1942, %v1941
          %v1951 = vunpack.c.l.b16 %v1931
          %v1952 = vunpack.c.l.b16 %v1932
          %v1953 = vunpack.c.l.b16 %v1933
          %v1954 = vunpack.c.l.b16 %v1934
          %v1955 = vpack.c.b16 %v1952, %v1951
          %v1956 = vpack.c.b16 %v1954, %v1953
          %v1961 = vunpack.c.l.b16 %v1923
          %v1962 = vunpack.c.l.b16 %v1924
          %v1963 = vpack.c.b16 %v1962, %v1961
          %v1965 = vsel %vm1004, %v1963, 0
          %1967 = vmatprep.subr.bf16.mxu0 %v1955
          %1968 = vmatpush1.bf16.msra.mxu0 %v1943
          %1969 = vmatprep.subr.bf16.mxu0 %v1956
          %1970 = vmatpush1.bf16.msra.mxu0 %v1944
          %1971 = vmatprep.subr.bf16.mxu0 0
          %1972 = vmatpush1.bf16.msra.mxu0 0
          %1973 = vmatprep.subr.bf16.mxu0 0
          %1974 = vmatpush1.bf16.msra.mxu0 0
          %1975 = vmatprep.subr.bf16.mxu0 0
          %1976 = vmatpush1.bf16.msra.mxu0 0
          %1977 = vmatprep.subr.bf16.mxu0 0
          %1978 = vmatpush1.bf16.msra.mxu0 0
          %1979 = vmatprep.subr.bf16.mxu0 0
          %1980 = vmatpush1.bf16.msra.mxu0 0
          %1981 = vmatprep.subr.bf16.mxu0 0
          %1982 = vmatpush1.bf16.msra.mxu0 0
          %1983 = vmatprep.subr.bf16.mxu0 0
          %1984 = vmatpush1.bf16.msra.mxu0 0
          %1985 = vmatprep.subr.bf16.mxu0 0
          %1986 = vmatpush1.bf16.msra.mxu0 0
          %1987 = vmatprep.subr.bf16.mxu0 0
          %1988 = vmatpush1.bf16.msra.mxu0 0
          %1989 = vmatprep.subr.bf16.mxu0 0
          %1990 = vmatpush1.bf16.msra.mxu0 0
          %1991 = vmatprep.subr.bf16.mxu0 0
          %1992 = vmatpush1.bf16.msra.mxu0 0
          %1993 = vmatprep.subr.bf16.mxu0 0
          %1994 = vmatpush1.bf16.msra.mxu0 0
          %1995 = vmatprep.subr.bf16.mxu0 0
          %1996 = vmatpush1.bf16.msra.mxu0 0
          %1997 = vmatprep.subr.bf16.mxu0 0
          %1998 = vmatpush1.bf16.msra.mxu0 0
          %1999 = vmatprep.mubr.bf16.mxu0 0
          %2000 = vmatmul.mubr.bf16.gmra.mrb[0].mxu0 %v1965
          %v2001 = vpop.f32.mrb[0].mxu0
          %v2002 = vadd.f32 0.0, %v2001
          %v2003 = vpop.f32.mrb[0].mxu0
          %v2004 = vadd.f32 0.0, %v2003
          %v2005 = vpop.f32.mrb[0].mxu0
          %v2006 = vadd.f32 0.0, %v2005
          %v2007 = vpop.f32.mrb[0].mxu0
          %v2008 = vadd.f32 0.0, %v2007
          %2009 = vdwg.mxu0
          %v2010 = vld [vmem:[#allocation6] sm:$0x1]
          %v2011 = vld [vmem:[#allocation2] sm:$0x1]
          %2012 = vmax.xlane.f32.xlu0 %v2002
          %v2013 = vpop.xlane.xlu0 %2012
          %2014 = vmax.xlane.f32.xlu0 %v2006
          %v2015 = vpop.xlane.xlu0 %2014
          %v2016 = vsub.f32 %v2002, %v2013
          %v2017 = vsub.f32 %v2006, %v2015
          %v2018 = vmul.f32 %v2016, 1.442695
          %v2019 = vpow.pop %v2018
          %v2020 = vmul.f32 %v2017, 1.442695
          %v2021 = vpow.pop %v2020
          %2022 = vadd.xlane.f32.xlu0 %v2019
          %v2023 = vpop.xlane.xlu0 %2022
          %2024 = vadd.xlane.f32.xlu0 %v2021
          %v2025 = vpop.xlane.xlu0 %2024
          %v2026 = vrcp.pop %v2023
          %v2027 = vrcp.pop %v2025
          %v2028 = vmul.f32 %v2019, %v2026
          %v2029 = vmul.f32 %v2021, %v2027
          %v2031 = vlaneseq
          %v2032 = vshrl.u32 %v2031, 7
          %v2033 = vsub.s32 0, %v2032
          %v2034 = vrot.slane %v2011, %v2033
          %vm2036 = vcmp.eq.f32.partialorder %v1003, %v2034
          %vm2037 = vcmp.eq.f32.partialorder %v1926, %v2034
          %v2038 = vsel %vm2036, 1, 0
          %v2039 = vsel %vm2037, 1, 0
          %v2040 = vcvt.s32.f32 %v2038
          %v2041 = vcvt.s32.f32 %v2039
          %v2042 = vmul.f32 %v2028, %v2040
          %v2043 = vmul.f32 %v2029, %v2041
          %v2044 = vadd.f32 %v2042, %v2043
          %v2045 = vrot.slane %v2044, 4
          %v2046 = vadd.f32 %v2044, %v2045
          %v2047 = vrot.slane %v2046, 2
          %v2048 = vadd.f32 %v2046, %v2047
          %v2049 = vrot.slane %v2048, 1
          %v2050 = vadd.f32 %v2048, %v2049
          %2051 = vadd.xlane.f32.xlu0 %v2050
          %v2052 = vpop.xlane.xlu0 %2051
          %v2053 = vsub.f32 0.0, %v2052
          %v2054 = vrcp.pop 128.0
          %v2055 = vmul.f32 %v2053, %v2054
          %v2056 = vmul.f32 %v2055, 1.442695
          %v2057 = vpow.pop %v2056
          %v2058 = vmul.f32 %v2057, 0.1
          %v2059 = vld [vmem:[#allocation4] sm:$0x1]
          %2060 = vmax.xlane.f32.xlu0 %v2004
          %v2061 = vpop.xlane.xlu0 %2060
          %2062 = vmax.xlane.f32.xlu0 %v2008
          %v2063 = vpop.xlane.xlu0 %2062
          %v2064 = vsub.f32 %v2004, %v2061
          %v2065 = vsub.f32 %v2008, %v2063
          %v2066 = vmul.f32 %v2064, 1.442695
          %v2067 = vpow.pop %v2066
          %v2068 = vmul.f32 %v2065, 1.442695
          %v2069 = vpow.pop %v2068
          %2070 = vadd.xlane.f32.xlu0 %v2067
          %v2071 = vpop.xlane.xlu0 %2070
          %2072 = vadd.xlane.f32.xlu0 %v2069
          %v2073 = vpop.xlane.xlu0 %2072
          %v2074 = vrcp.pop %v2071
          %v2075 = vrcp.pop %v2073
          %v2076 = vmul.f32 %v2067, %v2074
          %v2077 = vmul.f32 %v2069, %v2075
          %v2079 = vlaneseq
          %v2080 = vshrl.u32 %v2079, 7
          %v2081 = vsub.s32 0, %v2080
          %v2082 = vrot.slane %v2059, %v2081
          %vm2084 = vcmp.eq.f32.partialorder %v1003, %v2082
          %vm2085 = vcmp.eq.f32.partialorder %v1926, %v2082
          %v2086 = vsel %vm2084, 1, 0
          %v2087 = vsel %vm2085, 1, 0
          %v2088 = vcvt.s32.f32 %v2086
          %v2089 = vcvt.s32.f32 %v2087
          %v2090 = vmul.f32 %v2076, %v2088
          %v2091 = vmul.f32 %v2077, %v2089
          %v2092 = vadd.f32 %v2090, %v2091
          %v2093 = vrot.slane %v2092, 4
          %v2094 = vadd.f32 %v2092, %v2093
          %v2095 = vrot.slane %v2094, 2
          %v2096 = vadd.f32 %v2094, %v2095
          %v2097 = vrot.slane %v2096, 1
          %v2098 = vadd.f32 %v2096, %v2097
          %2099 = vadd.xlane.f32.xlu0 %v2098
          %v2100 = vpop.xlane.xlu0 %2099
          %v2101 = vsub.f32 0.0, %v2100
          %v2102 = vmul.f32 %v2101, %v2054
          %v2103 = vmul.f32 %v2102, 1.442695
          %v2104 = vpow.pop %v2103
          %v2105 = vmul.f32 %v2104, 0.1
          %v2106 = vadd.f32 %v2058, %v2105
          %v2107 = vadd.f32 %v2010, %v2106
          %2108 = vst.msk [vmem:[#allocation6] sm:$0x1] %vm1870, %v2107
        $region76: #{memory_forward.1} parent=67 // pred_fallthru
          _
        %p2109 = scmp.lt.s32.totalorder %s41, 1
        %s2110 = scalar_select %p2109, %s41, 1
        %s2111 = smul.addr %s2110, 8
        %s2112 = scalar_lea.vmem %s12, %s2111
        %p2113 = scmp.lt.s32.totalorder %s41, 1
        %s2114 = scalar_select %p2113, %s41, 1
        %s2115 = smul.addr %s2114, 8
        %s2116 = scalar_lea.vmem %s13, %s2115
        %p2117 = scmp.lt.s32.totalorder %s41, 1
        %s2118 = scalar_select %p2117, %s41, 1
        %s2119 = smul.addr %s2118, 8
        %s2120 = scalar_lea.vmem %s14, %s2119
        // Predicated region
        $region77: #{memory_forward.1} parent=67 // pred_check
          %p2121 = pneg %p346
        $region78: #{memory_forward.1} parent=67 // pred_check_branch
          %2123 = sbr.rel (%p2121) target = $region80
        $region79: #{memory_forward.1} parent=67 // pred_region
          _
        $region80: #{memory_forward.1} parent=67 // pred_fallthru
          _
        // Predicated region
        $region81: #{memory_forward.1} parent=67 // pred_check
          %p2124 = pneg %p372
        $region82: #{memory_forward.1} parent=67 // pred_check_branch
          %2126 = sbr.rel (%p2124) target = $region84
        $region83: #{memory_forward.1} parent=67 // pred_region
          _
        $region84: #{memory_forward.1} parent=67 // pred_fallthru
          _
        // Predicated region
        $region85: #{memory_forward.1} parent=67 // pred_check
          %p2127 = pneg %p398
        $region86: #{memory_forward.1} parent=67 // pred_check_branch
          %2129 = sbr.rel (%p2127) target = $region88
        $region87: #{memory_forward.1} parent=67 // pred_region
          _
        $region88: #{memory_forward.1} parent=67 // pred_fallthru
          _
        // Predicated region
        $region89: #{memory_forward.1} parent=67 // pred_check
          %p2130 = pneg %p419
        $region90: #{memory_forward.1} parent=67 // pred_check_branch
          %2132 = sbr.rel (%p2130) target = $region92
        $region91: #{memory_forward.1} parent=67 // pred_region
          _
        $region92: #{memory_forward.1} parent=67 // pred_fallthru
          _
        // Predicated region
        $region93: #{memory_forward.1} parent=67 // pred_check
          %p2133 = pneg %p440
        $region94: #{memory_forward.1} parent=67 // pred_check_branch
          %2135 = sbr.rel (%p2133) target = $region96
        $region95: #{memory_forward.1} parent=67 // pred_region
          _
        $region96: #{memory_forward.1} parent=67 // pred_fallthru
          _
        // Predicated region
        $region97: #{memory_forward.1} parent=67 // pred_check
          %p2136 = pneg %p461
        $region98: #{memory_forward.1} parent=67 // pred_check_branch
          %2138 = sbr.rel (%p2136) target = $region100
        $region99: #{memory_forward.1} parent=67 // pred_region
          _
        $region100: #{memory_forward.1} parent=67 // pred_fallthru
          _
        // Predicated region
        $region101: #{memory_forward.1} parent=67 // pred_check
          %p2139 = pneg %p482
        $region102: #{memory_forward.1} parent=67 // pred_check_branch
          %2141 = sbr.rel (%p2139) target = $region104
        $region103: #{memory_forward.1} parent=67 // pred_region
          _
        $region104: #{memory_forward.1} parent=67 // pred_fallthru
          _
        // Predicated region
        $region105: #{memory_forward.1} parent=67 // pred_check
          %p2142 = pneg %p503
        $region106: #{memory_forward.1} parent=67 // pred_check_branch
          %2144 = sbr.rel (%p2142) target = $region108
        $region107: #{memory_forward.1} parent=67 // pred_region
          _
        $region108: #{memory_forward.1} parent=67 // pred_fallthru
          _
        // Predicated region
        $region109: #{memory_forward.1} parent=67 // pred_check
          %p2145 = pneg %p524
        $region110: #{memory_forward.1} parent=67 // pred_check_branch
          %2147 = sbr.rel (%p2145) target = $region112
        $region111: #{memory_forward.1} parent=67 // pred_region
          _
        $region112: #{memory_forward.1} parent=67 // pred_fallthru
          _
        // Predicated region
        $region113: #{memory_forward.1} parent=67 // pred_check
          %p2148 = pneg %p545
        $region114: #{memory_forward.1} parent=67 // pred_check_branch
          %2150 = sbr.rel (%p2148) target = $region116
        $region115: #{memory_forward.1} parent=67 // pred_region
          _
        $region116: #{memory_forward.1} parent=67 // pred_fallthru
          _
        // Predicated region
        $region117: #{memory_forward.1} parent=67 // pred_check
          %p2151 = pneg %p566
        $region118: #{memory_forward.1} parent=67 // pred_check_branch
          %2153 = sbr.rel (%p2151) target = $region120
        $region119: #{memory_forward.1} parent=67 // pred_region
          _
        $region120: #{memory_forward.1} parent=67 // pred_fallthru
          _
        // Predicated region
        $region121: #{memory_forward.1} parent=67 // pred_check
          %p2154 = pneg %p587
        $region122: #{memory_forward.1} parent=67 // pred_check_branch
          %2156 = sbr.rel (%p2154) target = $region124
        $region123: #{memory_forward.1} parent=67 // pred_region
          %s2158 = ssub.s32 16, 16
          %2159 = vsyncadd [#allocation3], %s2158
          %s2161 = sshll.u32 [#allocation2], 4
          %s2162 = int_to_ptr.vmem [resolvable:$true] %s2161
          %2164 = dma.vmem_to_hbm [thread:$0]  %s2162, 16, %s23, [#allocation3]
        $region124: #{memory_forward.1} parent=67 // pred_fallthru
          _
        // Predicated region
        $region125: #{memory_forward.1} parent=67 // pred_check
          %p2165 = pneg %p608
        $region126: #{memory_forward.1} parent=67 // pred_check_branch
          %2167 = sbr.rel (%p2165) target = $region128
        $region127: #{memory_forward.1} parent=67 // pred_region
          %s2169 = ssub.s32 16, 16
          %2170 = vsyncadd [#allocation5], %s2169
          %s2172 = sshll.u32 [#allocation4], 4
          %s2173 = int_to_ptr.vmem [resolvable:$true] %s2172
          %2175 = dma.vmem_to_hbm [thread:$0]  %s2173, 16, %s24, [#allocation5]
        $region128: #{memory_forward.1} parent=67 // pred_fallthru
          _
        // Predicated region
        $region129: #{memory_forward.1} parent=67 // pred_check
          %p2176 = pneg %p629
        $region130: #{memory_forward.1} parent=67 // pred_check_branch
          %2178 = sbr.rel (%p2176) target = $region132
        $region131: #{memory_forward.1} parent=67 // pred_region
          %s2180 = ssub.s32 16, 16
          %2181 = vsyncadd [#allocation5], %s2180
          %s2183 = sshll.u32 [#allocation6], 4
          %s2184 = int_to_ptr.vmem [resolvable:$true] %s2183
          %2186 = dma.vmem_to_hbm [thread:$0]  %s2184, 16, %s25, [#allocation5]
        $region132: #{memory_forward.1} parent=67 // pred_fallthru
          _
        // Predicated region
        $region133: #{memory_forward.1} parent=67 // pred_check
          %p2187 = pneg %p650
        $region134: #{memory_forward.1} parent=67 // pred_check_branch
          %2189 = sbr.rel (%p2187) target = $region136
        $region135: #{memory_forward.1} parent=67 // pred_region
          %s2191 = ssub.s32 16, 16
          %2192 = vsyncadd [#allocation8], %s2191
          %s2194 = sshll.u32 [#allocation7], 4
          %s2195 = int_to_ptr.vmem [resolvable:$true] %s2194
          %2197 = dma.vmem_to_hbm [thread:$0]  %s2195, 16, %s26, [#allocation8]
        $region136: #{memory_forward.1} parent=67 // pred_fallthru
          _
        // Predicated region
        $region137: #{memory_forward.1} parent=67 // pred_check
          %p2198 = pneg %p419
        $region138: #{memory_forward.1} parent=67 // pred_check_branch
          %2200 = sbr.rel (%p2198) target = $region140
        $region139: #{memory_forward.1} parent=67 // pred_region
          _
        $region140: #{memory_forward.1} parent=67 // pred_fallthru
          _
        // Predicated region
        $region141: #{memory_forward.1} parent=67 // pred_check
          %p2201 = pneg %p440
        $region142: #{memory_forward.1} parent=67 // pred_check_branch
          %2203 = sbr.rel (%p2201) target = $region144
        $region143: #{memory_forward.1} parent=67 // pred_region
          _
        $region144: #{memory_forward.1} parent=67 // pred_fallthru
          _
        // Predicated region
        $region145: #{memory_forward.1} parent=67 // pred_check
          %p2204 = pneg %p461
        $region146: #{memory_forward.1} parent=67 // pred_check_branch
          %2206 = sbr.rel (%p2204) target = $region148
        $region147: #{memory_forward.1} parent=67 // pred_region
          _
        $region148: #{memory_forward.1} parent=67 // pred_fallthru
          _
        // Predicated region
        $region149: #{memory_forward.1} parent=67 // pred_check
          %p2207 = pneg %p482
        $region150: #{memory_forward.1} parent=67 // pred_check_branch
          %2209 = sbr.rel (%p2207) target = $region152
        $region151: #{memory_forward.1} parent=67 // pred_region
          _
        $region152: #{memory_forward.1} parent=67 // pred_fallthru
          _
        // Predicated region
        $region153: #{memory_forward.1} parent=67 // pred_check
          %p2210 = pneg %p503
        $region154: #{memory_forward.1} parent=67 // pred_check_branch
          %2212 = sbr.rel (%p2210) target = $region156
        $region155: #{memory_forward.1} parent=67 // pred_region
          _
        $region156: #{memory_forward.1} parent=67 // pred_fallthru
          _
        // Predicated region
        $region157: #{memory_forward.1} parent=67 // pred_check
          %p2213 = pneg %p524
        $region158: #{memory_forward.1} parent=67 // pred_check_branch
          %2215 = sbr.rel (%p2213) target = $region160
        $region159: #{memory_forward.1} parent=67 // pred_region
          _
        $region160: #{memory_forward.1} parent=67 // pred_fallthru
          _
        // Predicated region
        $region161: #{memory_forward.1} parent=67 // pred_check
          %p2216 = pneg %p545
        $region162: #{memory_forward.1} parent=67 // pred_check_branch
          %2218 = sbr.rel (%p2216) target = $region164
        $region163: #{memory_forward.1} parent=67 // pred_region
          _
        $region164: #{memory_forward.1} parent=67 // pred_fallthru
          _
        // Predicated region
        $region165: #{memory_forward.1} parent=67 // pred_check
          %p2219 = pneg %p566
        $region166: #{memory_forward.1} parent=67 // pred_check_branch
          %2221 = sbr.rel (%p2219) target = $region168
        $region167: #{memory_forward.1} parent=67 // pred_region
          _
        $region168: #{memory_forward.1} parent=67 // pred_fallthru
          _
        // Predicated region
        $region169: #{memory_forward.1} parent=67 // pred_check
          %p2222 = pneg %p587
        $region170: #{memory_forward.1} parent=67 // pred_check_branch
          %2224 = sbr.rel (%p2222) target = $region172
        $region171: #{memory_forward.1} parent=67 // pred_region
          %2225 = dma.done [#allocation3], 16
        $region172: #{memory_forward.1} parent=67 // pred_fallthru
          _
        // Predicated region
        $region173: #{memory_forward.1} parent=67 // pred_check
          %p2226 = pneg %p608
        $region174: #{memory_forward.1} parent=67 // pred_check_branch
          %2228 = sbr.rel (%p2226) target = $region176
        $region175: #{memory_forward.1} parent=67 // pred_region
          %2229 = dma.done [#allocation5], 16
        $region176: #{memory_forward.1} parent=67 // pred_fallthru
          _
        // Predicated region
        $region177: #{memory_forward.1} parent=67 // pred_check
          %p2230 = pneg %p629
        $region178: #{memory_forward.1} parent=67 // pred_check_branch
          %2232 = sbr.rel (%p2230) target = $region180
        $region179: #{memory_forward.1} parent=67 // pred_region
          %2233 = dma.done [#allocation5], 16
        $region180: #{memory_forward.1} parent=67 // pred_fallthru
          _
        // Predicated region
        $region181: #{memory_forward.1} parent=67 // pred_check
          %p2234 = pneg %p650
        $region182: #{memory_forward.1} parent=67 // pred_check_branch
          %2236 = sbr.rel (%p2234) target = $region184
        $region183: #{memory_forward.1} parent=67 // pred_region
          %2237 = dma.done [#allocation8], 16
        $region184: #{memory_forward.1} parent=67 // pred_fallthru
          _
      $region68: #{memory_forward.1} parent=5 // pred_fallthru
        _
      %p2238 = scmp.le.s32.totalorder 2, %s36
      // Predicated region
      $region185: #{memory_forward.1} parent=5 // pred_check
        %p2239 = pneg %p2238
      $region186: #{memory_forward.1} parent=5 // pred_check_branch
        %2241 = sbr.rel (%p2239) target = $region188
      $region187: #{memory_forward.1} parent=5 // pred_region
        %s2242 = ssub.s32 %s36, 2
        // Predicated region
        $region189: #{memory_forward.1} parent=187 // pred_check
          %p2243 = pneg %p352
        $region190: #{memory_forward.1} parent=187 // pred_check_branch
          %2245 = sbr.rel (%p2243) target = $region192
        $region191: #{memory_forward.1} parent=187 // pred_region
          %p2246 = scmp.lt.s32.totalorder %s42, 1
          %s2247 = scalar_select %p2246, %s42, 1
          %s2248 = smul.addr %s2247, 8
          %s2249 = scalar_lea.vmem %s12, %s2248
        $region192: #{memory_forward.1} parent=187 // pred_fallthru
          _
        // Predicated region
        $region193: #{memory_forward.1} parent=187 // pred_check
          %p2250 = pneg %p378
        $region194: #{memory_forward.1} parent=187 // pred_check_branch
          %2252 = sbr.rel (%p2250) target = $region196
        $region195: #{memory_forward.1} parent=187 // pred_region
          %p2253 = scmp.lt.s32.totalorder %s42, 1
          %s2254 = scalar_select %p2253, %s42, 1
          %s2255 = smul.addr %s2254, 8
          %s2256 = scalar_lea.vmem %s13, %s2255
        $region196: #{memory_forward.1} parent=187 // pred_fallthru
          _
        // Predicated region
        $region197: #{memory_forward.1} parent=187 // pred_check
          %p2257 = pneg %p404
        $region198: #{memory_forward.1} parent=187 // pred_check_branch
          %2259 = sbr.rel (%p2257) target = $region200
        $region199: #{memory_forward.1} parent=187 // pred_region
          %p2260 = scmp.lt.s32.totalorder %s42, 1
          %s2261 = scalar_select %p2260, %s42, 1
          %s2262 = smul.addr %s2261, 8
          %s2263 = scalar_lea.vmem %s14, %s2262
        $region200: #{memory_forward.1} parent=187 // pred_fallthru
          _
      $region188: #{memory_forward.1} parent=5 // pred_fallthru
        _
    $region6: #{memory_forward.1} parent=1 // loop_footer
      %s40 = sadd.s32 1, %s36
    $region7: #{memory_forward.1} parent=1 // loop_footer_branch
      %35 = sbr.rel target = $region3
    $region8: #{memory_forward.1} parent=1 // loop_exit
      _
    %2264 = vsyncpa [#allocation3], 1
    %s2265 = scalar_lea.sflag [#allocation3], 1
    %2266 = vsyncpa %s2265, 1
    %2267 = vsyncpa [#allocation5], 1
    %2268 = vsyncpa [#allocation8], 1

</llo_original>
